<compile_context>
chip_gen: v6e
topology: v6e:2x2x1
jax: 0.10.0
libtpu: 0.0.40
codegen_flags: <defaults>
</compile_context>

<pallas_src>
import jax
import jax.numpy as jnp
from jax.experimental import pallas as pl
from jax.experimental.pallas import tpu as pltpu

_IN = 32 * 32 * 3          # 3072
_H1, _H2 = 256, 128
_H3, _OUT = 64, 10
_H3P, _OUTP = 128, 128     # lane-dense padded widths


def _round_up(a, m):
    return ((a + m - 1) // m) * m


def _mlp_kernel(x_ref, w1_ref, b1_ref, w2_ref, b2_ref, w3_ref, b3_ref,
                w4_ref, b4_ref, o_ref):
    # f32 -> bf16 cast happens here (VPU has slack; saves an HBM pass).
    x = x_ref[...].astype(jnp.bfloat16)                              # (TB, 3072)

    h1 = jnp.dot(x, w1_ref[...], preferred_element_type=jnp.float32)
    h1 = jnp.maximum(h1 + b1_ref[...], 0.0).astype(jnp.bfloat16)

    h2 = jnp.dot(h1, w2_ref[...], preferred_element_type=jnp.float32)
    h2 = jnp.maximum(h2 + b2_ref[...], 0.0).astype(jnp.bfloat16)

    h3 = jnp.dot(h2, w3_ref[...], preferred_element_type=jnp.float32)
    h3 = jnp.maximum(h3 + b3_ref[...], 0.0).astype(jnp.bfloat16)

    logits = jnp.dot(h3, w4_ref[...], preferred_element_type=jnp.float32)
    o_ref[...] = (logits + b4_ref[...]).astype(o_ref.dtype)          # f32 (TB, 128)


def prepare_params(params):
    """One-time parameter prep: lane-dense pad the narrow layers, cast to bf16.

    Returns the 8-tuple (w1, b1, w2, b2, w3, b3, w4, b4) ready for the kernel.
    """
    (w1, b1), (w2, b2), (w3, b3), (w4, b4) = params

    w3p = jnp.zeros((_H2, _H3P), w3.dtype).at[:, :_H3].set(w3)
    b3p = jnp.zeros((_H3P,), b3.dtype).at[:_H3].set(b3)
    w4p = jnp.zeros((_H3P, _OUTP), w4.dtype).at[:_H3, :_OUT].set(w4)
    b4p = jnp.zeros((_OUTP,), b4.dtype).at[:_OUT].set(b4)

    return (
        w1.astype(jnp.bfloat16),  b1.reshape(1, -1).astype(jnp.float32),
        w2.astype(jnp.bfloat16),  b2.reshape(1, -1).astype(jnp.float32),
        w3p.astype(jnp.bfloat16), b3p.reshape(1, -1).astype(jnp.float32),
        w4p.astype(jnp.bfloat16), b4p.reshape(1, -1).astype(jnp.float32),
    )


def _choose_tile(n, batch_tile):
    batch_tile = max(16, _round_up(batch_tile, 16))
    if n >= 2 * batch_tile:
        return batch_tile                       # already >= 2 grid steps
    # Small N: aim for >= 2 grid steps so both v7x TensorCores get work.
    half = _round_up(max(pl.cdiv(n, 2), 1), 16)
    return min(batch_tile, half)


def multi_layer_net_forward(x_nchw, prepared_params, batch_tile=512):
    """x_nchw: (N, 3, 32, 32) float32. Returns (N, 10) float32 logits."""
    n = x_nchw.shape[0]
    # nn.Flatten: (N, C, H, W) -> (N, C*H*W), row-major over C, H, W.
    x_flat = x_nchw.reshape(n, -1).astype(jnp.float32)

    (w1b, b1r, w2b, b2r, w3b, b3r, w4b, b4r) = prepared_params

    tb = _choose_tile(n, batch_tile)
    grid = (pl.cdiv(n, tb),)                    # ragged tail handled by masking

    def resident(a):  # constant index_map + single buffer: stays in VMEM
        return pl.BlockSpec(a.shape, lambda i: (0, 0),
                            pipeline_mode=pl.Buffered(1))

    param_bytes = sum(int(p.size) * p.dtype.itemsize for p in prepared_params)

    # VMEM budget: double-buffered f32 x tile + params (2x headroom) +
    # double-buffered f32 out tile + intermediate/spill headroom.
    vmem_need = (2 * tb * _IN * 4
                 + 2 * param_bytes
                 + 2 * tb * _OUTP * 4
                 + 4 * tb * _H1 * 4)
    vmem_limit = int(min(max(vmem_need * 1.25, 16 << 20), 48 << 20))

    flops = 2 * n * (_IN * _H1 + _H1 * _H2 + _H2 * _H3P + _H3P * _OUTP)
    bytes_accessed = x_flat.size * 4 + param_bytes + n * _OUTP * 4

    out = pl.pallas_call(
        _mlp_kernel,
        out_shape=jax.ShapeDtypeStruct((n, _OUTP), jnp.float32),
        grid_spec=pltpu.PrefetchScalarGridSpec(
            num_scalar_prefetch=0,
            grid=grid,
            in_specs=[
                pl.BlockSpec((tb, _IN), lambda i: (i, 0)),   # streamed f32 x tile
                resident(w1b), resident(b1r),
                resident(w2b), resident(b2r),
                resident(w3b), resident(b3r),
                resident(w4b), resident(b4r),
            ],
            out_specs=pl.BlockSpec((tb, _OUTP), lambda i: (i, 0)),
        ),
        compiler_params=pltpu.CompilerParams(
            dimension_semantics=("parallel",),
            vmem_limit_bytes=vmem_limit),
        cost_estimate=pl.CostEstimate(
            flops=flops, transcendentals=0, bytes_accessed=bytes_accessed),
    )(x_flat, w1b, b1r, w2b, b2r, w3b, b3r, w4b, b4r)

    return out[:, :_OUT]


def init_params(key):
    """PyTorch-Linear-style init: U(-1/sqrt(in), 1/sqrt(in)).

    Weights stored as (in_features, out_features).
    """
    dims = [(_IN, _H1), (_H1, _H2), (_H2, _H3), (_H3, _OUT)]
    params = []
    for (fan_in, fan_out) in dims:
        key, kw, kb = jax.random.split(key, 3)
        bound = 1.0 / (fan_in ** 0.5)
        w = jax.random.uniform(kw, (fan_in, fan_out), jnp.float32, -bound, bound)
        b = jax.random.uniform(kb, (fan_out,), jnp.float32, -bound, bound)
        params.append((w, b))
    return params


def reference_forward_bf16(x_nchw, params):
    """Plain-JAX reference with the same bf16-operand / f32-accumulate recipe."""
    h = x_nchw.reshape(x_nchw.shape[0], -1).astype(jnp.bfloat16)
    for i, (w, b) in enumerate(params):
        y = jnp.dot(h, w.astype(jnp.bfloat16),
                    preferred_element_type=jnp.float32) + b
        if i < len(params) - 1:
            h = jnp.maximum(y, 0.0).astype(jnp.bfloat16)
        else:
            h = y
    return h


def reference_forward_f32(x_nchw, params):
    """Pure f32 reference (loose sanity check vs bf16 MXU path)."""
    h = x_nchw.reshape(x_nchw.shape[0], -1)
    for i, (w, b) in enumerate(params):
        h = h @ w + b
        if i < len(params) - 1:
            h = jnp.maximum(h, 0.0)
    return h


if __name__ == "__main__":
    key = jax.random.PRNGKey(0)
    key, kx = jax.random.split(key)

    # Small CIFAR-10-shaped batch (N, 3, 32, 32).
    x = jax.random.normal(kx, (2, 3, 32, 32), jnp.float32)
    params = init_params(key)
    prepared = prepare_params(params)           # one-time weight prep

    out = multi_layer_net_forward(x, prepared)
    out = jax.block_until_ready(out)
    assert out.shape == (2, 10), out.shape

    ref_bf16 = reference_forward_bf16(x, params)
    assert jnp.allclose(out, ref_bf16, atol=2e-3, rtol=2e-3), \
        "mismatch vs bf16 reference"

    ref_f32 = reference_forward_f32(x, params)
    assert jnp.allclose(out, ref_f32, atol=5e-2, rtol=5e-2), \
        "mismatch vs f32 reference"

    print("KERNEL_OK")
</pallas_src>

<mosaic_0001>
module attributes {stable_mosaic.version = 11 : i64} {
  func.func @_mlp_kernel(%arg0: i32, %arg1: memref<16x3072xf32, #tpu.memory_space<vmem>>, %arg2: memref<3072x256xbf16, #tpu.memory_space<vmem>>, %arg3: memref<1x256xf32, #tpu.memory_space<vmem>>, %arg4: memref<256x128xbf16, #tpu.memory_space<vmem>>, %arg5: memref<1x128xf32, #tpu.memory_space<vmem>>, %arg6: memref<128x128xbf16, #tpu.memory_space<vmem>>, %arg7: memref<1x128xf32, #tpu.memory_space<vmem>>, %arg8: memref<128x128xbf16, #tpu.memory_space<vmem>>, %arg9: memref<1x128xf32, #tpu.memory_space<vmem>>, %arg10: memref<16x128xf32, #tpu.memory_space<vmem>>) attributes {dimension_semantics = [#tpu.dimension_semantics<parallel>], iteration_bounds = array<i64: 1>, scalar_prefetch = 0 : i64, scratch_operands = 0 : i64, tpu.core_type = #tpu.core_type<tc>, window_params = [{transform_indices = @transform_0, window_bounds = array<i64: 16, 3072>}, {pipeline_mode = #tpu.pipeline_mode<synchronous>, transform_indices = @transform_1, window_bounds = array<i64: 3072, 256>}, {pipeline_mode = #tpu.pipeline_mode<synchronous>, transform_indices = @transform_2, window_bounds = array<i64: 1, 256>}, {pipeline_mode = #tpu.pipeline_mode<synchronous>, transform_indices = @transform_3, window_bounds = array<i64: 256, 128>}, {pipeline_mode = #tpu.pipeline_mode<synchronous>, transform_indices = @transform_4, window_bounds = array<i64: 1, 128>}, {pipeline_mode = #tpu.pipeline_mode<synchronous>, transform_indices = @transform_5, window_bounds = array<i64: 128, 128>}, {pipeline_mode = #tpu.pipeline_mode<synchronous>, transform_indices = @transform_6, window_bounds = array<i64: 1, 128>}, {pipeline_mode = #tpu.pipeline_mode<synchronous>, transform_indices = @transform_7, window_bounds = array<i64: 128, 128>}, {pipeline_mode = #tpu.pipeline_mode<synchronous>, transform_indices = @transform_8, window_bounds = array<i64: 1, 128>}, {transform_indices = @transform_9, window_bounds = array<i64: 16, 128>}]} {
    %c0 = arith.constant 0 : index
    %c0_0 = arith.constant 0 : index
    %0 = vector.load %arg1[%c0, %c0_0] : memref<16x3072xf32, #tpu.memory_space<vmem>>, vector<16x3072xf32>
    %1 = arith.truncf %0 : vector<16x3072xf32> to vector<16x3072xbf16>
    %c0_1 = arith.constant 0 : index
    %c0_2 = arith.constant 0 : index
    %2 = vector.load %arg2[%c0_1, %c0_2] : memref<3072x256xbf16, #tpu.memory_space<vmem>>, vector<3072x256xbf16>
    %cst = arith.constant dense<0.000000e+00> : vector<16x256xf32>
    %3 = tpu.matmul %1, %2, %cst {dimension_numbers = #tpu.dot_dimension_numbers<[1], [0], [0], [1], [0, 0, 1, 1], [], []>} : vector<16x3072xbf16>, vector<3072x256xbf16>, vector<16x256xf32> -> vector<16x256xf32>
    %c0_3 = arith.constant 0 : index
    %c0_4 = arith.constant 0 : index
    %4 = vector.load %arg3[%c0_3, %c0_4] : memref<1x256xf32, #tpu.memory_space<vmem>>, vector<1x256xf32>
    %5 = vector.broadcast %4 : vector<1x256xf32> to vector<16x256xf32>
    %6 = arith.addf %3, %5 : vector<16x256xf32>
    %cst_5 = arith.constant 0.000000e+00 : f32
    %7 = vector.broadcast %cst_5 : f32 to vector<16x256xf32>
    %8 = arith.maximumf %6, %7 : vector<16x256xf32>
    %9 = arith.truncf %8 : vector<16x256xf32> to vector<16x256xbf16>
    %c0_6 = arith.constant 0 : index
    %c0_7 = arith.constant 0 : index
    %10 = vector.load %arg4[%c0_6, %c0_7] : memref<256x128xbf16, #tpu.memory_space<vmem>>, vector<256x128xbf16>
    %cst_8 = arith.constant dense<0.000000e+00> : vector<16x128xf32>
    %11 = tpu.matmul %9, %10, %cst_8 {dimension_numbers = #tpu.dot_dimension_numbers<[1], [0], [0], [1], [0, 0, 1, 1], [], []>} : vector<16x256xbf16>, vector<256x128xbf16>, vector<16x128xf32> -> vector<16x128xf32>
    %c0_9 = arith.constant 0 : index
    %c0_10 = arith.constant 0 : index
    %12 = vector.load %arg5[%c0_9, %c0_10] : memref<1x128xf32, #tpu.memory_space<vmem>>, vector<1x128xf32>
    %13 = vector.broadcast %12 : vector<1x128xf32> to vector<16x128xf32>
    %14 = arith.addf %11, %13 : vector<16x128xf32>
    %cst_11 = arith.constant 0.000000e+00 : f32
    %15 = vector.broadcast %cst_11 : f32 to vector<16x128xf32>
    %16 = arith.maximumf %14, %15 : vector<16x128xf32>
    %17 = arith.truncf %16 : vector<16x128xf32> to vector<16x128xbf16>
    %c0_12 = arith.constant 0 : index
    %c0_13 = arith.constant 0 : index
    %18 = vector.load %arg6[%c0_12, %c0_13] : memref<128x128xbf16, #tpu.memory_space<vmem>>, vector<128x128xbf16>
    %cst_14 = arith.constant dense<0.000000e+00> : vector<16x128xf32>
    %19 = tpu.matmul %17, %18, %cst_14 {dimension_numbers = #tpu.dot_dimension_numbers<[1], [0], [0], [1], [0, 0, 1, 1], [], []>} : vector<16x128xbf16>, vector<128x128xbf16>, vector<16x128xf32> -> vector<16x128xf32>
    %c0_15 = arith.constant 0 : index
    %c0_16 = arith.constant 0 : index
    %20 = vector.load %arg7[%c0_15, %c0_16] : memref<1x128xf32, #tpu.memory_space<vmem>>, vector<1x128xf32>
    %21 = vector.broadcast %20 : vector<1x128xf32> to vector<16x128xf32>
    %22 = arith.addf %19, %21 : vector<16x128xf32>
    %cst_17 = arith.constant 0.000000e+00 : f32
    %23 = vector.broadcast %cst_17 : f32 to vector<16x128xf32>
    %24 = arith.maximumf %22, %23 : vector<16x128xf32>
    %25 = arith.truncf %24 : vector<16x128xf32> to vector<16x128xbf16>
    %c0_18 = arith.constant 0 : index
    %c0_19 = arith.constant 0 : index
    %26 = vector.load %arg8[%c0_18, %c0_19] : memref<128x128xbf16, #tpu.memory_space<vmem>>, vector<128x128xbf16>
    %cst_20 = arith.constant dense<0.000000e+00> : vector<16x128xf32>
    %27 = tpu.matmul %25, %26, %cst_20 {dimension_numbers = #tpu.dot_dimension_numbers<[1], [0], [0], [1], [0, 0, 1, 1], [], []>} : vector<16x128xbf16>, vector<128x128xbf16>, vector<16x128xf32> -> vector<16x128xf32>
    %c0_21 = arith.constant 0 : index
    %c0_22 = arith.constant 0 : index
    %28 = vector.load %arg9[%c0_21, %c0_22] : memref<1x128xf32, #tpu.memory_space<vmem>>, vector<1x128xf32>
    %29 = vector.broadcast %28 : vector<1x128xf32> to vector<16x128xf32>
    %30 = arith.addf %27, %29 : vector<16x128xf32>
    %c0_23 = arith.constant 0 : index
    %c0_24 = arith.constant 0 : index
    %31 = vector.load %arg10[%c0_23, %c0_24] : memref<16x128xf32, #tpu.memory_space<vmem>>, vector<16x128xf32>
    tpu.vector_store %arg10[%c0_23, %c0_24], %30 {strides = array<i32>} : memref<16x128xf32, #tpu.memory_space<vmem>>, vector<16x128xf32>,
    return
  }
  func.func @transform_0(%arg0: i32) -> (i32, i32) {
    %c0_i32 = arith.constant 0 : i32
    %c0_i32_0 = arith.constant 0 : i32
    return %arg0, %c0_i32 : i32, i32
  }
  func.func @transform_1(%arg0: i32) -> (i32, i32) {
    %c0_i32 = arith.constant 0 : i32
    %c0_i32_0 = arith.constant 0 : i32
    %c0_i32_1 = arith.constant 0 : i32
    return %c0_i32, %c0_i32_0 : i32, i32
  }
  func.func @transform_2(%arg0: i32) -> (i32, i32) {
    %c0_i32 = arith.constant 0 : i32
    %c0_i32_0 = arith.constant 0 : i32
    %c0_i32_1 = arith.constant 0 : i32
    return %c0_i32, %c0_i32_0 : i32, i32
  }
  func.func @transform_3(%arg0: i32) -> (i32, i32) {
    %c0_i32 = arith.constant 0 : i32
    %c0_i32_0 = arith.constant 0 : i32
    %c0_i32_1 = arith.constant 0 : i32
    return %c0_i32, %c0_i32_0 : i32, i32
  }
  func.func @transform_4(%arg0: i32) -> (i32, i32) {
    %c0_i32 = arith.constant 0 : i32
    %c0_i32_0 = arith.constant 0 : i32
    %c0_i32_1 = arith.constant 0 : i32
    return %c0_i32, %c0_i32_0 : i32, i32
  }
  func.func @transform_5(%arg0: i32) -> (i32, i32) {
    %c0_i32 = arith.constant 0 : i32
    %c0_i32_0 = arith.constant 0 : i32
    %c0_i32_1 = arith.constant 0 : i32
    return %c0_i32, %c0_i32_0 : i32, i32
  }
  func.func @transform_6(%arg0: i32) -> (i32, i32) {
    %c0_i32 = arith.constant 0 : i32
    %c0_i32_0 = arith.constant 0 : i32
    %c0_i32_1 = arith.constant 0 : i32
    return %c0_i32, %c0_i32_0 : i32, i32
  }
  func.func @transform_7(%arg0: i32) -> (i32, i32) {
    %c0_i32 = arith.constant 0 : i32
    %c0_i32_0 = arith.constant 0 : i32
    %c0_i32_1 = arith.constant 0 : i32
    return %c0_i32, %c0_i32_0 : i32, i32
  }
  func.func @transform_8(%arg0: i32) -> (i32, i32) {
    %c0_i32 = arith.constant 0 : i32
    %c0_i32_0 = arith.constant 0 : i32
    %c0_i32_1 = arith.constant 0 : i32
    return %c0_i32, %c0_i32_0 : i32, i32
  }
  func.func @transform_9(%arg0: i32) -> (i32, i32) {
    %c0_i32 = arith.constant 0 : i32
    %c0_i32_0 = arith.constant 0 : i32
    return %arg0, %c0_i32 : i32, i32
  }
}

</mosaic_0001>

<llo_original>
// kernel: tpu_custom_call.1
$region0: #{tpu_custom_call.1}
  #allocation0 [shape = 'u32[]', space=smem, size = 0x4, offset = 0x4, fixed_abs, tag = 'smem constant byte address 0x4 - core index']
  #allocation1 [shape = 'u32[144,128]{1,0:T(1,128)}', space=vmem, size = 0x12000, scoped, tag = 'internal scratch']
  %s0 = inlined_call_operand.hbm [shape: f32[2,3072], index: 0, kind: input, shape index: {}]
  %s1 = inlined_call_operand.hbm [shape: bf16[3072,256], index: 1, kind: input, shape index: {}]
  %s2 = inlined_call_operand.hbm [shape: f32[1,256], index: 2, kind: input, shape index: {}]
  %s3 = inlined_call_operand.hbm [shape: bf16[256,128], index: 3, kind: input, shape index: {}]
  %s4 = inlined_call_operand.hbm [shape: f32[1,128], index: 4, kind: input, shape index: {}]
  %s5 = inlined_call_operand.hbm [shape: bf16[128,128], index: 5, kind: input, shape index: {}]
  %s6 = inlined_call_operand.hbm [shape: f32[1,128], index: 6, kind: input, shape index: {}]
  %s7 = inlined_call_operand.hbm [shape: bf16[128,128], index: 7, kind: input, shape index: {}]
  %s8 = inlined_call_operand.hbm [shape: f32[1,128], index: 8, kind: input, shape index: {}]
  %s9 = inlined_call_operand.hbm [shape: f32[2,128], index: 9, kind: output, shape index: {}]
  %s10 = sld [smem:[#allocation0]]
  $region82: #{tpu_custom_call.1} parent=0
    _
  %s12 = ssub.s32 1, %s10
  %s13 = scalar_select 0, %s12, %s10
  $region1: #{tpu_custom_call.1} parent=0
    #allocation2 [shape = 'u8[196608]{0}', space=vmem, size = 0x30000, scoped, tag = 'input window, operand 0, single buffered']
    #allocation3 [shape = 's32[1]{0}', space=sflag, size = 0x4, scoped, tag = 'scoped memory for tpu_custom_call.1']
    #allocation4 [shape = 's32[1]{0}', space=sflag, size = 0x4, scoped, tag = 'scoped memory for tpu_custom_call.1']
    #allocation5 [shape = 'u8[1572864]{0}', space=vmem, size = 0x180000, scoped, tag = 'input window, operand 1, single buffered']
    #allocation6 [shape = 's32[1]{0}', space=sflag, size = 0x4, scoped, tag = 'scoped memory for tpu_custom_call.1']
    #allocation7 [shape = 'u8[1024]{0}', space=vmem, size = 0x400, scoped, tag = 'input window, operand 2, single buffered']
    #allocation8 [shape = 'u8[65536]{0}', space=vmem, size = 0x10000, scoped, tag = 'input window, operand 3, single buffered']
    #allocation9 [shape = 's32[1]{0}', space=sflag, size = 0x4, scoped, tag = 'scoped memory for tpu_custom_call.1']
    #allocation10 [shape = 'u8[512]{0}', space=vmem, size = 0x400, scoped, tag = 'input window, operand 4, single buffered']
    #allocation11 [shape = 'u8[32768]{0}', space=vmem, size = 0x8000, scoped, tag = 'input window, operand 5, single buffered']
    #allocation12 [shape = 's32[1]{0}', space=sflag, size = 0x4, scoped, tag = 'scoped memory for tpu_custom_call.1']
    #allocation13 [shape = 'u8[512]{0}', space=vmem, size = 0x400, scoped, tag = 'input window, operand 6, single buffered']
    #allocation14 [shape = 'u8[32768]{0}', space=vmem, size = 0x8000, scoped, tag = 'input window, operand 7, single buffered']
    #allocation15 [shape = 's32[1]{0}', space=sflag, size = 0x4, scoped, tag = 'scoped memory for tpu_custom_call.1']
    #allocation16 [shape = 'u8[512]{0}', space=vmem, size = 0x400, scoped, tag = 'input window, operand 8, single buffered']
    #allocation17 [shape = 'u8[8192]{0}', space=vmem, size = 0x2000, scoped, tag = 'output window, operand 0, single buffered']
    %14 = vsyncpa [#allocation3], 0
    %15 = vsyncpa [#allocation6], 0
    %16 = vsyncpa [#allocation9], 0
    %17 = vsyncpa [#allocation12], 0
    %18 = vsyncpa [#allocation15], 0
    %19 = vsyncpa [#allocation4], 0
    // Predicated region
    $region2: #{tpu_custom_call.1} parent=1 // pred_check
      _
    $region3: #{tpu_custom_call.1} parent=1 // pred_check_branch
      %21 = sbr.rel (0) target = $region5
    $region4: #{tpu_custom_call.1} parent=1 // pred_region
      %s23 = ssub.s32 6144, 768
      %24 = vsyncadd [#allocation3], %s23
      %s25 = sshll.u32 [#allocation2], 4
      %s26 = int_to_ptr.vmem [resolvable:$true] %s25
      %31 = dma.hbm_to_vmem [thread:$0]  %s0, 768, %s26, [#allocation3], 768, 768, 48
    $region5: #{tpu_custom_call.1} parent=1 // pred_fallthru
      _
    // Predicated region
    $region6: #{tpu_custom_call.1} parent=1 // pred_check
      _
    $region7: #{tpu_custom_call.1} parent=1 // pred_check_branch
      %33 = sbr.rel (0) target = $region9
    $region8: #{tpu_custom_call.1} parent=1 // pred_region
      %s35 = ssub.s32 49152, 49152
      %36 = vsyncadd [#allocation6], %s35
      %s37 = sshll.u32 [#allocation5], 4
      %s38 = int_to_ptr.vmem [resolvable:$true] %s37
      %43 = dma.hbm_to_vmem [thread:$0]  %s1, 49152, %s38, [#allocation6], 128, 128, 8
    $region9: #{tpu_custom_call.1} parent=1 // pred_fallthru
      _
    // Predicated region
    $region10: #{tpu_custom_call.1} parent=1 // pred_check
      _
    $region11: #{tpu_custom_call.1} parent=1 // pred_check_branch
      %45 = sbr.rel (0) target = $region13
    $region12: #{tpu_custom_call.1} parent=1 // pred_region
      %s47 = ssub.s32 32, 32
      %48 = vsyncadd [#allocation6], %s47
      %s50 = sshll.u32 [#allocation7], 4
      %s51 = int_to_ptr.vmem [resolvable:$true] %s50
      %53 = dma.hbm_to_vmem [thread:$0]  %s2, 32, %s51, [#allocation6]
    $region13: #{tpu_custom_call.1} parent=1 // pred_fallthru
      _
    // Predicated region
    $region14: #{tpu_custom_call.1} parent=1 // pred_check
      _
    $region15: #{tpu_custom_call.1} parent=1 // pred_check_branch
      %55 = sbr.rel (0) target = $region17
    $region16: #{tpu_custom_call.1} parent=1 // pred_region
      %s57 = ssub.s32 2048, 2048
      %58 = vsyncadd [#allocation9], %s57
      %s59 = sshll.u32 [#allocation8], 4
      %s60 = int_to_ptr.vmem [resolvable:$true] %s59
      %65 = dma.hbm_to_vmem [thread:$0]  %s3, 2048, %s60, [#allocation9], 64, 64, 4
    $region17: #{tpu_custom_call.1} parent=1 // pred_fallthru
      _
    // Predicated region
    $region18: #{tpu_custom_call.1} parent=1 // pred_check
      _
    $region19: #{tpu_custom_call.1} parent=1 // pred_check_branch
      %67 = sbr.rel (0) target = $region21
    $region20: #{tpu_custom_call.1} parent=1 // pred_region
      %s69 = ssub.s32 16, 16
      %70 = vsyncadd [#allocation9], %s69
      %s72 = sshll.u32 [#allocation10], 4
      %s73 = int_to_ptr.vmem [resolvable:$true] %s72
      %75 = dma.hbm_to_vmem [thread:$0]  %s4, 16, %s73, [#allocation9]
    $region21: #{tpu_custom_call.1} parent=1 // pred_fallthru
      _
    // Predicated region
    $region22: #{tpu_custom_call.1} parent=1 // pred_check
      _
    $region23: #{tpu_custom_call.1} parent=1 // pred_check_branch
      %77 = sbr.rel (0) target = $region25
    $region24: #{tpu_custom_call.1} parent=1 // pred_region
      %s79 = ssub.s32 1024, 1024
      %80 = vsyncadd [#allocation12], %s79
      %s81 = sshll.u32 [#allocation11], 4
      %s82 = int_to_ptr.vmem [resolvable:$true] %s81
      %87 = dma.hbm_to_vmem [thread:$0]  %s5, 1024, %s82, [#allocation12], 64, 64, 4
    $region25: #{tpu_custom_call.1} parent=1 // pred_fallthru
      _
    // Predicated region
    $region26: #{tpu_custom_call.1} parent=1 // pred_check
      _
    $region27: #{tpu_custom_call.1} parent=1 // pred_check_branch
      %89 = sbr.rel (0) target = $region29
    $region28: #{tpu_custom_call.1} parent=1 // pred_region
      %s91 = ssub.s32 16, 16
      %92 = vsyncadd [#allocation12], %s91
      %s94 = sshll.u32 [#allocation13], 4
      %s95 = int_to_ptr.vmem [resolvable:$true] %s94
      %97 = dma.hbm_to_vmem [thread:$0]  %s6, 16, %s95, [#allocation12]
    $region29: #{tpu_custom_call.1} parent=1 // pred_fallthru
      _
    // Predicated region
    $region30: #{tpu_custom_call.1} parent=1 // pred_check
      _
    $region31: #{tpu_custom_call.1} parent=1 // pred_check_branch
      %99 = sbr.rel (0) target = $region33
    $region32: #{tpu_custom_call.1} parent=1 // pred_region
      %s101 = ssub.s32 1024, 1024
      %102 = vsyncadd [#allocation15], %s101
      %s103 = sshll.u32 [#allocation14], 4
      %s104 = int_to_ptr.vmem [resolvable:$true] %s103
      %109 = dma.hbm_to_vmem [thread:$0]  %s7, 1024, %s104, [#allocation15], 64, 64, 4
    $region33: #{tpu_custom_call.1} parent=1 // pred_fallthru
      _
    // Predicated region
    $region34: #{tpu_custom_call.1} parent=1 // pred_check
      _
    $region35: #{tpu_custom_call.1} parent=1 // pred_check_branch
      %111 = sbr.rel (0) target = $region37
    $region36: #{tpu_custom_call.1} parent=1 // pred_region
      %s113 = ssub.s32 16, 16
      %114 = vsyncadd [#allocation15], %s113
      %s116 = sshll.u32 [#allocation16], 4
      %s117 = int_to_ptr.vmem [resolvable:$true] %s116
      %119 = dma.hbm_to_vmem [thread:$0]  %s8, 16, %s117, [#allocation15]
    $region37: #{tpu_custom_call.1} parent=1 // pred_fallthru
      _
    // Predicated region
    $region38: #{tpu_custom_call.1} parent=1 // pred_check
      _
    $region39: #{tpu_custom_call.1} parent=1 // pred_check_branch
      %121 = sbr.rel (0) target = $region41
    $region40: #{tpu_custom_call.1} parent=1 // pred_region
      %122 = dma.done [#allocation3], 6144
    $region41: #{tpu_custom_call.1} parent=1 // pred_fallthru
      _
    // Predicated region
    $region42: #{tpu_custom_call.1} parent=1 // pred_check
      _
    $region43: #{tpu_custom_call.1} parent=1 // pred_check_branch
      %124 = sbr.rel (0) target = $region45
    $region44: #{tpu_custom_call.1} parent=1 // pred_region
      %125 = dma.done [#allocation6], 49152
    $region45: #{tpu_custom_call.1} parent=1 // pred_fallthru
      _
    // Predicated region
    $region46: #{tpu_custom_call.1} parent=1 // pred_check
      _
    $region47: #{tpu_custom_call.1} parent=1 // pred_check_branch
      %127 = sbr.rel (0) target = $region49
    $region48: #{tpu_custom_call.1} parent=1 // pred_region
      %128 = dma.done [#allocation6], 32
    $region49: #{tpu_custom_call.1} parent=1 // pred_fallthru
      _
    // Predicated region
    $region50: #{tpu_custom_call.1} parent=1 // pred_check
      _
    $region51: #{tpu_custom_call.1} parent=1 // pred_check_branch
      %130 = sbr.rel (0) target = $region53
    $region52: #{tpu_custom_call.1} parent=1 // pred_region
      %131 = dma.done [#allocation9], 2048
    $region53: #{tpu_custom_call.1} parent=1 // pred_fallthru
      _
    // Predicated region
    $region54: #{tpu_custom_call.1} parent=1 // pred_check
      _
    $region55: #{tpu_custom_call.1} parent=1 // pred_check_branch
      %133 = sbr.rel (0) target = $region57
    $region56: #{tpu_custom_call.1} parent=1 // pred_region
      %134 = dma.done [#allocation9], 16
    $region57: #{tpu_custom_call.1} parent=1 // pred_fallthru
      _
    // Predicated region
    $region58: #{tpu_custom_call.1} parent=1 // pred_check
      _
    $region59: #{tpu_custom_call.1} parent=1 // pred_check_branch
      %136 = sbr.rel (0) target = $region61
    $region60: #{tpu_custom_call.1} parent=1 // pred_region
      %137 = dma.done [#allocation12], 1024
    $region61: #{tpu_custom_call.1} parent=1 // pred_fallthru
      _
    // Predicated region
    $region62: #{tpu_custom_call.1} parent=1 // pred_check
      _
    $region63: #{tpu_custom_call.1} parent=1 // pred_check_branch
      %139 = sbr.rel (0) target = $region65
    $region64: #{tpu_custom_call.1} parent=1 // pred_region
      %140 = dma.done [#allocation12], 16
    $region65: #{tpu_custom_call.1} parent=1 // pred_fallthru
      _
    // Predicated region
    $region66: #{tpu_custom_call.1} parent=1 // pred_check
      _
    $region67: #{tpu_custom_call.1} parent=1 // pred_check_branch
      %142 = sbr.rel (0) target = $region69
    $region68: #{tpu_custom_call.1} parent=1 // pred_region
      %143 = dma.done [#allocation15], 1024
    $region69: #{tpu_custom_call.1} parent=1 // pred_fallthru
      _
    // Predicated region
    $region70: #{tpu_custom_call.1} parent=1 // pred_check
      _
    $region71: #{tpu_custom_call.1} parent=1 // pred_check_branch
      %145 = sbr.rel (0) target = $region73
    $region72: #{tpu_custom_call.1} parent=1 // pred_region
      %146 = dma.done [#allocation15], 16
    $region73: #{tpu_custom_call.1} parent=1 // pred_fallthru
      _
    %v148 = vld [vmem:[#allocation2] sm:$0xff]
    %v149 = vld [vmem:[#allocation2 + $0x8] sm:$0xff]
    %v150 = vld [vmem:[#allocation2 + $0x10] sm:$0xff]
    %v151 = vld [vmem:[#allocation2 + $0x18] sm:$0xff]
    %v152 = vld [vmem:[#allocation2 + $0x20] sm:$0xff]
    %v153 = vld [vmem:[#allocation2 + $0x28] sm:$0xff]
    %v154 = vld [vmem:[#allocation2 + $0x30] sm:$0xff]
    %v155 = vld [vmem:[#allocation2 + $0x38] sm:$0xff]
    %v156 = vld [vmem:[#allocation2 + $0x40] sm:$0xff]
    %v157 = vld [vmem:[#allocation2 + $0x48] sm:$0xff]
    %v158 = vld [vmem:[#allocation2 + $0x50] sm:$0xff]
    %v159 = vld [vmem:[#allocation2 + $0x58] sm:$0xff]
    %v160 = vld [vmem:[#allocation2 + $0x60] sm:$0xff]
    %v161 = vld [vmem:[#allocation2 + $0x68] sm:$0xff]
    %v162 = vld [vmem:[#allocation2 + $0x70] sm:$0xff]
    %v163 = vld [vmem:[#allocation2 + $0x78] sm:$0xff]
    %v164 = vld [vmem:[#allocation2 + $0x80] sm:$0xff]
    %v165 = vld [vmem:[#allocation2 + $0x88] sm:$0xff]
    %v166 = vld [vmem:[#allocation2 + $0x90] sm:$0xff]
    %v167 = vld [vmem:[#allocation2 + $0x98] sm:$0xff]
    %v168 = vld [vmem:[#allocation2 + $0xa0] sm:$0xff]
    %v169 = vld [vmem:[#allocation2 + $0xa8] sm:$0xff]
    %v170 = vld [vmem:[#allocation2 + $0xb0] sm:$0xff]
    %v171 = vld [vmem:[#allocation2 + $0xb8] sm:$0xff]
    %v172 = vld [vmem:[#allocation2 + $0xc0] sm:$0xff]
    %v173 = vld [vmem:[#allocation2 + $0xc8] sm:$0xff]
    %v174 = vld [vmem:[#allocation2 + $0xd0] sm:$0xff]
    %v175 = vld [vmem:[#allocation2 + $0xd8] sm:$0xff]
    %v176 = vld [vmem:[#allocation2 + $0xe0] sm:$0xff]
    %v177 = vld [vmem:[#allocation2 + $0xe8] sm:$0xff]
    %v178 = vld [vmem:[#allocation2 + $0xf0] sm:$0xff]
    %v179 = vld [vmem:[#allocation2 + $0xf8] sm:$0xff]
    %v180 = vld [vmem:[#allocation2 + $0x100] sm:$0xff]
    %v181 = vld [vmem:[#allocation2 + $0x108] sm:$0xff]
    %v182 = vld [vmem:[#allocation2 + $0x110] sm:$0xff]
    %v183 = vld [vmem:[#allocation2 + $0x118] sm:$0xff]
    %v184 = vld [vmem:[#allocation2 + $0x120] sm:$0xff]
    %v185 = vld [vmem:[#allocation2 + $0x128] sm:$0xff]
    %v186 = vld [vmem:[#allocation2 + $0x130] sm:$0xff]
    %v187 = vld [vmem:[#allocation2 + $0x138] sm:$0xff]
    %v188 = vld [vmem:[#allocation2 + $0x140] sm:$0xff]
    %v189 = vld [vmem:[#allocation2 + $0x148] sm:$0xff]
    %v190 = vld [vmem:[#allocation2 + $0x150] sm:$0xff]
    %v191 = vld [vmem:[#allocation2 + $0x158] sm:$0xff]
    %v192 = vld [vmem:[#allocation2 + $0x160] sm:$0xff]
    %v193 = vld [vmem:[#allocation2 + $0x168] sm:$0xff]
    %v194 = vld [vmem:[#allocation2 + $0x170] sm:$0xff]
    %v195 = vld [vmem:[#allocation2 + $0x178] sm:$0xff]
    %v244 = vcombine.low %v148, %v154
    %v245 = vcombine.high %v148, %v154
    %v246 = vcombine.low %v160, %v166
    %v247 = vcombine.high %v160, %v166
    %v249 = vunpack.c.l.s4 1983009808
    %v250 = vunpack.c.0.s8 %v249
    %v251 = vlaneseq
    %v252 = vshrl.u32 %v251, 7
    %v253 = vsub.s32 %v250, %v252
    %v254 = vrot.slane %v244, %v253
    %v256 = vunpack.c.l.s4 1983009808
    %v257 = vunpack.c.0.s8 %v256
    %v258 = vlaneseq
    %v259 = vshrl.u32 %v258, 7
    %v260 = vsub.s32 %v257, %v259
    %v261 = vrot.slane %v245, %v260
    %v263 = vunpack.c.l.s4 1983009808
    %v264 = vunpack.c.0.s8 %v263
    %v265 = vlaneseq
    %v266 = vshrl.u32 %v265, 7
    %v267 = vsub.s32 %v264, %v266
    %v268 = vrot.slane %v246, %v267
    %v270 = vunpack.c.l.s4 1983009808
    %v271 = vunpack.c.0.s8 %v270
    %v272 = vlaneseq
    %v273 = vshrl.u32 %v272, 7
    %v274 = vsub.s32 %v271, %v273
    %v275 = vrot.slane %v247, %v274
    %v276 = vcombine.low %v254, %v268
    %v277 = vcombine.high %v254, %v268
    %v278 = vcombine.low %v261, %v275
    %v279 = vcombine.high %v261, %v275
    %v280 = vcombine.low %v149, %v155
    %v281 = vcombine.high %v149, %v155
    %v282 = vcombine.low %v161, %v167
    %v283 = vcombine.high %v161, %v167
    %v285 = vunpack.c.l.s4 1983009808
    %v286 = vunpack.c.0.s8 %v285
    %v287 = vlaneseq
    %v288 = vshrl.u32 %v287, 7
    %v289 = vsub.s32 %v286, %v288
    %v290 = vrot.slane %v280, %v289
    %v292 = vunpack.c.l.s4 1983009808
    %v293 = vunpack.c.0.s8 %v292
    %v294 = vlaneseq
    %v295 = vshrl.u32 %v294, 7
    %v296 = vsub.s32 %v293, %v295
    %v297 = vrot.slane %v281, %v296
    %v299 = vunpack.c.l.s4 1983009808
    %v300 = vunpack.c.0.s8 %v299
    %v301 = vlaneseq
    %v302 = vshrl.u32 %v301, 7
    %v303 = vsub.s32 %v300, %v302
    %v304 = vrot.slane %v282, %v303
    %v306 = vunpack.c.l.s4 1983009808
    %v307 = vunpack.c.0.s8 %v306
    %v308 = vlaneseq
    %v309 = vshrl.u32 %v308, 7
    %v310 = vsub.s32 %v307, %v309
    %v311 = vrot.slane %v283, %v310
    %v312 = vcombine.low %v290, %v304
    %v313 = vcombine.high %v290, %v304
    %v314 = vcombine.low %v297, %v311
    %v315 = vcombine.high %v297, %v311
    %v316 = vcombine.low %v150, %v156
    %v317 = vcombine.high %v150, %v156
    %v318 = vcombine.low %v162, %v168
    %v319 = vcombine.high %v162, %v168
    %v321 = vunpack.c.l.s4 1983009808
    %v322 = vunpack.c.0.s8 %v321
    %v323 = vlaneseq
    %v324 = vshrl.u32 %v323, 7
    %v325 = vsub.s32 %v322, %v324
    %v326 = vrot.slane %v316, %v325
    %v328 = vunpack.c.l.s4 1983009808
    %v329 = vunpack.c.0.s8 %v328
    %v330 = vlaneseq
    %v331 = vshrl.u32 %v330, 7
    %v332 = vsub.s32 %v329, %v331
    %v333 = vrot.slane %v317, %v332
    %v335 = vunpack.c.l.s4 1983009808
    %v336 = vunpack.c.0.s8 %v335
    %v337 = vlaneseq
    %v338 = vshrl.u32 %v337, 7
    %v339 = vsub.s32 %v336, %v338
    %v340 = vrot.slane %v318, %v339
    %v342 = vunpack.c.l.s4 1983009808
    %v343 = vunpack.c.0.s8 %v342
    %v344 = vlaneseq
    %v345 = vshrl.u32 %v344, 7
    %v346 = vsub.s32 %v343, %v345
    %v347 = vrot.slane %v319, %v346
    %v348 = vcombine.low %v326, %v340
    %v349 = vcombine.high %v326, %v340
    %v350 = vcombine.low %v333, %v347
    %v351 = vcombine.high %v333, %v347
    %v352 = vcombine.low %v151, %v157
    %v353 = vcombine.high %v151, %v157
    %v354 = vcombine.low %v163, %v169
    %v355 = vcombine.high %v163, %v169
    %v357 = vunpack.c.l.s4 1983009808
    %v358 = vunpack.c.0.s8 %v357
    %v359 = vlaneseq
    %v360 = vshrl.u32 %v359, 7
    %v361 = vsub.s32 %v358, %v360
    %v362 = vrot.slane %v352, %v361
    %v364 = vunpack.c.l.s4 1983009808
    %v365 = vunpack.c.0.s8 %v364
    %v366 = vlaneseq
    %v367 = vshrl.u32 %v366, 7
    %v368 = vsub.s32 %v365, %v367
    %v369 = vrot.slane %v353, %v368
    %v371 = vunpack.c.l.s4 1983009808
    %v372 = vunpack.c.0.s8 %v371
    %v373 = vlaneseq
    %v374 = vshrl.u32 %v373, 7
    %v375 = vsub.s32 %v372, %v374
    %v376 = vrot.slane %v354, %v375
    %v378 = vunpack.c.l.s4 1983009808
    %v379 = vunpack.c.0.s8 %v378
    %v380 = vlaneseq
    %v381 = vshrl.u32 %v380, 7
    %v382 = vsub.s32 %v379, %v381
    %v383 = vrot.slane %v355, %v382
    %v384 = vcombine.low %v362, %v376
    %v385 = vcombine.high %v362, %v376
    %v386 = vcombine.low %v369, %v383
    %v387 = vcombine.high %v369, %v383
    %v388 = vcombine.low %v152, %v158
    %v389 = vcombine.high %v152, %v158
    %v390 = vcombine.low %v164, %v170
    %v391 = vcombine.high %v164, %v170
    %v393 = vunpack.c.l.s4 1983009808
    %v394 = vunpack.c.0.s8 %v393
    %v395 = vlaneseq
    %v396 = vshrl.u32 %v395, 7
    %v397 = vsub.s32 %v394, %v396
    %v398 = vrot.slane %v388, %v397
    %v400 = vunpack.c.l.s4 1983009808
    %v401 = vunpack.c.0.s8 %v400
    %v402 = vlaneseq
    %v403 = vshrl.u32 %v402, 7
    %v404 = vsub.s32 %v401, %v403
    %v405 = vrot.slane %v389, %v404
    %v407 = vunpack.c.l.s4 1983009808
    %v408 = vunpack.c.0.s8 %v407
    %v409 = vlaneseq
    %v410 = vshrl.u32 %v409, 7
    %v411 = vsub.s32 %v408, %v410
    %v412 = vrot.slane %v390, %v411
    %v414 = vunpack.c.l.s4 1983009808
    %v415 = vunpack.c.0.s8 %v414
    %v416 = vlaneseq
    %v417 = vshrl.u32 %v416, 7
    %v418 = vsub.s32 %v415, %v417
    %v419 = vrot.slane %v391, %v418
    %v420 = vcombine.low %v398, %v412
    %v421 = vcombine.high %v398, %v412
    %v422 = vcombine.low %v405, %v419
    %v423 = vcombine.high %v405, %v419
    %v424 = vcombine.low %v153, %v159
    %v425 = vcombine.high %v153, %v159
    %v426 = vcombine.low %v165, %v171
    %v427 = vcombine.high %v165, %v171
    %v429 = vunpack.c.l.s4 1983009808
    %v430 = vunpack.c.0.s8 %v429
    %v431 = vlaneseq
    %v432 = vshrl.u32 %v431, 7
    %v433 = vsub.s32 %v430, %v432
    %v434 = vrot.slane %v424, %v433
    %v436 = vunpack.c.l.s4 1983009808
    %v437 = vunpack.c.0.s8 %v436
    %v438 = vlaneseq
    %v439 = vshrl.u32 %v438, 7
    %v440 = vsub.s32 %v437, %v439
    %v441 = vrot.slane %v425, %v440
    %v443 = vunpack.c.l.s4 1983009808
    %v444 = vunpack.c.0.s8 %v443
    %v445 = vlaneseq
    %v446 = vshrl.u32 %v445, 7
    %v447 = vsub.s32 %v444, %v446
    %v448 = vrot.slane %v426, %v447
    %v450 = vunpack.c.l.s4 1983009808
    %v451 = vunpack.c.0.s8 %v450
    %v452 = vlaneseq
    %v453 = vshrl.u32 %v452, 7
    %v454 = vsub.s32 %v451, %v453
    %v455 = vrot.slane %v427, %v454
    %v456 = vcombine.low %v434, %v448
    %v457 = vcombine.high %v434, %v448
    %v458 = vcombine.low %v441, %v455
    %v459 = vcombine.high %v441, %v455
    %v460 = vcombine.low %v172, %v178
    %v461 = vcombine.high %v172, %v178
    %v462 = vcombine.low %v184, %v190
    %v463 = vcombine.high %v184, %v190
    %v465 = vunpack.c.l.s4 1983009808
    %v466 = vunpack.c.0.s8 %v465
    %v467 = vlaneseq
    %v468 = vshrl.u32 %v467, 7
    %v469 = vsub.s32 %v466, %v468
    %v470 = vrot.slane %v460, %v469
    %v472 = vunpack.c.l.s4 1983009808
    %v473 = vunpack.c.0.s8 %v472
    %v474 = vlaneseq
    %v475 = vshrl.u32 %v474, 7
    %v476 = vsub.s32 %v473, %v475
    %v477 = vrot.slane %v461, %v476
    %v479 = vunpack.c.l.s4 1983009808
    %v480 = vunpack.c.0.s8 %v479
    %v481 = vlaneseq
    %v482 = vshrl.u32 %v481, 7
    %v483 = vsub.s32 %v480, %v482
    %v484 = vrot.slane %v462, %v483
    %v486 = vunpack.c.l.s4 1983009808
    %v487 = vunpack.c.0.s8 %v486
    %v488 = vlaneseq
    %v489 = vshrl.u32 %v488, 7
    %v490 = vsub.s32 %v487, %v489
    %v491 = vrot.slane %v463, %v490
    %v492 = vcombine.low %v470, %v484
    %v493 = vcombine.high %v470, %v484
    %v494 = vcombine.low %v477, %v491
    %v495 = vcombine.high %v477, %v491
    %v496 = vcombine.low %v173, %v179
    %v497 = vcombine.high %v173, %v179
    %v498 = vcombine.low %v185, %v191
    %v499 = vcombine.high %v185, %v191
    %v501 = vunpack.c.l.s4 1983009808
    %v502 = vunpack.c.0.s8 %v501
    %v503 = vlaneseq
    %v504 = vshrl.u32 %v503, 7
    %v505 = vsub.s32 %v502, %v504
    %v506 = vrot.slane %v496, %v505
    %v508 = vunpack.c.l.s4 1983009808
    %v509 = vunpack.c.0.s8 %v508
    %v510 = vlaneseq
    %v511 = vshrl.u32 %v510, 7
    %v512 = vsub.s32 %v509, %v511
    %v513 = vrot.slane %v497, %v512
    %v515 = vunpack.c.l.s4 1983009808
    %v516 = vunpack.c.0.s8 %v515
    %v517 = vlaneseq
    %v518 = vshrl.u32 %v517, 7
    %v519 = vsub.s32 %v516, %v518
    %v520 = vrot.slane %v498, %v519
    %v522 = vunpack.c.l.s4 1983009808
    %v523 = vunpack.c.0.s8 %v522
    %v524 = vlaneseq
    %v525 = vshrl.u32 %v524, 7
    %v526 = vsub.s32 %v523, %v525
    %v527 = vrot.slane %v499, %v526
    %v528 = vcombine.low %v506, %v520
    %v529 = vcombine.high %v506, %v520
    %v530 = vcombine.low %v513, %v527
    %v531 = vcombine.high %v513, %v527
    %v532 = vcombine.low %v174, %v180
    %v533 = vcombine.high %v174, %v180
    %v534 = vcombine.low %v186, %v192
    %v535 = vcombine.high %v186, %v192
    %v537 = vunpack.c.l.s4 1983009808
    %v538 = vunpack.c.0.s8 %v537
    %v539 = vlaneseq
    %v540 = vshrl.u32 %v539, 7
    %v541 = vsub.s32 %v538, %v540
    %v542 = vrot.slane %v532, %v541
    %v544 = vunpack.c.l.s4 1983009808
    %v545 = vunpack.c.0.s8 %v544
    %v546 = vlaneseq
    %v547 = vshrl.u32 %v546, 7
    %v548 = vsub.s32 %v545, %v547
    %v549 = vrot.slane %v533, %v548
    %v551 = vunpack.c.l.s4 1983009808
    %v552 = vunpack.c.0.s8 %v551
    %v553 = vlaneseq
    %v554 = vshrl.u32 %v553, 7
    %v555 = vsub.s32 %v552, %v554
    %v556 = vrot.slane %v534, %v555
    %v558 = vunpack.c.l.s4 1983009808
    %v559 = vunpack.c.0.s8 %v558
    %v560 = vlaneseq
    %v561 = vshrl.u32 %v560, 7
    %v562 = vsub.s32 %v559, %v561
    %v563 = vrot.slane %v535, %v562
    %v564 = vcombine.low %v542, %v556
    %v565 = vcombine.high %v542, %v556
    %v566 = vcombine.low %v549, %v563
    %v567 = vcombine.high %v549, %v563
    %v568 = vcombine.low %v175, %v181
    %v569 = vcombine.high %v175, %v181
    %v570 = vcombine.low %v187, %v193
    %v571 = vcombine.high %v187, %v193
    %v573 = vunpack.c.l.s4 1983009808
    %v574 = vunpack.c.0.s8 %v573
    %v575 = vlaneseq
    %v576 = vshrl.u32 %v575, 7
    %v577 = vsub.s32 %v574, %v576
    %v578 = vrot.slane %v568, %v577
    %v580 = vunpack.c.l.s4 1983009808
    %v581 = vunpack.c.0.s8 %v580
    %v582 = vlaneseq
    %v583 = vshrl.u32 %v582, 7
    %v584 = vsub.s32 %v581, %v583
    %v585 = vrot.slane %v569, %v584
    %v587 = vunpack.c.l.s4 1983009808
    %v588 = vunpack.c.0.s8 %v587
    %v589 = vlaneseq
    %v590 = vshrl.u32 %v589, 7
    %v591 = vsub.s32 %v588, %v590
    %v592 = vrot.slane %v570, %v591
    %v594 = vunpack.c.l.s4 1983009808
    %v595 = vunpack.c.0.s8 %v594
    %v596 = vlaneseq
    %v597 = vshrl.u32 %v596, 7
    %v598 = vsub.s32 %v595, %v597
    %v599 = vrot.slane %v571, %v598
    %v600 = vcombine.low %v578, %v592
    %v601 = vcombine.high %v578, %v592
    %v602 = vcombine.low %v585, %v599
    %v603 = vcombine.high %v585, %v599
    %v604 = vcombine.low %v176, %v182
    %v605 = vcombine.high %v176, %v182
    %v606 = vcombine.low %v188, %v194
    %v607 = vcombine.high %v188, %v194
    %v609 = vunpack.c.l.s4 1983009808
    %v610 = vunpack.c.0.s8 %v609
    %v611 = vlaneseq
    %v612 = vshrl.u32 %v611, 7
    %v613 = vsub.s32 %v610, %v612
    %v614 = vrot.slane %v604, %v613
    %v616 = vunpack.c.l.s4 1983009808
    %v617 = vunpack.c.0.s8 %v616
    %v618 = vlaneseq
    %v619 = vshrl.u32 %v618, 7
    %v620 = vsub.s32 %v617, %v619
    %v621 = vrot.slane %v605, %v620
    %v623 = vunpack.c.l.s4 1983009808
    %v624 = vunpack.c.0.s8 %v623
    %v625 = vlaneseq
    %v626 = vshrl.u32 %v625, 7
    %v627 = vsub.s32 %v624, %v626
    %v628 = vrot.slane %v606, %v627
    %v630 = vunpack.c.l.s4 1983009808
    %v631 = vunpack.c.0.s8 %v630
    %v632 = vlaneseq
    %v633 = vshrl.u32 %v632, 7
    %v634 = vsub.s32 %v631, %v633
    %v635 = vrot.slane %v607, %v634
    %v636 = vcombine.low %v614, %v628
    %v637 = vcombine.high %v614, %v628
    %v638 = vcombine.low %v621, %v635
    %v639 = vcombine.high %v621, %v635
    %v640 = vcombine.low %v177, %v183
    %v641 = vcombine.high %v177, %v183
    %v642 = vcombine.low %v189, %v195
    %v643 = vcombine.high %v189, %v195
    %v645 = vunpack.c.l.s4 1983009808
    %v646 = vunpack.c.0.s8 %v645
    %v647 = vlaneseq
    %v648 = vshrl.u32 %v647, 7
    %v649 = vsub.s32 %v646, %v648
    %v650 = vrot.slane %v640, %v649
    %v652 = vunpack.c.l.s4 1983009808
    %v653 = vunpack.c.0.s8 %v652
    %v654 = vlaneseq
    %v655 = vshrl.u32 %v654, 7
    %v656 = vsub.s32 %v653, %v655
    %v657 = vrot.slane %v641, %v656
    %v659 = vunpack.c.l.s4 1983009808
    %v660 = vunpack.c.0.s8 %v659
    %v661 = vlaneseq
    %v662 = vshrl.u32 %v661, 7
    %v663 = vsub.s32 %v660, %v662
    %v664 = vrot.slane %v642, %v663
    %v666 = vunpack.c.l.s4 1983009808
    %v667 = vunpack.c.0.s8 %v666
    %v668 = vlaneseq
    %v669 = vshrl.u32 %v668, 7
    %v670 = vsub.s32 %v667, %v669
    %v671 = vrot.slane %v643, %v670
    %v672 = vcombine.low %v650, %v664
    %v673 = vcombine.high %v650, %v664
    %v674 = vcombine.low %v657, %v671
    %v675 = vcombine.high %v657, %v671
    %v724 = vpack.c.bf16 %v492, %v276
    %v725 = vpack.c.bf16 %v493, %v277
    %v726 = vpack.c.bf16 %v494, %v278
    %v727 = vpack.c.bf16 %v495, %v279
    %v728 = vpack.c.bf16 %v528, %v312
    %v729 = vpack.c.bf16 %v529, %v313
    %v730 = vpack.c.bf16 %v530, %v314
    %v731 = vpack.c.bf16 %v531, %v315
    %v732 = vpack.c.bf16 %v564, %v348
    %v733 = vpack.c.bf16 %v565, %v349
    %v734 = vpack.c.bf16 %v566, %v350
    %v735 = vpack.c.bf16 %v567, %v351
    %v736 = vpack.c.bf16 %v600, %v384
    %v737 = vpack.c.bf16 %v601, %v385
    %v738 = vpack.c.bf16 %v602, %v386
    %v739 = vpack.c.bf16 %v603, %v387
    %v740 = vpack.c.bf16 %v636, %v420
    %v741 = vpack.c.bf16 %v637, %v421
    %v742 = vpack.c.bf16 %v638, %v422
    %v743 = vpack.c.bf16 %v639, %v423
    %v744 = vpack.c.bf16 %v672, %v456
    %v745 = vpack.c.bf16 %v673, %v457
    %v746 = vpack.c.bf16 %v674, %v458
    %v747 = vpack.c.bf16 %v675, %v459
    %v748 = vld [vmem:[#allocation5] sm:$0xff]
    %v749 = vld [vmem:[#allocation5 + $0x8] sm:$0xff]
    %v750 = vld [vmem:[#allocation5 + $0x10] sm:$0xff]
    %v751 = vld [vmem:[#allocation5 + $0x18] sm:$0xff]
    %v752 = vld [vmem:[#allocation5 + $0x20] sm:$0xff]
    %v753 = vld [vmem:[#allocation5 + $0x28] sm:$0xff]
    %v754 = vld [vmem:[#allocation5 + $0x30] sm:$0xff]
    %v755 = vld [vmem:[#allocation5 + $0x38] sm:$0xff]
    %v756 = vld [vmem:[#allocation5 + $0x40] sm:$0xff]
    %v757 = vld [vmem:[#allocation5 + $0x48] sm:$0xff]
    %v758 = vld [vmem:[#allocation5 + $0x50] sm:$0xff]
    %v759 = vld [vmem:[#allocation5 + $0x58] sm:$0xff]
    %v760 = vld [vmem:[#allocation5 + $0x60] sm:$0xff]
    %v761 = vld [vmem:[#allocation5 + $0x68] sm:$0xff]
    %v762 = vld [vmem:[#allocation5 + $0x70] sm:$0xff]
    %v763 = vld [vmem:[#allocation5 + $0x78] sm:$0xff]
    %v764 = vld [vmem:[#allocation5 + $0x80] sm:$0xff]
    %v765 = vld [vmem:[#allocation5 + $0x88] sm:$0xff]
    %v766 = vld [vmem:[#allocation5 + $0x90] sm:$0xff]
    %v767 = vld [vmem:[#allocation5 + $0x98] sm:$0xff]
    %v768 = vld [vmem:[#allocation5 + $0xa0] sm:$0xff]
    %v769 = vld [vmem:[#allocation5 + $0xa8] sm:$0xff]
    %v770 = vld [vmem:[#allocation5 + $0xb0] sm:$0xff]
    %v771 = vld [vmem:[#allocation5 + $0xb8] sm:$0xff]
    %v772 = vld [vmem:[#allocation5 + $0xc0] sm:$0xff]
    %v773 = vld [vmem:[#allocation5 + $0xc8] sm:$0xff]
    %v774 = vld [vmem:[#allocation5 + $0xd0] sm:$0xff]
    %v775 = vld [vmem:[#allocation5 + $0xd8] sm:$0xff]
    %v776 = vld [vmem:[#allocation5 + $0xe0] sm:$0xff]
    %v777 = vld [vmem:[#allocation5 + $0xe8] sm:$0xff]
    %v778 = vld [vmem:[#allocation5 + $0xf0] sm:$0xff]
    %v779 = vld [vmem:[#allocation5 + $0xf8] sm:$0xff]
    %v780 = vld [vmem:[#allocation5 + $0x100] sm:$0xff]
    %v781 = vld [vmem:[#allocation5 + $0x108] sm:$0xff]
    %v782 = vld [vmem:[#allocation5 + $0x110] sm:$0xff]
    %v783 = vld [vmem:[#allocation5 + $0x118] sm:$0xff]
    %v784 = vld [vmem:[#allocation5 + $0x120] sm:$0xff]
    %v785 = vld [vmem:[#allocation5 + $0x128] sm:$0xff]
    %v786 = vld [vmem:[#allocation5 + $0x130] sm:$0xff]
    %v787 = vld [vmem:[#allocation5 + $0x138] sm:$0xff]
    %v788 = vld [vmem:[#allocation5 + $0x140] sm:$0xff]
    %v789 = vld [vmem:[#allocation5 + $0x148] sm:$0xff]
    %v790 = vld [vmem:[#allocation5 + $0x150] sm:$0xff]
    %v791 = vld [vmem:[#allocation5 + $0x158] sm:$0xff]
    %v792 = vld [vmem:[#allocation5 + $0x160] sm:$0xff]
    %v793 = vld [vmem:[#allocation5 + $0x168] sm:$0xff]
    %v794 = vld [vmem:[#allocation5 + $0x170] sm:$0xff]
    %v795 = vld [vmem:[#allocation5 + $0x178] sm:$0xff]
    %v796 = vld [vmem:[#allocation5 + $0x180] sm:$0xff]
    %v797 = vld [vmem:[#allocation5 + $0x188] sm:$0xff]
    %v798 = vld [vmem:[#allocation5 + $0x190] sm:$0xff]
    %v799 = vld [vmem:[#allocation5 + $0x198] sm:$0xff]
    %v800 = vld [vmem:[#allocation5 + $0x1a0] sm:$0xff]
    %v801 = vld [vmem:[#allocation5 + $0x1a8] sm:$0xff]
    %v802 = vld [vmem:[#allocation5 + $0x1b0] sm:$0xff]
    %v803 = vld [vmem:[#allocation5 + $0x1b8] sm:$0xff]
    %v804 = vld [vmem:[#allocation5 + $0x1c0] sm:$0xff]
    %v805 = vld [vmem:[#allocation5 + $0x1c8] sm:$0xff]
    %v806 = vld [vmem:[#allocation5 + $0x1d0] sm:$0xff]
    %v807 = vld [vmem:[#allocation5 + $0x1d8] sm:$0xff]
    %v808 = vld [vmem:[#allocation5 + $0x1e0] sm:$0xff]
    %v809 = vld [vmem:[#allocation5 + $0x1e8] sm:$0xff]
    %v810 = vld [vmem:[#allocation5 + $0x1f0] sm:$0xff]
    %v811 = vld [vmem:[#allocation5 + $0x1f8] sm:$0xff]
    %v812 = vld [vmem:[#allocation5 + $0x200] sm:$0xff]
    %v813 = vld [vmem:[#allocation5 + $0x208] sm:$0xff]
    %v814 = vld [vmem:[#allocation5 + $0x210] sm:$0xff]
    %v815 = vld [vmem:[#allocation5 + $0x218] sm:$0xff]
    %v816 = vld [vmem:[#allocation5 + $0x220] sm:$0xff]
    %v817 = vld [vmem:[#allocation5 + $0x228] sm:$0xff]
    %v818 = vld [vmem:[#allocation5 + $0x230] sm:$0xff]
    %v819 = vld [vmem:[#allocation5 + $0x238] sm:$0xff]
    %v820 = vld [vmem:[#allocation5 + $0x240] sm:$0xff]
    %v821 = vld [vmem:[#allocation5 + $0x248] sm:$0xff]
    %v822 = vld [vmem:[#allocation5 + $0x250] sm:$0xff]
    %v823 = vld [vmem:[#allocation5 + $0x258] sm:$0xff]
    %v824 = vld [vmem:[#allocation5 + $0x260] sm:$0xff]
    %v825 = vld [vmem:[#allocation5 + $0x268] sm:$0xff]
    %v826 = vld [vmem:[#allocation5 + $0x270] sm:$0xff]
    %v827 = vld [vmem:[#allocation5 + $0x278] sm:$0xff]
    %v828 = vld [vmem:[#allocation5 + $0x280] sm:$0xff]
    %v829 = vld [vmem:[#allocation5 + $0x288] sm:$0xff]
    %v830 = vld [vmem:[#allocation5 + $0x290] sm:$0xff]
    %v831 = vld [vmem:[#allocation5 + $0x298] sm:$0xff]
    %v832 = vld [vmem:[#allocation5 + $0x2a0] sm:$0xff]
    %v833 = vld [vmem:[#allocation5 + $0x2a8] sm:$0xff]
    %v834 = vld [vmem:[#allocation5 + $0x2b0] sm:$0xff]
    %v835 = vld [vmem:[#allocation5 + $0x2b8] sm:$0xff]
    %v836 = vld [vmem:[#allocation5 + $0x2c0] sm:$0xff]
    %v837 = vld [vmem:[#allocation5 + $0x2c8] sm:$0xff]
    %v838 = vld [vmem:[#allocation5 + $0x2d0] sm:$0xff]
    %v839 = vld [vmem:[#allocation5 + $0x2d8] sm:$0xff]
    %v840 = vld [vmem:[#allocation5 + $0x2e0] sm:$0xff]
    %v841 = vld [vmem:[#allocation5 + $0x2e8] sm:$0xff]
    %v842 = vld [vmem:[#allocation5 + $0x2f0] sm:$0xff]
    %v843 = vld [vmem:[#allocation5 + $0x2f8] sm:$0xff]
    %v844 = vld [vmem:[#allocation5 + $0x300] sm:$0xff]
    %v845 = vld [vmem:[#allocation5 + $0x308] sm:$0xff]
    %v846 = vld [vmem:[#allocation5 + $0x310] sm:$0xff]
    %v847 = vld [vmem:[#allocation5 + $0x318] sm:$0xff]
    %v848 = vld [vmem:[#allocation5 + $0x320] sm:$0xff]
    %v849 = vld [vmem:[#allocation5 + $0x328] sm:$0xff]
    %v850 = vld [vmem:[#allocation5 + $0x330] sm:$0xff]
    %v851 = vld [vmem:[#allocation5 + $0x338] sm:$0xff]
    %v852 = vld [vmem:[#allocation5 + $0x340] sm:$0xff]
    %v853 = vld [vmem:[#allocation5 + $0x348] sm:$0xff]
    %v854 = vld [vmem:[#allocation5 + $0x350] sm:$0xff]
    %v855 = vld [vmem:[#allocation5 + $0x358] sm:$0xff]
    %v856 = vld [vmem:[#allocation5 + $0x360] sm:$0xff]
    %v857 = vld [vmem:[#allocation5 + $0x368] sm:$0xff]
    %v858 = vld [vmem:[#allocation5 + $0x370] sm:$0xff]
    %v859 = vld [vmem:[#allocation5 + $0x378] sm:$0xff]
    %v860 = vld [vmem:[#allocation5 + $0x380] sm:$0xff]
    %v861 = vld [vmem:[#allocation5 + $0x388] sm:$0xff]
    %v862 = vld [vmem:[#allocation5 + $0x390] sm:$0xff]
    %v863 = vld [vmem:[#allocation5 + $0x398] sm:$0xff]
    %v864 = vld [vmem:[#allocation5 + $0x3a0] sm:$0xff]
    %v865 = vld [vmem:[#allocation5 + $0x3a8] sm:$0xff]
    %v866 = vld [vmem:[#allocation5 + $0x3b0] sm:$0xff]
    %v867 = vld [vmem:[#allocation5 + $0x3b8] sm:$0xff]
    %v868 = vld [vmem:[#allocation5 + $0x3c0] sm:$0xff]
    %v869 = vld [vmem:[#allocation5 + $0x3c8] sm:$0xff]
    %v870 = vld [vmem:[#allocation5 + $0x3d0] sm:$0xff]
    %v871 = vld [vmem:[#allocation5 + $0x3d8] sm:$0xff]
    %v872 = vld [vmem:[#allocation5 + $0x3e0] sm:$0xff]
    %v873 = vld [vmem:[#allocation5 + $0x3e8] sm:$0xff]
    %v874 = vld [vmem:[#allocation5 + $0x3f0] sm:$0xff]
    %v875 = vld [vmem:[#allocation5 + $0x3f8] sm:$0xff]
    %v876 = vld [vmem:[#allocation5 + $0x400] sm:$0xff]
    %v877 = vld [vmem:[#allocation5 + $0x408] sm:$0xff]
    %v878 = vld [vmem:[#allocation5 + $0x410] sm:$0xff]
    %v879 = vld [vmem:[#allocation5 + $0x418] sm:$0xff]
    %v880 = vld [vmem:[#allocation5 + $0x420] sm:$0xff]
    %v881 = vld [vmem:[#allocation5 + $0x428] sm:$0xff]
    %v882 = vld [vmem:[#allocation5 + $0x430] sm:$0xff]
    %v883 = vld [vmem:[#allocation5 + $0x438] sm:$0xff]
    %v884 = vld [vmem:[#allocation5 + $0x440] sm:$0xff]
    %v885 = vld [vmem:[#allocation5 + $0x448] sm:$0xff]
    %v886 = vld [vmem:[#allocation5 + $0x450] sm:$0xff]
    %v887 = vld [vmem:[#allocation5 + $0x458] sm:$0xff]
    %v888 = vld [vmem:[#allocation5 + $0x460] sm:$0xff]
    %v889 = vld [vmem:[#allocation5 + $0x468] sm:$0xff]
    %v890 = vld [vmem:[#allocation5 + $0x470] sm:$0xff]
    %v891 = vld [vmem:[#allocation5 + $0x478] sm:$0xff]
    %v892 = vld [vmem:[#allocation5 + $0x480] sm:$0xff]
    %v893 = vld [vmem:[#allocation5 + $0x488] sm:$0xff]
    %v894 = vld [vmem:[#allocation5 + $0x490] sm:$0xff]
    %v895 = vld [vmem:[#allocation5 + $0x498] sm:$0xff]
    %v896 = vld [vmem:[#allocation5 + $0x4a0] sm:$0xff]
    %v897 = vld [vmem:[#allocation5 + $0x4a8] sm:$0xff]
    %v898 = vld [vmem:[#allocation5 + $0x4b0] sm:$0xff]
    %v899 = vld [vmem:[#allocation5 + $0x4b8] sm:$0xff]
    %v900 = vld [vmem:[#allocation5 + $0x4c0] sm:$0xff]
    %v901 = vld [vmem:[#allocation5 + $0x4c8] sm:$0xff]
    %v902 = vld [vmem:[#allocation5 + $0x4d0] sm:$0xff]
    %v903 = vld [vmem:[#allocation5 + $0x4d8] sm:$0xff]
    %v904 = vld [vmem:[#allocation5 + $0x4e0] sm:$0xff]
    %v905 = vld [vmem:[#allocation5 + $0x4e8] sm:$0xff]
    %v906 = vld [vmem:[#allocation5 + $0x4f0] sm:$0xff]
    %v907 = vld [vmem:[#allocation5 + $0x4f8] sm:$0xff]
    %v908 = vld [vmem:[#allocation5 + $0x500] sm:$0xff]
    %v909 = vld [vmem:[#allocation5 + $0x508] sm:$0xff]
    %v910 = vld [vmem:[#allocation5 + $0x510] sm:$0xff]
    %v911 = vld [vmem:[#allocation5 + $0x518] sm:$0xff]
    %v912 = vld [vmem:[#allocation5 + $0x520] sm:$0xff]
    %v913 = vld [vmem:[#allocation5 + $0x528] sm:$0xff]
    %v914 = vld [vmem:[#allocation5 + $0x530] sm:$0xff]
    %v915 = vld [vmem:[#allocation5 + $0x538] sm:$0xff]
    %v916 = vld [vmem:[#allocation5 + $0x540] sm:$0xff]
    %v917 = vld [vmem:[#allocation5 + $0x548] sm:$0xff]
    %v918 = vld [vmem:[#allocation5 + $0x550] sm:$0xff]
    %v919 = vld [vmem:[#allocation5 + $0x558] sm:$0xff]
    %v920 = vld [vmem:[#allocation5 + $0x560] sm:$0xff]
    %v921 = vld [vmem:[#allocation5 + $0x568] sm:$0xff]
    %v922 = vld [vmem:[#allocation5 + $0x570] sm:$0xff]
    %v923 = vld [vmem:[#allocation5 + $0x578] sm:$0xff]
    %v924 = vld [vmem:[#allocation5 + $0x580] sm:$0xff]
    %v925 = vld [vmem:[#allocation5 + $0x588] sm:$0xff]
    %v926 = vld [vmem:[#allocation5 + $0x590] sm:$0xff]
    %v927 = vld [vmem:[#allocation5 + $0x598] sm:$0xff]
    %v928 = vld [vmem:[#allocation5 + $0x5a0] sm:$0xff]
    %v929 = vld [vmem:[#allocation5 + $0x5a8] sm:$0xff]
    %v930 = vld [vmem:[#allocation5 + $0x5b0] sm:$0xff]
    %v931 = vld [vmem:[#allocation5 + $0x5b8] sm:$0xff]
    %v932 = vld [vmem:[#allocation5 + $0x5c0] sm:$0xff]
    %v933 = vld [vmem:[#allocation5 + $0x5c8] sm:$0xff]
    %v934 = vld [vmem:[#allocation5 + $0x5d0] sm:$0xff]
    %v935 = vld [vmem:[#allocation5 + $0x5d8] sm:$0xff]
    %v936 = vld [vmem:[#allocation5 + $0x5e0] sm:$0xff]
    %v937 = vld [vmem:[#allocation5 + $0x5e8] sm:$0xff]
    %v938 = vld [vmem:[#allocation5 + $0x5f0] sm:$0xff]
    %v939 = vld [vmem:[#allocation5 + $0x5f8] sm:$0xff]
    %v940 = vld [vmem:[#allocation5 + $0x600] sm:$0xff]
    %v941 = vld [vmem:[#allocation5 + $0x608] sm:$0xff]
    %v942 = vld [vmem:[#allocation5 + $0x610] sm:$0xff]
    %v943 = vld [vmem:[#allocation5 + $0x618] sm:$0xff]
    %v944 = vld [vmem:[#allocation5 + $0x620] sm:$0xff]
    %v945 = vld [vmem:[#allocation5 + $0x628] sm:$0xff]
    %v946 = vld [vmem:[#allocation5 + $0x630] sm:$0xff]
    %v947 = vld [vmem:[#allocation5 + $0x638] sm:$0xff]
    %v948 = vld [vmem:[#allocation5 + $0x640] sm:$0xff]
    %v949 = vld [vmem:[#allocation5 + $0x648] sm:$0xff]
    %v950 = vld [vmem:[#allocation5 + $0x650] sm:$0xff]
    %v951 = vld [vmem:[#allocation5 + $0x658] sm:$0xff]
    %v952 = vld [vmem:[#allocation5 + $0x660] sm:$0xff]
    %v953 = vld [vmem:[#allocation5 + $0x668] sm:$0xff]
    %v954 = vld [vmem:[#allocation5 + $0x670] sm:$0xff]
    %v955 = vld [vmem:[#allocation5 + $0x678] sm:$0xff]
    %v956 = vld [vmem:[#allocation5 + $0x680] sm:$0xff]
    %v957 = vld [vmem:[#allocation5 + $0x688] sm:$0xff]
    %v958 = vld [vmem:[#allocation5 + $0x690] sm:$0xff]
    %v959 = vld [vmem:[#allocation5 + $0x698] sm:$0xff]
    %v960 = vld [vmem:[#allocation5 + $0x6a0] sm:$0xff]
    %v961 = vld [vmem:[#allocation5 + $0x6a8] sm:$0xff]
    %v962 = vld [vmem:[#allocation5 + $0x6b0] sm:$0xff]
    %v963 = vld [vmem:[#allocation5 + $0x6b8] sm:$0xff]
    %v964 = vld [vmem:[#allocation5 + $0x6c0] sm:$0xff]
    %v965 = vld [vmem:[#allocation5 + $0x6c8] sm:$0xff]
    %v966 = vld [vmem:[#allocation5 + $0x6d0] sm:$0xff]
    %v967 = vld [vmem:[#allocation5 + $0x6d8] sm:$0xff]
    %v968 = vld [vmem:[#allocation5 + $0x6e0] sm:$0xff]
    %v969 = vld [vmem:[#allocation5 + $0x6e8] sm:$0xff]
    %v970 = vld [vmem:[#allocation5 + $0x6f0] sm:$0xff]
    %v971 = vld [vmem:[#allocation5 + $0x6f8] sm:$0xff]
    %v972 = vld [vmem:[#allocation5 + $0x700] sm:$0xff]
    %v973 = vld [vmem:[#allocation5 + $0x708] sm:$0xff]
    %v974 = vld [vmem:[#allocation5 + $0x710] sm:$0xff]
    %v975 = vld [vmem:[#allocation5 + $0x718] sm:$0xff]
    %v976 = vld [vmem:[#allocation5 + $0x720] sm:$0xff]
    %v977 = vld [vmem:[#allocation5 + $0x728] sm:$0xff]
    %v978 = vld [vmem:[#allocation5 + $0x730] sm:$0xff]
    %v979 = vld [vmem:[#allocation5 + $0x738] sm:$0xff]
    %v980 = vld [vmem:[#allocation5 + $0x740] sm:$0xff]
    %v981 = vld [vmem:[#allocation5 + $0x748] sm:$0xff]
    %v982 = vld [vmem:[#allocation5 + $0x750] sm:$0xff]
    %v983 = vld [vmem:[#allocation5 + $0x758] sm:$0xff]
    %v984 = vld [vmem:[#allocation5 + $0x760] sm:$0xff]
    %v985 = vld [vmem:[#allocation5 + $0x768] sm:$0xff]
    %v986 = vld [vmem:[#allocation5 + $0x770] sm:$0xff]
    %v987 = vld [vmem:[#allocation5 + $0x778] sm:$0xff]
    %v988 = vld [vmem:[#allocation5 + $0x780] sm:$0xff]
    %v989 = vld [vmem:[#allocation5 + $0x788] sm:$0xff]
    %v990 = vld [vmem:[#allocation5 + $0x790] sm:$0xff]
    %v991 = vld [vmem:[#allocation5 + $0x798] sm:$0xff]
    %v992 = vld [vmem:[#allocation5 + $0x7a0] sm:$0xff]
    %v993 = vld [vmem:[#allocation5 + $0x7a8] sm:$0xff]
    %v994 = vld [vmem:[#allocation5 + $0x7b0] sm:$0xff]
    %v995 = vld [vmem:[#allocation5 + $0x7b8] sm:$0xff]
    %v996 = vld [vmem:[#allocation5 + $0x7c0] sm:$0xff]
    %v997 = vld [vmem:[#allocation5 + $0x7c8] sm:$0xff]
    %v998 = vld [vmem:[#allocation5 + $0x7d0] sm:$0xff]
    %v999 = vld [vmem:[#allocation5 + $0x7d8] sm:$0xff]
    %v1000 = vld [vmem:[#allocation5 + $0x7e0] sm:$0xff]
    %v1001 = vld [vmem:[#allocation5 + $0x7e8] sm:$0xff]
    %v1002 = vld [vmem:[#allocation5 + $0x7f0] sm:$0xff]
    %v1003 = vld [vmem:[#allocation5 + $0x7f8] sm:$0xff]
    %v1004 = vld [vmem:[#allocation5 + $0x800] sm:$0xff]
    %v1005 = vld [vmem:[#allocation5 + $0x808] sm:$0xff]
    %v1006 = vld [vmem:[#allocation5 + $0x810] sm:$0xff]
    %v1007 = vld [vmem:[#allocation5 + $0x818] sm:$0xff]
    %v1008 = vld [vmem:[#allocation5 + $0x820] sm:$0xff]
    %v1009 = vld [vmem:[#allocation5 + $0x828] sm:$0xff]
    %v1010 = vld [vmem:[#allocation5 + $0x830] sm:$0xff]
    %v1011 = vld [vmem:[#allocation5 + $0x838] sm:$0xff]
    %v1012 = vld [vmem:[#allocation5 + $0x840] sm:$0xff]
    %v1013 = vld [vmem:[#allocation5 + $0x848] sm:$0xff]
    %v1014 = vld [vmem:[#allocation5 + $0x850] sm:$0xff]
    %v1015 = vld [vmem:[#allocation5 + $0x858] sm:$0xff]
    %v1016 = vld [vmem:[#allocation5 + $0x860] sm:$0xff]
    %v1017 = vld [vmem:[#allocation5 + $0x868] sm:$0xff]
    %v1018 = vld [vmem:[#allocation5 + $0x870] sm:$0xff]
    %v1019 = vld [vmem:[#allocation5 + $0x878] sm:$0xff]
    %v1020 = vld [vmem:[#allocation5 + $0x880] sm:$0xff]
    %v1021 = vld [vmem:[#allocation5 + $0x888] sm:$0xff]
    %v1022 = vld [vmem:[#allocation5 + $0x890] sm:$0xff]
    %v1023 = vld [vmem:[#allocation5 + $0x898] sm:$0xff]
    %v1024 = vld [vmem:[#allocation5 + $0x8a0] sm:$0xff]
    %v1025 = vld [vmem:[#allocation5 + $0x8a8] sm:$0xff]
    %v1026 = vld [vmem:[#allocation5 + $0x8b0] sm:$0xff]
    %v1027 = vld [vmem:[#allocation5 + $0x8b8] sm:$0xff]
    %v1028 = vld [vmem:[#allocation5 + $0x8c0] sm:$0xff]
    %v1029 = vld [vmem:[#allocation5 + $0x8c8] sm:$0xff]
    %v1030 = vld [vmem:[#allocation5 + $0x8d0] sm:$0xff]
    %v1031 = vld [vmem:[#allocation5 + $0x8d8] sm:$0xff]
    %v1032 = vld [vmem:[#allocation5 + $0x8e0] sm:$0xff]
    %v1033 = vld [vmem:[#allocation5 + $0x8e8] sm:$0xff]
    %v1034 = vld [vmem:[#allocation5 + $0x8f0] sm:$0xff]
    %v1035 = vld [vmem:[#allocation5 + $0x8f8] sm:$0xff]
    %v1036 = vld [vmem:[#allocation5 + $0x900] sm:$0xff]
    %v1037 = vld [vmem:[#allocation5 + $0x908] sm:$0xff]
    %v1038 = vld [vmem:[#allocation5 + $0x910] sm:$0xff]
    %v1039 = vld [vmem:[#allocation5 + $0x918] sm:$0xff]
    %v1040 = vld [vmem:[#allocation5 + $0x920] sm:$0xff]
    %v1041 = vld [vmem:[#allocation5 + $0x928] sm:$0xff]
    %v1042 = vld [vmem:[#allocation5 + $0x930] sm:$0xff]
    %v1043 = vld [vmem:[#allocation5 + $0x938] sm:$0xff]
    %v1044 = vld [vmem:[#allocation5 + $0x940] sm:$0xff]
    %v1045 = vld [vmem:[#allocation5 + $0x948] sm:$0xff]
    %v1046 = vld [vmem:[#allocation5 + $0x950] sm:$0xff]
    %v1047 = vld [vmem:[#allocation5 + $0x958] sm:$0xff]
    %v1048 = vld [vmem:[#allocation5 + $0x960] sm:$0xff]
    %v1049 = vld [vmem:[#allocation5 + $0x968] sm:$0xff]
    %v1050 = vld [vmem:[#allocation5 + $0x970] sm:$0xff]
    %v1051 = vld [vmem:[#allocation5 + $0x978] sm:$0xff]
    %v1052 = vld [vmem:[#allocation5 + $0x980] sm:$0xff]
    %v1053 = vld [vmem:[#allocation5 + $0x988] sm:$0xff]
    %v1054 = vld [vmem:[#allocation5 + $0x990] sm:$0xff]
    %v1055 = vld [vmem:[#allocation5 + $0x998] sm:$0xff]
    %v1056 = vld [vmem:[#allocation5 + $0x9a0] sm:$0xff]
    %v1057 = vld [vmem:[#allocation5 + $0x9a8] sm:$0xff]
    %v1058 = vld [vmem:[#allocation5 + $0x9b0] sm:$0xff]
    %v1059 = vld [vmem:[#allocation5 + $0x9b8] sm:$0xff]
    %v1060 = vld [vmem:[#allocation5 + $0x9c0] sm:$0xff]
    %v1061 = vld [vmem:[#allocation5 + $0x9c8] sm:$0xff]
    %v1062 = vld [vmem:[#allocation5 + $0x9d0] sm:$0xff]
    %v1063 = vld [vmem:[#allocation5 + $0x9d8] sm:$0xff]
    %v1064 = vld [vmem:[#allocation5 + $0x9e0] sm:$0xff]
    %v1065 = vld [vmem:[#allocation5 + $0x9e8] sm:$0xff]
    %v1066 = vld [vmem:[#allocation5 + $0x9f0] sm:$0xff]
    %v1067 = vld [vmem:[#allocation5 + $0x9f8] sm:$0xff]
    %v1068 = vld [vmem:[#allocation5 + $0xa00] sm:$0xff]
    %v1069 = vld [vmem:[#allocation5 + $0xa08] sm:$0xff]
    %v1070 = vld [vmem:[#allocation5 + $0xa10] sm:$0xff]
    %v1071 = vld [vmem:[#allocation5 + $0xa18] sm:$0xff]
    %v1072 = vld [vmem:[#allocation5 + $0xa20] sm:$0xff]
    %v1073 = vld [vmem:[#allocation5 + $0xa28] sm:$0xff]
    %v1074 = vld [vmem:[#allocation5 + $0xa30] sm:$0xff]
    %v1075 = vld [vmem:[#allocation5 + $0xa38] sm:$0xff]
    %v1076 = vld [vmem:[#allocation5 + $0xa40] sm:$0xff]
    %v1077 = vld [vmem:[#allocation5 + $0xa48] sm:$0xff]
    %v1078 = vld [vmem:[#allocation5 + $0xa50] sm:$0xff]
    %v1079 = vld [vmem:[#allocation5 + $0xa58] sm:$0xff]
    %v1080 = vld [vmem:[#allocation5 + $0xa60] sm:$0xff]
    %v1081 = vld [vmem:[#allocation5 + $0xa68] sm:$0xff]
    %v1082 = vld [vmem:[#allocation5 + $0xa70] sm:$0xff]
    %v1083 = vld [vmem:[#allocation5 + $0xa78] sm:$0xff]
    %v1084 = vld [vmem:[#allocation5 + $0xa80] sm:$0xff]
    %v1085 = vld [vmem:[#allocation5 + $0xa88] sm:$0xff]
    %v1086 = vld [vmem:[#allocation5 + $0xa90] sm:$0xff]
    %v1087 = vld [vmem:[#allocation5 + $0xa98] sm:$0xff]
    %v1088 = vld [vmem:[#allocation5 + $0xaa0] sm:$0xff]
    %v1089 = vld [vmem:[#allocation5 + $0xaa8] sm:$0xff]
    %v1090 = vld [vmem:[#allocation5 + $0xab0] sm:$0xff]
    %v1091 = vld [vmem:[#allocation5 + $0xab8] sm:$0xff]
    %v1092 = vld [vmem:[#allocation5 + $0xac0] sm:$0xff]
    %v1093 = vld [vmem:[#allocation5 + $0xac8] sm:$0xff]
    %v1094 = vld [vmem:[#allocation5 + $0xad0] sm:$0xff]
    %v1095 = vld [vmem:[#allocation5 + $0xad8] sm:$0xff]
    %v1096 = vld [vmem:[#allocation5 + $0xae0] sm:$0xff]
    %v1097 = vld [vmem:[#allocation5 + $0xae8] sm:$0xff]
    %v1098 = vld [vmem:[#allocation5 + $0xaf0] sm:$0xff]
    %v1099 = vld [vmem:[#allocation5 + $0xaf8] sm:$0xff]
    %v1100 = vld [vmem:[#allocation5 + $0xb00] sm:$0xff]
    %v1101 = vld [vmem:[#allocation5 + $0xb08] sm:$0xff]
    %v1102 = vld [vmem:[#allocation5 + $0xb10] sm:$0xff]
    %v1103 = vld [vmem:[#allocation5 + $0xb18] sm:$0xff]
    %v1104 = vld [vmem:[#allocation5 + $0xb20] sm:$0xff]
    %v1105 = vld [vmem:[#allocation5 + $0xb28] sm:$0xff]
    %v1106 = vld [vmem:[#allocation5 + $0xb30] sm:$0xff]
    %v1107 = vld [vmem:[#allocation5 + $0xb38] sm:$0xff]
    %v1108 = vld [vmem:[#allocation5 + $0xb40] sm:$0xff]
    %v1109 = vld [vmem:[#allocation5 + $0xb48] sm:$0xff]
    %v1110 = vld [vmem:[#allocation5 + $0xb50] sm:$0xff]
    %v1111 = vld [vmem:[#allocation5 + $0xb58] sm:$0xff]
    %v1112 = vld [vmem:[#allocation5 + $0xb60] sm:$0xff]
    %v1113 = vld [vmem:[#allocation5 + $0xb68] sm:$0xff]
    %v1114 = vld [vmem:[#allocation5 + $0xb70] sm:$0xff]
    %v1115 = vld [vmem:[#allocation5 + $0xb78] sm:$0xff]
    %v1116 = vld [vmem:[#allocation5 + $0xb80] sm:$0xff]
    %v1117 = vld [vmem:[#allocation5 + $0xb88] sm:$0xff]
    %v1118 = vld [vmem:[#allocation5 + $0xb90] sm:$0xff]
    %v1119 = vld [vmem:[#allocation5 + $0xb98] sm:$0xff]
    %v1120 = vld [vmem:[#allocation5 + $0xba0] sm:$0xff]
    %v1121 = vld [vmem:[#allocation5 + $0xba8] sm:$0xff]
    %v1122 = vld [vmem:[#allocation5 + $0xbb0] sm:$0xff]
    %v1123 = vld [vmem:[#allocation5 + $0xbb8] sm:$0xff]
    %v1124 = vld [vmem:[#allocation5 + $0xbc0] sm:$0xff]
    %v1125 = vld [vmem:[#allocation5 + $0xbc8] sm:$0xff]
    %v1126 = vld [vmem:[#allocation5 + $0xbd0] sm:$0xff]
    %v1127 = vld [vmem:[#allocation5 + $0xbd8] sm:$0xff]
    %v1128 = vld [vmem:[#allocation5 + $0xbe0] sm:$0xff]
    %v1129 = vld [vmem:[#allocation5 + $0xbe8] sm:$0xff]
    %v1130 = vld [vmem:[#allocation5 + $0xbf0] sm:$0xff]
    %v1131 = vld [vmem:[#allocation5 + $0xbf8] sm:$0xff]
    %v1132 = vld [vmem:[#allocation7] sm:$0x3]
    %v1134 = vlaneseq
    %v1135 = vshrl.u32 %v1134, 7
    %v1136 = vsub.s32 0, %v1135
    %v1137 = vrot.slane %v1132, %v1136
    %v1138 = vlaneseq
    %v1139 = vshrl.u32 %v1138, 7
    %v1140 = vsub.s32 1, %v1139
    %v1141 = vrot.slane %v1132, %v1140
    %v1528 = vunpack.c.l.b16 %v748
    %v1529 = vunpack.c.h.b16 %v748
    %v1530 = vunpack.c.l.b16 %v749
    %v1531 = vunpack.c.h.b16 %v749
    %v1532 = vunpack.c.l.b16 %v750
    %v1533 = vunpack.c.h.b16 %v750
    %v1534 = vunpack.c.l.b16 %v751
    %v1535 = vunpack.c.h.b16 %v751
    %v1536 = vunpack.c.l.b16 %v752
    %v1537 = vunpack.c.h.b16 %v752
    %v1538 = vunpack.c.l.b16 %v753
    %v1539 = vunpack.c.h.b16 %v753
    %v1540 = vunpack.c.l.b16 %v754
    %v1541 = vunpack.c.h.b16 %v754
    %v1542 = vunpack.c.l.b16 %v755
    %v1543 = vunpack.c.h.b16 %v755
    %v1544 = vunpack.c.l.b16 %v756
    %v1545 = vunpack.c.h.b16 %v756
    %v1546 = vunpack.c.l.b16 %v757
    %v1547 = vunpack.c.h.b16 %v757
    %v1548 = vunpack.c.l.b16 %v758
    %v1549 = vunpack.c.h.b16 %v758
    %v1550 = vunpack.c.l.b16 %v759
    %v1551 = vunpack.c.h.b16 %v759
    %v1552 = vunpack.c.l.b16 %v760
    %v1553 = vunpack.c.h.b16 %v760
    %v1554 = vunpack.c.l.b16 %v761
    %v1555 = vunpack.c.h.b16 %v761
    %v1556 = vunpack.c.l.b16 %v762
    %v1557 = vunpack.c.h.b16 %v762
    %v1558 = vunpack.c.l.b16 %v763
    %v1559 = vunpack.c.h.b16 %v763
    %v1560 = vunpack.c.l.b16 %v764
    %v1561 = vunpack.c.h.b16 %v764
    %v1562 = vunpack.c.l.b16 %v765
    %v1563 = vunpack.c.h.b16 %v765
    %v1564 = vunpack.c.l.b16 %v766
    %v1565 = vunpack.c.h.b16 %v766
    %v1566 = vunpack.c.l.b16 %v767
    %v1567 = vunpack.c.h.b16 %v767
    %v1568 = vunpack.c.l.b16 %v768
    %v1569 = vunpack.c.h.b16 %v768
    %v1570 = vunpack.c.l.b16 %v769
    %v1571 = vunpack.c.h.b16 %v769
    %v1572 = vunpack.c.l.b16 %v770
    %v1573 = vunpack.c.h.b16 %v770
    %v1574 = vunpack.c.l.b16 %v771
    %v1575 = vunpack.c.h.b16 %v771
    %v1576 = vunpack.c.l.b16 %v772
    %v1577 = vunpack.c.h.b16 %v772
    %v1578 = vunpack.c.l.b16 %v773
    %v1579 = vunpack.c.h.b16 %v773
    %v1580 = vunpack.c.l.b16 %v774
    %v1581 = vunpack.c.h.b16 %v774
    %v1582 = vunpack.c.l.b16 %v775
    %v1583 = vunpack.c.h.b16 %v775
    %v1584 = vunpack.c.l.b16 %v776
    %v1585 = vunpack.c.h.b16 %v776
    %v1586 = vunpack.c.l.b16 %v777
    %v1587 = vunpack.c.h.b16 %v777
    %v1588 = vunpack.c.l.b16 %v778
    %v1589 = vunpack.c.h.b16 %v778
    %v1590 = vunpack.c.l.b16 %v779
    %v1591 = vunpack.c.h.b16 %v779
    %v1592 = vunpack.c.l.b16 %v780
    %v1593 = vunpack.c.h.b16 %v780
    %v1594 = vunpack.c.l.b16 %v781
    %v1595 = vunpack.c.h.b16 %v781
    %v1596 = vunpack.c.l.b16 %v782
    %v1597 = vunpack.c.h.b16 %v782
    %v1598 = vunpack.c.l.b16 %v783
    %v1599 = vunpack.c.h.b16 %v783
    %v1600 = vunpack.c.l.b16 %v784
    %v1601 = vunpack.c.h.b16 %v784
    %v1602 = vunpack.c.l.b16 %v785
    %v1603 = vunpack.c.h.b16 %v785
    %v1604 = vunpack.c.l.b16 %v786
    %v1605 = vunpack.c.h.b16 %v786
    %v1606 = vunpack.c.l.b16 %v787
    %v1607 = vunpack.c.h.b16 %v787
    %v1608 = vunpack.c.l.b16 %v788
    %v1609 = vunpack.c.h.b16 %v788
    %v1610 = vunpack.c.l.b16 %v789
    %v1611 = vunpack.c.h.b16 %v789
    %v1612 = vunpack.c.l.b16 %v790
    %v1613 = vunpack.c.h.b16 %v790
    %v1614 = vunpack.c.l.b16 %v791
    %v1615 = vunpack.c.h.b16 %v791
    %v1616 = vunpack.c.l.b16 %v792
    %v1617 = vunpack.c.h.b16 %v792
    %v1618 = vunpack.c.l.b16 %v793
    %v1619 = vunpack.c.h.b16 %v793
    %v1620 = vunpack.c.l.b16 %v794
    %v1621 = vunpack.c.h.b16 %v794
    %v1622 = vunpack.c.l.b16 %v795
    %v1623 = vunpack.c.h.b16 %v795
    %v1624 = vunpack.c.l.b16 %v796
    %v1625 = vunpack.c.h.b16 %v796
    %v1626 = vunpack.c.l.b16 %v797
    %v1627 = vunpack.c.h.b16 %v797
    %v1628 = vunpack.c.l.b16 %v798
    %v1629 = vunpack.c.h.b16 %v798
    %v1630 = vunpack.c.l.b16 %v799
    %v1631 = vunpack.c.h.b16 %v799
    %v1632 = vunpack.c.l.b16 %v800
    %v1633 = vunpack.c.h.b16 %v800
    %v1634 = vunpack.c.l.b16 %v801
    %v1635 = vunpack.c.h.b16 %v801
    %v1636 = vunpack.c.l.b16 %v802
    %v1637 = vunpack.c.h.b16 %v802
    %v1638 = vunpack.c.l.b16 %v803
    %v1639 = vunpack.c.h.b16 %v803
    %v1640 = vunpack.c.l.b16 %v804
    %v1641 = vunpack.c.h.b16 %v804
    %v1642 = vunpack.c.l.b16 %v805
    %v1643 = vunpack.c.h.b16 %v805
    %v1644 = vunpack.c.l.b16 %v806
    %v1645 = vunpack.c.h.b16 %v806
    %v1646 = vunpack.c.l.b16 %v807
    %v1647 = vunpack.c.h.b16 %v807
    %v1648 = vunpack.c.l.b16 %v808
    %v1649 = vunpack.c.h.b16 %v808
    %v1650 = vunpack.c.l.b16 %v809
    %v1651 = vunpack.c.h.b16 %v809
    %v1652 = vunpack.c.l.b16 %v810
    %v1653 = vunpack.c.h.b16 %v810
    %v1654 = vunpack.c.l.b16 %v811
    %v1655 = vunpack.c.h.b16 %v811
    %v1656 = vunpack.c.l.b16 %v812
    %v1657 = vunpack.c.h.b16 %v812
    %v1658 = vunpack.c.l.b16 %v813
    %v1659 = vunpack.c.h.b16 %v813
    %v1660 = vunpack.c.l.b16 %v814
    %v1661 = vunpack.c.h.b16 %v814
    %v1662 = vunpack.c.l.b16 %v815
    %v1663 = vunpack.c.h.b16 %v815
    %v1664 = vunpack.c.l.b16 %v816
    %v1665 = vunpack.c.h.b16 %v816
    %v1666 = vunpack.c.l.b16 %v817
    %v1667 = vunpack.c.h.b16 %v817
    %v1668 = vunpack.c.l.b16 %v818
    %v1669 = vunpack.c.h.b16 %v818
    %v1670 = vunpack.c.l.b16 %v819
    %v1671 = vunpack.c.h.b16 %v819
    %v1672 = vunpack.c.l.b16 %v820
    %v1673 = vunpack.c.h.b16 %v820
    %v1674 = vunpack.c.l.b16 %v821
    %v1675 = vunpack.c.h.b16 %v821
    %v1676 = vunpack.c.l.b16 %v822
    %v1677 = vunpack.c.h.b16 %v822
    %v1678 = vunpack.c.l.b16 %v823
    %v1679 = vunpack.c.h.b16 %v823
    %v1680 = vunpack.c.l.b16 %v824
    %v1681 = vunpack.c.h.b16 %v824
    %v1682 = vunpack.c.l.b16 %v825
    %v1683 = vunpack.c.h.b16 %v825
    %v1684 = vunpack.c.l.b16 %v826
    %v1685 = vunpack.c.h.b16 %v826
    %v1686 = vunpack.c.l.b16 %v827
    %v1687 = vunpack.c.h.b16 %v827
    %v1688 = vunpack.c.l.b16 %v828
    %v1689 = vunpack.c.h.b16 %v828
    %v1690 = vunpack.c.l.b16 %v829
    %v1691 = vunpack.c.h.b16 %v829
    %v1692 = vunpack.c.l.b16 %v830
    %v1693 = vunpack.c.h.b16 %v830
    %v1694 = vunpack.c.l.b16 %v831
    %v1695 = vunpack.c.h.b16 %v831
    %v1696 = vunpack.c.l.b16 %v832
    %v1697 = vunpack.c.h.b16 %v832
    %v1698 = vunpack.c.l.b16 %v833
    %v1699 = vunpack.c.h.b16 %v833
    %v1700 = vunpack.c.l.b16 %v834
    %v1701 = vunpack.c.h.b16 %v834
    %v1702 = vunpack.c.l.b16 %v835
    %v1703 = vunpack.c.h.b16 %v835
    %v1704 = vunpack.c.l.b16 %v836
    %v1705 = vunpack.c.h.b16 %v836
    %v1706 = vunpack.c.l.b16 %v837
    %v1707 = vunpack.c.h.b16 %v837
    %v1708 = vunpack.c.l.b16 %v838
    %v1709 = vunpack.c.h.b16 %v838
    %v1710 = vunpack.c.l.b16 %v839
    %v1711 = vunpack.c.h.b16 %v839
    %v1712 = vunpack.c.l.b16 %v840
    %v1713 = vunpack.c.h.b16 %v840
    %v1714 = vunpack.c.l.b16 %v841
    %v1715 = vunpack.c.h.b16 %v841
    %v1716 = vunpack.c.l.b16 %v842
    %v1717 = vunpack.c.h.b16 %v842
    %v1718 = vunpack.c.l.b16 %v843
    %v1719 = vunpack.c.h.b16 %v843
    %v1720 = vunpack.c.l.b16 %v844
    %v1721 = vunpack.c.h.b16 %v844
    %v1722 = vunpack.c.l.b16 %v845
    %v1723 = vunpack.c.h.b16 %v845
    %v1724 = vunpack.c.l.b16 %v846
    %v1725 = vunpack.c.h.b16 %v846
    %v1726 = vunpack.c.l.b16 %v847
    %v1727 = vunpack.c.h.b16 %v847
    %v1728 = vunpack.c.l.b16 %v848
    %v1729 = vunpack.c.h.b16 %v848
    %v1730 = vunpack.c.l.b16 %v849
    %v1731 = vunpack.c.h.b16 %v849
    %v1732 = vunpack.c.l.b16 %v850
    %v1733 = vunpack.c.h.b16 %v850
    %v1734 = vunpack.c.l.b16 %v851
    %v1735 = vunpack.c.h.b16 %v851
    %v1736 = vunpack.c.l.b16 %v852
    %v1737 = vunpack.c.h.b16 %v852
    %v1738 = vunpack.c.l.b16 %v853
    %v1739 = vunpack.c.h.b16 %v853
    %v1740 = vunpack.c.l.b16 %v854
    %v1741 = vunpack.c.h.b16 %v854
    %v1742 = vunpack.c.l.b16 %v855
    %v1743 = vunpack.c.h.b16 %v855
    %v1744 = vunpack.c.l.b16 %v856
    %v1745 = vunpack.c.h.b16 %v856
    %v1746 = vunpack.c.l.b16 %v857
    %v1747 = vunpack.c.h.b16 %v857
    %v1748 = vunpack.c.l.b16 %v858
    %v1749 = vunpack.c.h.b16 %v858
    %v1750 = vunpack.c.l.b16 %v859
    %v1751 = vunpack.c.h.b16 %v859
    %v1752 = vunpack.c.l.b16 %v860
    %v1753 = vunpack.c.h.b16 %v860
    %v1754 = vunpack.c.l.b16 %v861
    %v1755 = vunpack.c.h.b16 %v861
    %v1756 = vunpack.c.l.b16 %v862
    %v1757 = vunpack.c.h.b16 %v862
    %v1758 = vunpack.c.l.b16 %v863
    %v1759 = vunpack.c.h.b16 %v863
    %v1760 = vunpack.c.l.b16 %v864
    %v1761 = vunpack.c.h.b16 %v864
    %v1762 = vunpack.c.l.b16 %v865
    %v1763 = vunpack.c.h.b16 %v865
    %v1764 = vunpack.c.l.b16 %v866
    %v1765 = vunpack.c.h.b16 %v866
    %v1766 = vunpack.c.l.b16 %v867
    %v1767 = vunpack.c.h.b16 %v867
    %v1768 = vunpack.c.l.b16 %v868
    %v1769 = vunpack.c.h.b16 %v868
    %v1770 = vunpack.c.l.b16 %v869
    %v1771 = vunpack.c.h.b16 %v869
    %v1772 = vunpack.c.l.b16 %v870
    %v1773 = vunpack.c.h.b16 %v870
    %v1774 = vunpack.c.l.b16 %v871
    %v1775 = vunpack.c.h.b16 %v871
    %v1776 = vunpack.c.l.b16 %v872
    %v1777 = vunpack.c.h.b16 %v872
    %v1778 = vunpack.c.l.b16 %v873
    %v1779 = vunpack.c.h.b16 %v873
    %v1780 = vunpack.c.l.b16 %v874
    %v1781 = vunpack.c.h.b16 %v874
    %v1782 = vunpack.c.l.b16 %v875
    %v1783 = vunpack.c.h.b16 %v875
    %v1784 = vunpack.c.l.b16 %v876
    %v1785 = vunpack.c.h.b16 %v876
    %v1786 = vunpack.c.l.b16 %v877
    %v1787 = vunpack.c.h.b16 %v877
    %v1788 = vunpack.c.l.b16 %v878
    %v1789 = vunpack.c.h.b16 %v878
    %v1790 = vunpack.c.l.b16 %v879
    %v1791 = vunpack.c.h.b16 %v879
    %v1792 = vunpack.c.l.b16 %v880
    %v1793 = vunpack.c.h.b16 %v880
    %v1794 = vunpack.c.l.b16 %v881
    %v1795 = vunpack.c.h.b16 %v881
    %v1796 = vunpack.c.l.b16 %v882
    %v1797 = vunpack.c.h.b16 %v882
    %v1798 = vunpack.c.l.b16 %v883
    %v1799 = vunpack.c.h.b16 %v883
    %v1800 = vunpack.c.l.b16 %v884
    %v1801 = vunpack.c.h.b16 %v884
    %v1802 = vunpack.c.l.b16 %v885
    %v1803 = vunpack.c.h.b16 %v885
    %v1804 = vunpack.c.l.b16 %v886
    %v1805 = vunpack.c.h.b16 %v886
    %v1806 = vunpack.c.l.b16 %v887
    %v1807 = vunpack.c.h.b16 %v887
    %v1808 = vunpack.c.l.b16 %v888
    %v1809 = vunpack.c.h.b16 %v888
    %v1810 = vunpack.c.l.b16 %v889
    %v1811 = vunpack.c.h.b16 %v889
    %v1812 = vunpack.c.l.b16 %v890
    %v1813 = vunpack.c.h.b16 %v890
    %v1814 = vunpack.c.l.b16 %v891
    %v1815 = vunpack.c.h.b16 %v891
    %v1816 = vunpack.c.l.b16 %v892
    %v1817 = vunpack.c.h.b16 %v892
    %v1818 = vunpack.c.l.b16 %v893
    %v1819 = vunpack.c.h.b16 %v893
    %v1820 = vunpack.c.l.b16 %v894
    %v1821 = vunpack.c.h.b16 %v894
    %v1822 = vunpack.c.l.b16 %v895
    %v1823 = vunpack.c.h.b16 %v895
    %v1824 = vunpack.c.l.b16 %v896
    %v1825 = vunpack.c.h.b16 %v896
    %v1826 = vunpack.c.l.b16 %v897
    %v1827 = vunpack.c.h.b16 %v897
    %v1828 = vunpack.c.l.b16 %v898
    %v1829 = vunpack.c.h.b16 %v898
    %v1830 = vunpack.c.l.b16 %v899
    %v1831 = vunpack.c.h.b16 %v899
    %v1832 = vunpack.c.l.b16 %v900
    %v1833 = vunpack.c.h.b16 %v900
    %v1834 = vunpack.c.l.b16 %v901
    %v1835 = vunpack.c.h.b16 %v901
    %v1836 = vunpack.c.l.b16 %v902
    %v1837 = vunpack.c.h.b16 %v902
    %v1838 = vunpack.c.l.b16 %v903
    %v1839 = vunpack.c.h.b16 %v903
    %v1840 = vunpack.c.l.b16 %v904
    %v1841 = vunpack.c.h.b16 %v904
    %v1842 = vunpack.c.l.b16 %v905
    %v1843 = vunpack.c.h.b16 %v905
    %v1844 = vunpack.c.l.b16 %v906
    %v1845 = vunpack.c.h.b16 %v906
    %v1846 = vunpack.c.l.b16 %v907
    %v1847 = vunpack.c.h.b16 %v907
    %v1848 = vunpack.c.l.b16 %v908
    %v1849 = vunpack.c.h.b16 %v908
    %v1850 = vunpack.c.l.b16 %v909
    %v1851 = vunpack.c.h.b16 %v909
    %v1852 = vunpack.c.l.b16 %v910
    %v1853 = vunpack.c.h.b16 %v910
    %v1854 = vunpack.c.l.b16 %v911
    %v1855 = vunpack.c.h.b16 %v911
    %v1856 = vunpack.c.l.b16 %v912
    %v1857 = vunpack.c.h.b16 %v912
    %v1858 = vunpack.c.l.b16 %v913
    %v1859 = vunpack.c.h.b16 %v913
    %v1860 = vunpack.c.l.b16 %v914
    %v1861 = vunpack.c.h.b16 %v914
    %v1862 = vunpack.c.l.b16 %v915
    %v1863 = vunpack.c.h.b16 %v915
    %v1864 = vunpack.c.l.b16 %v916
    %v1865 = vunpack.c.h.b16 %v916
    %v1866 = vunpack.c.l.b16 %v917
    %v1867 = vunpack.c.h.b16 %v917
    %v1868 = vunpack.c.l.b16 %v918
    %v1869 = vunpack.c.h.b16 %v918
    %v1870 = vunpack.c.l.b16 %v919
    %v1871 = vunpack.c.h.b16 %v919
    %v1872 = vunpack.c.l.b16 %v920
    %v1873 = vunpack.c.h.b16 %v920
    %v1874 = vunpack.c.l.b16 %v921
    %v1875 = vunpack.c.h.b16 %v921
    %v1876 = vunpack.c.l.b16 %v922
    %v1877 = vunpack.c.h.b16 %v922
    %v1878 = vunpack.c.l.b16 %v923
    %v1879 = vunpack.c.h.b16 %v923
    %v1880 = vunpack.c.l.b16 %v924
    %v1881 = vunpack.c.h.b16 %v924
    %v1882 = vunpack.c.l.b16 %v925
    %v1883 = vunpack.c.h.b16 %v925
    %v1884 = vunpack.c.l.b16 %v926
    %v1885 = vunpack.c.h.b16 %v926
    %v1886 = vunpack.c.l.b16 %v927
    %v1887 = vunpack.c.h.b16 %v927
    %v1888 = vunpack.c.l.b16 %v928
    %v1889 = vunpack.c.h.b16 %v928
    %v1890 = vunpack.c.l.b16 %v929
    %v1891 = vunpack.c.h.b16 %v929
    %v1892 = vunpack.c.l.b16 %v930
    %v1893 = vunpack.c.h.b16 %v930
    %v1894 = vunpack.c.l.b16 %v931
    %v1895 = vunpack.c.h.b16 %v931
    %v1896 = vunpack.c.l.b16 %v932
    %v1897 = vunpack.c.h.b16 %v932
    %v1898 = vunpack.c.l.b16 %v933
    %v1899 = vunpack.c.h.b16 %v933
    %v1900 = vunpack.c.l.b16 %v934
    %v1901 = vunpack.c.h.b16 %v934
    %v1902 = vunpack.c.l.b16 %v935
    %v1903 = vunpack.c.h.b16 %v935
    %v1904 = vunpack.c.l.b16 %v936
    %v1905 = vunpack.c.h.b16 %v936
    %v1906 = vunpack.c.l.b16 %v937
    %v1907 = vunpack.c.h.b16 %v937
    %v1908 = vunpack.c.l.b16 %v938
    %v1909 = vunpack.c.h.b16 %v938
    %v1910 = vunpack.c.l.b16 %v939
    %v1911 = vunpack.c.h.b16 %v939
    %v1912 = vunpack.c.l.b16 %v940
    %v1913 = vunpack.c.h.b16 %v940
    %v1914 = vunpack.c.l.b16 %v941
    %v1915 = vunpack.c.h.b16 %v941
    %v1916 = vunpack.c.l.b16 %v942
    %v1917 = vunpack.c.h.b16 %v942
    %v1918 = vunpack.c.l.b16 %v943
    %v1919 = vunpack.c.h.b16 %v943
    %v1920 = vunpack.c.l.b16 %v944
    %v1921 = vunpack.c.h.b16 %v944
    %v1922 = vunpack.c.l.b16 %v945
    %v1923 = vunpack.c.h.b16 %v945
    %v1924 = vunpack.c.l.b16 %v946
    %v1925 = vunpack.c.h.b16 %v946
    %v1926 = vunpack.c.l.b16 %v947
    %v1927 = vunpack.c.h.b16 %v947
    %v1928 = vunpack.c.l.b16 %v948
    %v1929 = vunpack.c.h.b16 %v948
    %v1930 = vunpack.c.l.b16 %v949
    %v1931 = vunpack.c.h.b16 %v949
    %v1932 = vunpack.c.l.b16 %v950
    %v1933 = vunpack.c.h.b16 %v950
    %v1934 = vunpack.c.l.b16 %v951
    %v1935 = vunpack.c.h.b16 %v951
    %v1936 = vunpack.c.l.b16 %v952
    %v1937 = vunpack.c.h.b16 %v952
    %v1938 = vunpack.c.l.b16 %v953
    %v1939 = vunpack.c.h.b16 %v953
    %v1940 = vunpack.c.l.b16 %v954
    %v1941 = vunpack.c.h.b16 %v954
    %v1942 = vunpack.c.l.b16 %v955
    %v1943 = vunpack.c.h.b16 %v955
    %v1944 = vunpack.c.l.b16 %v956
    %v1945 = vunpack.c.h.b16 %v956
    %v1946 = vunpack.c.l.b16 %v957
    %v1947 = vunpack.c.h.b16 %v957
    %v1948 = vunpack.c.l.b16 %v958
    %v1949 = vunpack.c.h.b16 %v958
    %v1950 = vunpack.c.l.b16 %v959
    %v1951 = vunpack.c.h.b16 %v959
    %v1952 = vunpack.c.l.b16 %v960
    %v1953 = vunpack.c.h.b16 %v960
    %v1954 = vunpack.c.l.b16 %v961
    %v1955 = vunpack.c.h.b16 %v961
    %v1956 = vunpack.c.l.b16 %v962
    %v1957 = vunpack.c.h.b16 %v962
    %v1958 = vunpack.c.l.b16 %v963
    %v1959 = vunpack.c.h.b16 %v963
    %v1960 = vunpack.c.l.b16 %v964
    %v1961 = vunpack.c.h.b16 %v964
    %v1962 = vunpack.c.l.b16 %v965
    %v1963 = vunpack.c.h.b16 %v965
    %v1964 = vunpack.c.l.b16 %v966
    %v1965 = vunpack.c.h.b16 %v966
    %v1966 = vunpack.c.l.b16 %v967
    %v1967 = vunpack.c.h.b16 %v967
    %v1968 = vunpack.c.l.b16 %v968
    %v1969 = vunpack.c.h.b16 %v968
    %v1970 = vunpack.c.l.b16 %v969
    %v1971 = vunpack.c.h.b16 %v969
    %v1972 = vunpack.c.l.b16 %v970
    %v1973 = vunpack.c.h.b16 %v970
    %v1974 = vunpack.c.l.b16 %v971
    %v1975 = vunpack.c.h.b16 %v971
    %v1976 = vunpack.c.l.b16 %v972
    %v1977 = vunpack.c.h.b16 %v972
    %v1978 = vunpack.c.l.b16 %v973
    %v1979 = vunpack.c.h.b16 %v973
    %v1980 = vunpack.c.l.b16 %v974
    %v1981 = vunpack.c.h.b16 %v974
    %v1982 = vunpack.c.l.b16 %v975
    %v1983 = vunpack.c.h.b16 %v975
    %v1984 = vunpack.c.l.b16 %v976
    %v1985 = vunpack.c.h.b16 %v976
    %v1986 = vunpack.c.l.b16 %v977
    %v1987 = vunpack.c.h.b16 %v977
    %v1988 = vunpack.c.l.b16 %v978
    %v1989 = vunpack.c.h.b16 %v978
    %v1990 = vunpack.c.l.b16 %v979
    %v1991 = vunpack.c.h.b16 %v979
    %v1992 = vunpack.c.l.b16 %v980
    %v1993 = vunpack.c.h.b16 %v980
    %v1994 = vunpack.c.l.b16 %v981
    %v1995 = vunpack.c.h.b16 %v981
    %v1996 = vunpack.c.l.b16 %v982
    %v1997 = vunpack.c.h.b16 %v982
    %v1998 = vunpack.c.l.b16 %v983
    %v1999 = vunpack.c.h.b16 %v983
    %v2000 = vunpack.c.l.b16 %v984
    %v2001 = vunpack.c.h.b16 %v984
    %v2002 = vunpack.c.l.b16 %v985
    %v2003 = vunpack.c.h.b16 %v985
    %v2004 = vunpack.c.l.b16 %v986
    %v2005 = vunpack.c.h.b16 %v986
    %v2006 = vunpack.c.l.b16 %v987
    %v2007 = vunpack.c.h.b16 %v987
    %v2008 = vunpack.c.l.b16 %v988
    %v2009 = vunpack.c.h.b16 %v988
    %v2010 = vunpack.c.l.b16 %v989
    %v2011 = vunpack.c.h.b16 %v989
    %v2012 = vunpack.c.l.b16 %v990
    %v2013 = vunpack.c.h.b16 %v990
    %v2014 = vunpack.c.l.b16 %v991
    %v2015 = vunpack.c.h.b16 %v991
    %v2016 = vunpack.c.l.b16 %v992
    %v2017 = vunpack.c.h.b16 %v992
    %v2018 = vunpack.c.l.b16 %v993
    %v2019 = vunpack.c.h.b16 %v993
    %v2020 = vunpack.c.l.b16 %v994
    %v2021 = vunpack.c.h.b16 %v994
    %v2022 = vunpack.c.l.b16 %v995
    %v2023 = vunpack.c.h.b16 %v995
    %v2024 = vunpack.c.l.b16 %v996
    %v2025 = vunpack.c.h.b16 %v996
    %v2026 = vunpack.c.l.b16 %v997
    %v2027 = vunpack.c.h.b16 %v997
    %v2028 = vunpack.c.l.b16 %v998
    %v2029 = vunpack.c.h.b16 %v998
    %v2030 = vunpack.c.l.b16 %v999
    %v2031 = vunpack.c.h.b16 %v999
    %v2032 = vunpack.c.l.b16 %v1000
    %v2033 = vunpack.c.h.b16 %v1000
    %v2034 = vunpack.c.l.b16 %v1001
    %v2035 = vunpack.c.h.b16 %v1001
    %v2036 = vunpack.c.l.b16 %v1002
    %v2037 = vunpack.c.h.b16 %v1002
    %v2038 = vunpack.c.l.b16 %v1003
    %v2039 = vunpack.c.h.b16 %v1003
    %v2040 = vunpack.c.l.b16 %v1004
    %v2041 = vunpack.c.h.b16 %v1004
    %v2042 = vunpack.c.l.b16 %v1005
    %v2043 = vunpack.c.h.b16 %v1005
    %v2044 = vunpack.c.l.b16 %v1006
    %v2045 = vunpack.c.h.b16 %v1006
    %v2046 = vunpack.c.l.b16 %v1007
    %v2047 = vunpack.c.h.b16 %v1007
    %v2048 = vunpack.c.l.b16 %v1008
    %v2049 = vunpack.c.h.b16 %v1008
    %v2050 = vunpack.c.l.b16 %v1009
    %v2051 = vunpack.c.h.b16 %v1009
    %v2052 = vunpack.c.l.b16 %v1010
    %v2053 = vunpack.c.h.b16 %v1010
    %v2054 = vunpack.c.l.b16 %v1011
    %v2055 = vunpack.c.h.b16 %v1011
    %v2056 = vunpack.c.l.b16 %v1012
    %v2057 = vunpack.c.h.b16 %v1012
    %v2058 = vunpack.c.l.b16 %v1013
    %v2059 = vunpack.c.h.b16 %v1013
    %v2060 = vunpack.c.l.b16 %v1014
    %v2061 = vunpack.c.h.b16 %v1014
    %v2062 = vunpack.c.l.b16 %v1015
    %v2063 = vunpack.c.h.b16 %v1015
    %v2064 = vunpack.c.l.b16 %v1016
    %v2065 = vunpack.c.h.b16 %v1016
    %v2066 = vunpack.c.l.b16 %v1017
    %v2067 = vunpack.c.h.b16 %v1017
    %v2068 = vunpack.c.l.b16 %v1018
    %v2069 = vunpack.c.h.b16 %v1018
    %v2070 = vunpack.c.l.b16 %v1019
    %v2071 = vunpack.c.h.b16 %v1019
    %v2072 = vunpack.c.l.b16 %v1020
    %v2073 = vunpack.c.h.b16 %v1020
    %v2074 = vunpack.c.l.b16 %v1021
    %v2075 = vunpack.c.h.b16 %v1021
    %v2076 = vunpack.c.l.b16 %v1022
    %v2077 = vunpack.c.h.b16 %v1022
    %v2078 = vunpack.c.l.b16 %v1023
    %v2079 = vunpack.c.h.b16 %v1023
    %v2080 = vunpack.c.l.b16 %v1024
    %v2081 = vunpack.c.h.b16 %v1024
    %v2082 = vunpack.c.l.b16 %v1025
    %v2083 = vunpack.c.h.b16 %v1025
    %v2084 = vunpack.c.l.b16 %v1026
    %v2085 = vunpack.c.h.b16 %v1026
    %v2086 = vunpack.c.l.b16 %v1027
    %v2087 = vunpack.c.h.b16 %v1027
    %v2088 = vunpack.c.l.b16 %v1028
    %v2089 = vunpack.c.h.b16 %v1028
    %v2090 = vunpack.c.l.b16 %v1029
    %v2091 = vunpack.c.h.b16 %v1029
    %v2092 = vunpack.c.l.b16 %v1030
    %v2093 = vunpack.c.h.b16 %v1030
    %v2094 = vunpack.c.l.b16 %v1031
    %v2095 = vunpack.c.h.b16 %v1031
    %v2096 = vunpack.c.l.b16 %v1032
    %v2097 = vunpack.c.h.b16 %v1032
    %v2098 = vunpack.c.l.b16 %v1033
    %v2099 = vunpack.c.h.b16 %v1033
    %v2100 = vunpack.c.l.b16 %v1034
    %v2101 = vunpack.c.h.b16 %v1034
    %v2102 = vunpack.c.l.b16 %v1035
    %v2103 = vunpack.c.h.b16 %v1035
    %v2104 = vunpack.c.l.b16 %v1036
    %v2105 = vunpack.c.h.b16 %v1036
    %v2106 = vunpack.c.l.b16 %v1037
    %v2107 = vunpack.c.h.b16 %v1037
    %v2108 = vunpack.c.l.b16 %v1038
    %v2109 = vunpack.c.h.b16 %v1038
    %v2110 = vunpack.c.l.b16 %v1039
    %v2111 = vunpack.c.h.b16 %v1039
    %v2112 = vunpack.c.l.b16 %v1040
    %v2113 = vunpack.c.h.b16 %v1040
    %v2114 = vunpack.c.l.b16 %v1041
    %v2115 = vunpack.c.h.b16 %v1041
    %v2116 = vunpack.c.l.b16 %v1042
    %v2117 = vunpack.c.h.b16 %v1042
    %v2118 = vunpack.c.l.b16 %v1043
    %v2119 = vunpack.c.h.b16 %v1043
    %v2120 = vunpack.c.l.b16 %v1044
    %v2121 = vunpack.c.h.b16 %v1044
    %v2122 = vunpack.c.l.b16 %v1045
    %v2123 = vunpack.c.h.b16 %v1045
    %v2124 = vunpack.c.l.b16 %v1046
    %v2125 = vunpack.c.h.b16 %v1046
    %v2126 = vunpack.c.l.b16 %v1047
    %v2127 = vunpack.c.h.b16 %v1047
    %v2128 = vunpack.c.l.b16 %v1048
    %v2129 = vunpack.c.h.b16 %v1048
    %v2130 = vunpack.c.l.b16 %v1049
    %v2131 = vunpack.c.h.b16 %v1049
    %v2132 = vunpack.c.l.b16 %v1050
    %v2133 = vunpack.c.h.b16 %v1050
    %v2134 = vunpack.c.l.b16 %v1051
    %v2135 = vunpack.c.h.b16 %v1051
    %v2136 = vunpack.c.l.b16 %v1052
    %v2137 = vunpack.c.h.b16 %v1052
    %v2138 = vunpack.c.l.b16 %v1053
    %v2139 = vunpack.c.h.b16 %v1053
    %v2140 = vunpack.c.l.b16 %v1054
    %v2141 = vunpack.c.h.b16 %v1054
    %v2142 = vunpack.c.l.b16 %v1055
    %v2143 = vunpack.c.h.b16 %v1055
    %v2144 = vunpack.c.l.b16 %v1056
    %v2145 = vunpack.c.h.b16 %v1056
    %v2146 = vunpack.c.l.b16 %v1057
    %v2147 = vunpack.c.h.b16 %v1057
    %v2148 = vunpack.c.l.b16 %v1058
    %v2149 = vunpack.c.h.b16 %v1058
    %v2150 = vunpack.c.l.b16 %v1059
    %v2151 = vunpack.c.h.b16 %v1059
    %v2152 = vunpack.c.l.b16 %v1060
    %v2153 = vunpack.c.h.b16 %v1060
    %v2154 = vunpack.c.l.b16 %v1061
    %v2155 = vunpack.c.h.b16 %v1061
    %v2156 = vunpack.c.l.b16 %v1062
    %v2157 = vunpack.c.h.b16 %v1062
    %v2158 = vunpack.c.l.b16 %v1063
    %v2159 = vunpack.c.h.b16 %v1063
    %v2160 = vunpack.c.l.b16 %v1064
    %v2161 = vunpack.c.h.b16 %v1064
    %v2162 = vunpack.c.l.b16 %v1065
    %v2163 = vunpack.c.h.b16 %v1065
    %v2164 = vunpack.c.l.b16 %v1066
    %v2165 = vunpack.c.h.b16 %v1066
    %v2166 = vunpack.c.l.b16 %v1067
    %v2167 = vunpack.c.h.b16 %v1067
    %v2168 = vunpack.c.l.b16 %v1068
    %v2169 = vunpack.c.h.b16 %v1068
    %v2170 = vunpack.c.l.b16 %v1069
    %v2171 = vunpack.c.h.b16 %v1069
    %v2172 = vunpack.c.l.b16 %v1070
    %v2173 = vunpack.c.h.b16 %v1070
    %v2174 = vunpack.c.l.b16 %v1071
    %v2175 = vunpack.c.h.b16 %v1071
    %v2176 = vunpack.c.l.b16 %v1072
    %v2177 = vunpack.c.h.b16 %v1072
    %v2178 = vunpack.c.l.b16 %v1073
    %v2179 = vunpack.c.h.b16 %v1073
    %v2180 = vunpack.c.l.b16 %v1074
    %v2181 = vunpack.c.h.b16 %v1074
    %v2182 = vunpack.c.l.b16 %v1075
    %v2183 = vunpack.c.h.b16 %v1075
    %v2184 = vunpack.c.l.b16 %v1076
    %v2185 = vunpack.c.h.b16 %v1076
    %v2186 = vunpack.c.l.b16 %v1077
    %v2187 = vunpack.c.h.b16 %v1077
    %v2188 = vunpack.c.l.b16 %v1078
    %v2189 = vunpack.c.h.b16 %v1078
    %v2190 = vunpack.c.l.b16 %v1079
    %v2191 = vunpack.c.h.b16 %v1079
    %v2192 = vunpack.c.l.b16 %v1080
    %v2193 = vunpack.c.h.b16 %v1080
    %v2194 = vunpack.c.l.b16 %v1081
    %v2195 = vunpack.c.h.b16 %v1081
    %v2196 = vunpack.c.l.b16 %v1082
    %v2197 = vunpack.c.h.b16 %v1082
    %v2198 = vunpack.c.l.b16 %v1083
    %v2199 = vunpack.c.h.b16 %v1083
    %v2200 = vunpack.c.l.b16 %v1084
    %v2201 = vunpack.c.h.b16 %v1084
    %v2202 = vunpack.c.l.b16 %v1085
    %v2203 = vunpack.c.h.b16 %v1085
    %v2204 = vunpack.c.l.b16 %v1086
    %v2205 = vunpack.c.h.b16 %v1086
    %v2206 = vunpack.c.l.b16 %v1087
    %v2207 = vunpack.c.h.b16 %v1087
    %v2208 = vunpack.c.l.b16 %v1088
    %v2209 = vunpack.c.h.b16 %v1088
    %v2210 = vunpack.c.l.b16 %v1089
    %v2211 = vunpack.c.h.b16 %v1089
    %v2212 = vunpack.c.l.b16 %v1090
    %v2213 = vunpack.c.h.b16 %v1090
    %v2214 = vunpack.c.l.b16 %v1091
    %v2215 = vunpack.c.h.b16 %v1091
    %v2216 = vunpack.c.l.b16 %v1092
    %v2217 = vunpack.c.h.b16 %v1092
    %v2218 = vunpack.c.l.b16 %v1093
    %v2219 = vunpack.c.h.b16 %v1093
    %v2220 = vunpack.c.l.b16 %v1094
    %v2221 = vunpack.c.h.b16 %v1094
    %v2222 = vunpack.c.l.b16 %v1095
    %v2223 = vunpack.c.h.b16 %v1095
    %v2224 = vunpack.c.l.b16 %v1096
    %v2225 = vunpack.c.h.b16 %v1096
    %v2226 = vunpack.c.l.b16 %v1097
    %v2227 = vunpack.c.h.b16 %v1097
    %v2228 = vunpack.c.l.b16 %v1098
    %v2229 = vunpack.c.h.b16 %v1098
    %v2230 = vunpack.c.l.b16 %v1099
    %v2231 = vunpack.c.h.b16 %v1099
    %v2232 = vunpack.c.l.b16 %v1100
    %v2233 = vunpack.c.h.b16 %v1100
    %v2234 = vunpack.c.l.b16 %v1101
    %v2235 = vunpack.c.h.b16 %v1101
    %v2236 = vunpack.c.l.b16 %v1102
    %v2237 = vunpack.c.h.b16 %v1102
    %v2238 = vunpack.c.l.b16 %v1103
    %v2239 = vunpack.c.h.b16 %v1103
    %v2240 = vunpack.c.l.b16 %v1104
    %v2241 = vunpack.c.h.b16 %v1104
    %v2242 = vunpack.c.l.b16 %v1105
    %v2243 = vunpack.c.h.b16 %v1105
    %v2244 = vunpack.c.l.b16 %v1106
    %v2245 = vunpack.c.h.b16 %v1106
    %v2246 = vunpack.c.l.b16 %v1107
    %v2247 = vunpack.c.h.b16 %v1107
    %v2248 = vunpack.c.l.b16 %v1108
    %v2249 = vunpack.c.h.b16 %v1108
    %v2250 = vunpack.c.l.b16 %v1109
    %v2251 = vunpack.c.h.b16 %v1109
    %v2252 = vunpack.c.l.b16 %v1110
    %v2253 = vunpack.c.h.b16 %v1110
    %v2254 = vunpack.c.l.b16 %v1111
    %v2255 = vunpack.c.h.b16 %v1111
    %v2256 = vunpack.c.l.b16 %v1112
    %v2257 = vunpack.c.h.b16 %v1112
    %v2258 = vunpack.c.l.b16 %v1113
    %v2259 = vunpack.c.h.b16 %v1113
    %v2260 = vunpack.c.l.b16 %v1114
    %v2261 = vunpack.c.h.b16 %v1114
    %v2262 = vunpack.c.l.b16 %v1115
    %v2263 = vunpack.c.h.b16 %v1115
    %v2264 = vunpack.c.l.b16 %v1116
    %v2265 = vunpack.c.h.b16 %v1116
    %v2266 = vunpack.c.l.b16 %v1117
    %v2267 = vunpack.c.h.b16 %v1117
    %v2268 = vunpack.c.l.b16 %v1118
    %v2269 = vunpack.c.h.b16 %v1118
    %v2270 = vunpack.c.l.b16 %v1119
    %v2271 = vunpack.c.h.b16 %v1119
    %v2272 = vunpack.c.l.b16 %v1120
    %v2273 = vunpack.c.h.b16 %v1120
    %v2274 = vunpack.c.l.b16 %v1121
    %v2275 = vunpack.c.h.b16 %v1121
    %v2276 = vunpack.c.l.b16 %v1122
    %v2277 = vunpack.c.h.b16 %v1122
    %v2278 = vunpack.c.l.b16 %v1123
    %v2279 = vunpack.c.h.b16 %v1123
    %v2280 = vunpack.c.l.b16 %v1124
    %v2281 = vunpack.c.h.b16 %v1124
    %v2282 = vunpack.c.l.b16 %v1125
    %v2283 = vunpack.c.h.b16 %v1125
    %v2284 = vunpack.c.l.b16 %v1126
    %v2285 = vunpack.c.h.b16 %v1126
    %v2286 = vunpack.c.l.b16 %v1127
    %v2287 = vunpack.c.h.b16 %v1127
    %v2288 = vunpack.c.l.b16 %v1128
    %v2289 = vunpack.c.h.b16 %v1128
    %v2290 = vunpack.c.l.b16 %v1129
    %v2291 = vunpack.c.h.b16 %v1129
    %v2292 = vunpack.c.l.b16 %v1130
    %v2293 = vunpack.c.h.b16 %v1130
    %v2294 = vunpack.c.l.b16 %v1131
    %v2295 = vunpack.c.h.b16 %v1131
    %v2296 = vpack.c.b16 %v1530, %v1528
    %v2297 = vpack.c.b16 %v1531, %v1529
    %v2298 = vpack.c.b16 %v1534, %v1532
    %v2299 = vpack.c.b16 %v1535, %v1533
    %v2300 = vpack.c.b16 %v1538, %v1536
    %v2301 = vpack.c.b16 %v1539, %v1537
    %v2302 = vpack.c.b16 %v1542, %v1540
    %v2303 = vpack.c.b16 %v1543, %v1541
    %v2304 = vpack.c.b16 %v1546, %v1544
    %v2305 = vpack.c.b16 %v1547, %v1545
    %v2306 = vpack.c.b16 %v1550, %v1548
    %v2307 = vpack.c.b16 %v1551, %v1549
    %v2308 = vpack.c.b16 %v1554, %v1552
    %v2309 = vpack.c.b16 %v1555, %v1553
    %v2310 = vpack.c.b16 %v1558, %v1556
    %v2311 = vpack.c.b16 %v1559, %v1557
    %v2312 = vpack.c.b16 %v1562, %v1560
    %v2313 = vpack.c.b16 %v1563, %v1561
    %v2314 = vpack.c.b16 %v1566, %v1564
    %v2315 = vpack.c.b16 %v1567, %v1565
    %v2316 = vpack.c.b16 %v1570, %v1568
    %v2317 = vpack.c.b16 %v1571, %v1569
    %v2318 = vpack.c.b16 %v1574, %v1572
    %v2319 = vpack.c.b16 %v1575, %v1573
    %v2320 = vpack.c.b16 %v1578, %v1576
    %v2321 = vpack.c.b16 %v1579, %v1577
    %v2322 = vpack.c.b16 %v1582, %v1580
    %v2323 = vpack.c.b16 %v1583, %v1581
    %v2324 = vpack.c.b16 %v1586, %v1584
    %v2325 = vpack.c.b16 %v1587, %v1585
    %v2326 = vpack.c.b16 %v1590, %v1588
    %v2327 = vpack.c.b16 %v1591, %v1589
    %v2328 = vpack.c.b16 %v1594, %v1592
    %v2329 = vpack.c.b16 %v1595, %v1593
    %v2330 = vpack.c.b16 %v1598, %v1596
    %v2331 = vpack.c.b16 %v1599, %v1597
    %v2332 = vpack.c.b16 %v1602, %v1600
    %v2333 = vpack.c.b16 %v1603, %v1601
    %v2334 = vpack.c.b16 %v1606, %v1604
    %v2335 = vpack.c.b16 %v1607, %v1605
    %v2336 = vpack.c.b16 %v1610, %v1608
    %v2337 = vpack.c.b16 %v1611, %v1609
    %v2338 = vpack.c.b16 %v1614, %v1612
    %v2339 = vpack.c.b16 %v1615, %v1613
    %v2340 = vpack.c.b16 %v1618, %v1616
    %v2341 = vpack.c.b16 %v1619, %v1617
    %v2342 = vpack.c.b16 %v1622, %v1620
    %v2343 = vpack.c.b16 %v1623, %v1621
    %v2344 = vpack.c.b16 %v1626, %v1624
    %v2345 = vpack.c.b16 %v1627, %v1625
    %v2346 = vpack.c.b16 %v1630, %v1628
    %v2347 = vpack.c.b16 %v1631, %v1629
    %v2348 = vpack.c.b16 %v1634, %v1632
    %v2349 = vpack.c.b16 %v1635, %v1633
    %v2350 = vpack.c.b16 %v1638, %v1636
    %v2351 = vpack.c.b16 %v1639, %v1637
    %v2352 = vpack.c.b16 %v1642, %v1640
    %v2353 = vpack.c.b16 %v1643, %v1641
    %v2354 = vpack.c.b16 %v1646, %v1644
    %v2355 = vpack.c.b16 %v1647, %v1645
    %v2356 = vpack.c.b16 %v1650, %v1648
    %v2357 = vpack.c.b16 %v1651, %v1649
    %v2358 = vpack.c.b16 %v1654, %v1652
    %v2359 = vpack.c.b16 %v1655, %v1653
    %v2360 = vpack.c.b16 %v1658, %v1656
    %v2361 = vpack.c.b16 %v1659, %v1657
    %v2362 = vpack.c.b16 %v1662, %v1660
    %v2363 = vpack.c.b16 %v1663, %v1661
    %v2364 = vpack.c.b16 %v1666, %v1664
    %v2365 = vpack.c.b16 %v1667, %v1665
    %v2366 = vpack.c.b16 %v1670, %v1668
    %v2367 = vpack.c.b16 %v1671, %v1669
    %v2368 = vpack.c.b16 %v1674, %v1672
    %v2369 = vpack.c.b16 %v1675, %v1673
    %v2370 = vpack.c.b16 %v1678, %v1676
    %v2371 = vpack.c.b16 %v1679, %v1677
    %v2372 = vpack.c.b16 %v1682, %v1680
    %v2373 = vpack.c.b16 %v1683, %v1681
    %v2374 = vpack.c.b16 %v1686, %v1684
    %v2375 = vpack.c.b16 %v1687, %v1685
    %v2376 = vpack.c.b16 %v1690, %v1688
    %v2377 = vpack.c.b16 %v1691, %v1689
    %v2378 = vpack.c.b16 %v1694, %v1692
    %v2379 = vpack.c.b16 %v1695, %v1693
    %v2380 = vpack.c.b16 %v1698, %v1696
    %v2381 = vpack.c.b16 %v1699, %v1697
    %v2382 = vpack.c.b16 %v1702, %v1700
    %v2383 = vpack.c.b16 %v1703, %v1701
    %v2384 = vpack.c.b16 %v1706, %v1704
    %v2385 = vpack.c.b16 %v1707, %v1705
    %v2386 = vpack.c.b16 %v1710, %v1708
    %v2387 = vpack.c.b16 %v1711, %v1709
    %v2388 = vpack.c.b16 %v1714, %v1712
    %v2389 = vpack.c.b16 %v1715, %v1713
    %v2390 = vpack.c.b16 %v1718, %v1716
    %v2391 = vpack.c.b16 %v1719, %v1717
    %v2392 = vpack.c.b16 %v1722, %v1720
    %v2393 = vpack.c.b16 %v1723, %v1721
    %v2394 = vpack.c.b16 %v1726, %v1724
    %v2395 = vpack.c.b16 %v1727, %v1725
    %v2396 = vpack.c.b16 %v1730, %v1728
    %v2397 = vpack.c.b16 %v1731, %v1729
    %v2398 = vpack.c.b16 %v1734, %v1732
    %v2399 = vpack.c.b16 %v1735, %v1733
    %v2400 = vpack.c.b16 %v1738, %v1736
    %v2401 = vpack.c.b16 %v1739, %v1737
    %v2402 = vpack.c.b16 %v1742, %v1740
    %v2403 = vpack.c.b16 %v1743, %v1741
    %v2404 = vpack.c.b16 %v1746, %v1744
    %v2405 = vpack.c.b16 %v1747, %v1745
    %v2406 = vpack.c.b16 %v1750, %v1748
    %v2407 = vpack.c.b16 %v1751, %v1749
    %v2408 = vpack.c.b16 %v1754, %v1752
    %v2409 = vpack.c.b16 %v1755, %v1753
    %v2410 = vpack.c.b16 %v1758, %v1756
    %v2411 = vpack.c.b16 %v1759, %v1757
    %v2412 = vpack.c.b16 %v1762, %v1760
    %v2413 = vpack.c.b16 %v1763, %v1761
    %v2414 = vpack.c.b16 %v1766, %v1764
    %v2415 = vpack.c.b16 %v1767, %v1765
    %v2416 = vpack.c.b16 %v1770, %v1768
    %v2417 = vpack.c.b16 %v1771, %v1769
    %v2418 = vpack.c.b16 %v1774, %v1772
    %v2419 = vpack.c.b16 %v1775, %v1773
    %v2420 = vpack.c.b16 %v1778, %v1776
    %v2421 = vpack.c.b16 %v1779, %v1777
    %v2422 = vpack.c.b16 %v1782, %v1780
    %v2423 = vpack.c.b16 %v1783, %v1781
    %v2424 = vpack.c.b16 %v1786, %v1784
    %v2425 = vpack.c.b16 %v1787, %v1785
    %v2426 = vpack.c.b16 %v1790, %v1788
    %v2427 = vpack.c.b16 %v1791, %v1789
    %v2428 = vpack.c.b16 %v1794, %v1792
    %v2429 = vpack.c.b16 %v1795, %v1793
    %v2430 = vpack.c.b16 %v1798, %v1796
    %v2431 = vpack.c.b16 %v1799, %v1797
    %v2432 = vpack.c.b16 %v1802, %v1800
    %v2433 = vpack.c.b16 %v1803, %v1801
    %v2434 = vpack.c.b16 %v1806, %v1804
    %v2435 = vpack.c.b16 %v1807, %v1805
    %v2436 = vpack.c.b16 %v1810, %v1808
    %v2437 = vpack.c.b16 %v1811, %v1809
    %v2438 = vpack.c.b16 %v1814, %v1812
    %v2439 = vpack.c.b16 %v1815, %v1813
    %v2440 = vpack.c.b16 %v1818, %v1816
    %v2441 = vpack.c.b16 %v1819, %v1817
    %v2442 = vpack.c.b16 %v1822, %v1820
    %v2443 = vpack.c.b16 %v1823, %v1821
    %v2444 = vpack.c.b16 %v1826, %v1824
    %v2445 = vpack.c.b16 %v1827, %v1825
    %v2446 = vpack.c.b16 %v1830, %v1828
    %v2447 = vpack.c.b16 %v1831, %v1829
    %v2448 = vpack.c.b16 %v1834, %v1832
    %v2449 = vpack.c.b16 %v1835, %v1833
    %v2450 = vpack.c.b16 %v1838, %v1836
    %v2451 = vpack.c.b16 %v1839, %v1837
    %v2452 = vpack.c.b16 %v1842, %v1840
    %v2453 = vpack.c.b16 %v1843, %v1841
    %v2454 = vpack.c.b16 %v1846, %v1844
    %v2455 = vpack.c.b16 %v1847, %v1845
    %v2456 = vpack.c.b16 %v1850, %v1848
    %v2457 = vpack.c.b16 %v1851, %v1849
    %v2458 = vpack.c.b16 %v1854, %v1852
    %v2459 = vpack.c.b16 %v1855, %v1853
    %v2460 = vpack.c.b16 %v1858, %v1856
    %v2461 = vpack.c.b16 %v1859, %v1857
    %v2462 = vpack.c.b16 %v1862, %v1860
    %v2463 = vpack.c.b16 %v1863, %v1861
    %v2464 = vpack.c.b16 %v1866, %v1864
    %v2465 = vpack.c.b16 %v1867, %v1865
    %v2466 = vpack.c.b16 %v1870, %v1868
    %v2467 = vpack.c.b16 %v1871, %v1869
    %v2468 = vpack.c.b16 %v1874, %v1872
    %v2469 = vpack.c.b16 %v1875, %v1873
    %v2470 = vpack.c.b16 %v1878, %v1876
    %v2471 = vpack.c.b16 %v1879, %v1877
    %v2472 = vpack.c.b16 %v1882, %v1880
    %v2473 = vpack.c.b16 %v1883, %v1881
    %v2474 = vpack.c.b16 %v1886, %v1884
    %v2475 = vpack.c.b16 %v1887, %v1885
    %v2476 = vpack.c.b16 %v1890, %v1888
    %v2477 = vpack.c.b16 %v1891, %v1889
    %v2478 = vpack.c.b16 %v1894, %v1892
    %v2479 = vpack.c.b16 %v1895, %v1893
    %v2480 = vpack.c.b16 %v1898, %v1896
    %v2481 = vpack.c.b16 %v1899, %v1897
    %v2482 = vpack.c.b16 %v1902, %v1900
    %v2483 = vpack.c.b16 %v1903, %v1901
    %v2484 = vpack.c.b16 %v1906, %v1904
    %v2485 = vpack.c.b16 %v1907, %v1905
    %v2486 = vpack.c.b16 %v1910, %v1908
    %v2487 = vpack.c.b16 %v1911, %v1909
    %v2488 = vpack.c.b16 %v1914, %v1912
    %v2489 = vpack.c.b16 %v1915, %v1913
    %v2490 = vpack.c.b16 %v1918, %v1916
    %v2491 = vpack.c.b16 %v1919, %v1917
    %v2492 = vpack.c.b16 %v1922, %v1920
    %v2493 = vpack.c.b16 %v1923, %v1921
    %v2494 = vpack.c.b16 %v1926, %v1924
    %v2495 = vpack.c.b16 %v1927, %v1925
    %v2496 = vpack.c.b16 %v1930, %v1928
    %v2497 = vpack.c.b16 %v1931, %v1929
    %v2498 = vpack.c.b16 %v1934, %v1932
    %v2499 = vpack.c.b16 %v1935, %v1933
    %v2500 = vpack.c.b16 %v1938, %v1936
    %v2501 = vpack.c.b16 %v1939, %v1937
    %v2502 = vpack.c.b16 %v1942, %v1940
    %v2503 = vpack.c.b16 %v1943, %v1941
    %v2504 = vpack.c.b16 %v1946, %v1944
    %v2505 = vpack.c.b16 %v1947, %v1945
    %v2506 = vpack.c.b16 %v1950, %v1948
    %v2507 = vpack.c.b16 %v1951, %v1949
    %v2508 = vpack.c.b16 %v1954, %v1952
    %v2509 = vpack.c.b16 %v1955, %v1953
    %v2510 = vpack.c.b16 %v1958, %v1956
    %v2511 = vpack.c.b16 %v1959, %v1957
    %v2512 = vpack.c.b16 %v1962, %v1960
    %v2513 = vpack.c.b16 %v1963, %v1961
    %v2514 = vpack.c.b16 %v1966, %v1964
    %v2515 = vpack.c.b16 %v1967, %v1965
    %v2516 = vpack.c.b16 %v1970, %v1968
    %v2517 = vpack.c.b16 %v1971, %v1969
    %v2518 = vpack.c.b16 %v1974, %v1972
    %v2519 = vpack.c.b16 %v1975, %v1973
    %v2520 = vpack.c.b16 %v1978, %v1976
    %v2521 = vpack.c.b16 %v1979, %v1977
    %v2522 = vpack.c.b16 %v1982, %v1980
    %v2523 = vpack.c.b16 %v1983, %v1981
    %v2524 = vpack.c.b16 %v1986, %v1984
    %v2525 = vpack.c.b16 %v1987, %v1985
    %v2526 = vpack.c.b16 %v1990, %v1988
    %v2527 = vpack.c.b16 %v1991, %v1989
    %v2528 = vpack.c.b16 %v1994, %v1992
    %v2529 = vpack.c.b16 %v1995, %v1993
    %v2530 = vpack.c.b16 %v1998, %v1996
    %v2531 = vpack.c.b16 %v1999, %v1997
    %v2532 = vpack.c.b16 %v2002, %v2000
    %v2533 = vpack.c.b16 %v2003, %v2001
    %v2534 = vpack.c.b16 %v2006, %v2004
    %v2535 = vpack.c.b16 %v2007, %v2005
    %v2536 = vpack.c.b16 %v2010, %v2008
    %v2537 = vpack.c.b16 %v2011, %v2009
    %v2538 = vpack.c.b16 %v2014, %v2012
    %v2539 = vpack.c.b16 %v2015, %v2013
    %v2540 = vpack.c.b16 %v2018, %v2016
    %v2541 = vpack.c.b16 %v2019, %v2017
    %v2542 = vpack.c.b16 %v2022, %v2020
    %v2543 = vpack.c.b16 %v2023, %v2021
    %v2544 = vpack.c.b16 %v2026, %v2024
    %v2545 = vpack.c.b16 %v2027, %v2025
    %v2546 = vpack.c.b16 %v2030, %v2028
    %v2547 = vpack.c.b16 %v2031, %v2029
    %v2548 = vpack.c.b16 %v2034, %v2032
    %v2549 = vpack.c.b16 %v2035, %v2033
    %v2550 = vpack.c.b16 %v2038, %v2036
    %v2551 = vpack.c.b16 %v2039, %v2037
    %v2552 = vpack.c.b16 %v2042, %v2040
    %v2553 = vpack.c.b16 %v2043, %v2041
    %v2554 = vpack.c.b16 %v2046, %v2044
    %v2555 = vpack.c.b16 %v2047, %v2045
    %v2556 = vpack.c.b16 %v2050, %v2048
    %v2557 = vpack.c.b16 %v2051, %v2049
    %v2558 = vpack.c.b16 %v2054, %v2052
    %v2559 = vpack.c.b16 %v2055, %v2053
    %v2560 = vpack.c.b16 %v2058, %v2056
    %v2561 = vpack.c.b16 %v2059, %v2057
    %v2562 = vpack.c.b16 %v2062, %v2060
    %v2563 = vpack.c.b16 %v2063, %v2061
    %v2564 = vpack.c.b16 %v2066, %v2064
    %v2565 = vpack.c.b16 %v2067, %v2065
    %v2566 = vpack.c.b16 %v2070, %v2068
    %v2567 = vpack.c.b16 %v2071, %v2069
    %v2568 = vpack.c.b16 %v2074, %v2072
    %v2569 = vpack.c.b16 %v2075, %v2073
    %v2570 = vpack.c.b16 %v2078, %v2076
    %v2571 = vpack.c.b16 %v2079, %v2077
    %v2572 = vpack.c.b16 %v2082, %v2080
    %v2573 = vpack.c.b16 %v2083, %v2081
    %v2574 = vpack.c.b16 %v2086, %v2084
    %v2575 = vpack.c.b16 %v2087, %v2085
    %v2576 = vpack.c.b16 %v2090, %v2088
    %v2577 = vpack.c.b16 %v2091, %v2089
    %v2578 = vpack.c.b16 %v2094, %v2092
    %v2579 = vpack.c.b16 %v2095, %v2093
    %v2580 = vpack.c.b16 %v2098, %v2096
    %v2581 = vpack.c.b16 %v2099, %v2097
    %v2582 = vpack.c.b16 %v2102, %v2100
    %v2583 = vpack.c.b16 %v2103, %v2101
    %v2584 = vpack.c.b16 %v2106, %v2104
    %v2585 = vpack.c.b16 %v2107, %v2105
    %v2586 = vpack.c.b16 %v2110, %v2108
    %v2587 = vpack.c.b16 %v2111, %v2109
    %v2588 = vpack.c.b16 %v2114, %v2112
    %v2589 = vpack.c.b16 %v2115, %v2113
    %v2590 = vpack.c.b16 %v2118, %v2116
    %v2591 = vpack.c.b16 %v2119, %v2117
    %v2592 = vpack.c.b16 %v2122, %v2120
    %v2593 = vpack.c.b16 %v2123, %v2121
    %v2594 = vpack.c.b16 %v2126, %v2124
    %v2595 = vpack.c.b16 %v2127, %v2125
    %v2596 = vpack.c.b16 %v2130, %v2128
    %v2597 = vpack.c.b16 %v2131, %v2129
    %v2598 = vpack.c.b16 %v2134, %v2132
    %v2599 = vpack.c.b16 %v2135, %v2133
    %v2600 = vpack.c.b16 %v2138, %v2136
    %v2601 = vpack.c.b16 %v2139, %v2137
    %v2602 = vpack.c.b16 %v2142, %v2140
    %v2603 = vpack.c.b16 %v2143, %v2141
    %v2604 = vpack.c.b16 %v2146, %v2144
    %v2605 = vpack.c.b16 %v2147, %v2145
    %v2606 = vpack.c.b16 %v2150, %v2148
    %v2607 = vpack.c.b16 %v2151, %v2149
    %v2608 = vpack.c.b16 %v2154, %v2152
    %v2609 = vpack.c.b16 %v2155, %v2153
    %v2610 = vpack.c.b16 %v2158, %v2156
    %v2611 = vpack.c.b16 %v2159, %v2157
    %v2612 = vpack.c.b16 %v2162, %v2160
    %v2613 = vpack.c.b16 %v2163, %v2161
    %v2614 = vpack.c.b16 %v2166, %v2164
    %v2615 = vpack.c.b16 %v2167, %v2165
    %v2616 = vpack.c.b16 %v2170, %v2168
    %v2617 = vpack.c.b16 %v2171, %v2169
    %v2618 = vpack.c.b16 %v2174, %v2172
    %v2619 = vpack.c.b16 %v2175, %v2173
    %v2620 = vpack.c.b16 %v2178, %v2176
    %v2621 = vpack.c.b16 %v2179, %v2177
    %v2622 = vpack.c.b16 %v2182, %v2180
    %v2623 = vpack.c.b16 %v2183, %v2181
    %v2624 = vpack.c.b16 %v2186, %v2184
    %v2625 = vpack.c.b16 %v2187, %v2185
    %v2626 = vpack.c.b16 %v2190, %v2188
    %v2627 = vpack.c.b16 %v2191, %v2189
    %v2628 = vpack.c.b16 %v2194, %v2192
    %v2629 = vpack.c.b16 %v2195, %v2193
    %v2630 = vpack.c.b16 %v2198, %v2196
    %v2631 = vpack.c.b16 %v2199, %v2197
    %v2632 = vpack.c.b16 %v2202, %v2200
    %v2633 = vpack.c.b16 %v2203, %v2201
    %v2634 = vpack.c.b16 %v2206, %v2204
    %v2635 = vpack.c.b16 %v2207, %v2205
    %v2636 = vpack.c.b16 %v2210, %v2208
    %v2637 = vpack.c.b16 %v2211, %v2209
    %v2638 = vpack.c.b16 %v2214, %v2212
    %v2639 = vpack.c.b16 %v2215, %v2213
    %v2640 = vpack.c.b16 %v2218, %v2216
    %v2641 = vpack.c.b16 %v2219, %v2217
    %v2642 = vpack.c.b16 %v2222, %v2220
    %v2643 = vpack.c.b16 %v2223, %v2221
    %v2644 = vpack.c.b16 %v2226, %v2224
    %v2645 = vpack.c.b16 %v2227, %v2225
    %v2646 = vpack.c.b16 %v2230, %v2228
    %v2647 = vpack.c.b16 %v2231, %v2229
    %v2648 = vpack.c.b16 %v2234, %v2232
    %v2649 = vpack.c.b16 %v2235, %v2233
    %v2650 = vpack.c.b16 %v2238, %v2236
    %v2651 = vpack.c.b16 %v2239, %v2237
    %v2652 = vpack.c.b16 %v2242, %v2240
    %v2653 = vpack.c.b16 %v2243, %v2241
    %v2654 = vpack.c.b16 %v2246, %v2244
    %v2655 = vpack.c.b16 %v2247, %v2245
    %v2656 = vpack.c.b16 %v2250, %v2248
    %v2657 = vpack.c.b16 %v2251, %v2249
    %v2658 = vpack.c.b16 %v2254, %v2252
    %v2659 = vpack.c.b16 %v2255, %v2253
    %v2660 = vpack.c.b16 %v2258, %v2256
    %v2661 = vpack.c.b16 %v2259, %v2257
    %v2662 = vpack.c.b16 %v2262, %v2260
    %v2663 = vpack.c.b16 %v2263, %v2261
    %v2664 = vpack.c.b16 %v2266, %v2264
    %v2665 = vpack.c.b16 %v2267, %v2265
    %v2666 = vpack.c.b16 %v2270, %v2268
    %v2667 = vpack.c.b16 %v2271, %v2269
    %v2668 = vpack.c.b16 %v2274, %v2272
    %v2669 = vpack.c.b16 %v2275, %v2273
    %v2670 = vpack.c.b16 %v2278, %v2276
    %v2671 = vpack.c.b16 %v2279, %v2277
    %v2672 = vpack.c.b16 %v2282, %v2280
    %v2673 = vpack.c.b16 %v2283, %v2281
    %v2674 = vpack.c.b16 %v2286, %v2284
    %v2675 = vpack.c.b16 %v2287, %v2285
    %v2676 = vpack.c.b16 %v2290, %v2288
    %v2677 = vpack.c.b16 %v2291, %v2289
    %v2678 = vpack.c.b16 %v2294, %v2292
    %v2679 = vpack.c.b16 %v2295, %v2293
    %3064 = vmatprep.subr.bf16.mxu0 %v2311
    %3065 = vmatpush1.bf16.msra.mxu0 %v2310
    %3066 = vmatprep.subr.bf16.mxu0 %v2309
    %3067 = vmatpush1.bf16.msra.mxu0 %v2308
    %3068 = vmatprep.subr.bf16.mxu0 %v2307
    %3069 = vmatpush1.bf16.msra.mxu0 %v2306
    %3070 = vmatprep.subr.bf16.mxu0 %v2305
    %3071 = vmatpush1.bf16.msra.mxu0 %v2304
    %3072 = vmatprep.subr.bf16.mxu0 %v2303
    %3073 = vmatpush1.bf16.msra.mxu0 %v2302
    %3074 = vmatprep.subr.bf16.mxu0 %v2301
    %3075 = vmatpush1.bf16.msra.mxu0 %v2300
    %3076 = vmatprep.subr.bf16.mxu0 %v2299
    %3077 = vmatpush1.bf16.msra.mxu0 %v2298
    %3078 = vmatprep.subr.bf16.mxu0 %v2297
    %3079 = vmatpush1.bf16.msra.mxu0 %v2296
    %3080 = vmatprep.subr.bf16.mxu0 %v2327
    %3081 = vmatpush2.bf16.msra.mxu0 %v2326
    %3082 = vmatprep.subr.bf16.mxu0 %v2325
    %3083 = vmatpush2.bf16.msra.mxu0 %v2324
    %3084 = vmatprep.subr.bf16.mxu0 %v2323
    %3085 = vmatpush2.bf16.msra.mxu0 %v2322
    %3086 = vmatprep.subr.bf16.mxu0 %v2321
    %3087 = vmatpush2.bf16.msra.mxu0 %v2320
    %3088 = vmatprep.subr.bf16.mxu0 %v2319
    %3089 = vmatpush2.bf16.msra.mxu0 %v2318
    %3090 = vmatprep.subr.bf16.mxu0 %v2317
    %3091 = vmatpush2.bf16.msra.mxu0 %v2316
    %3092 = vmatprep.subr.bf16.mxu0 %v2315
    %3093 = vmatpush2.bf16.msra.mxu0 %v2314
    %3094 = vmatprep.subr.bf16.mxu0 %v2313
    %3095 = vmatpush2.bf16.msra.mxu0 %v2312
    %3096 = vmatprep.mubr.bf16.mxu0 %v725
    %3097 = vmatmul.mubr.bf16.gmra.mxu0 %v724
    %v3098 = vpop.f32.mrf.mxu0
    %v3099 = vadd.f32 %v1137, %v3098
    %v3100 = vpop.f32.mrf.mxu0
    %v3101 = vadd.f32 %v1141, %v3100
    %v3102 = vpop.f32.mrf.mxu0
    %v3103 = vadd.f32 %v1137, %v3102
    %v3104 = vpop.f32.mrf.mxu0
    %v3105 = vadd.f32 %v1141, %v3104
    %3106 = vdwg.mxu0
    %3107 = vmatprep.subr.bf16.mxu0 %v2343
    %3108 = vmatpush1.bf16.msra.mxu0 %v2342
    %3109 = vmatprep.subr.bf16.mxu0 %v2341
    %3110 = vmatpush1.bf16.msra.mxu0 %v2340
    %3111 = vmatprep.subr.bf16.mxu0 %v2339
    %3112 = vmatpush1.bf16.msra.mxu0 %v2338
    %3113 = vmatprep.subr.bf16.mxu0 %v2337
    %3114 = vmatpush1.bf16.msra.mxu0 %v2336
    %3115 = vmatprep.subr.bf16.mxu0 %v2335
    %3116 = vmatpush1.bf16.msra.mxu0 %v2334
    %3117 = vmatprep.subr.bf16.mxu0 %v2333
    %3118 = vmatpush1.bf16.msra.mxu0 %v2332
    %3119 = vmatprep.subr.bf16.mxu0 %v2331
    %3120 = vmatpush1.bf16.msra.mxu0 %v2330
    %3121 = vmatprep.subr.bf16.mxu0 %v2329
    %3122 = vmatpush1.bf16.msra.mxu0 %v2328
    %3123 = vmatprep.subr.bf16.mxu0 %v2359
    %3124 = vmatpush2.bf16.msra.mxu0 %v2358
    %3125 = vmatprep.subr.bf16.mxu0 %v2357
    %3126 = vmatpush2.bf16.msra.mxu0 %v2356
    %3127 = vmatprep.subr.bf16.mxu0 %v2355
    %3128 = vmatpush2.bf16.msra.mxu0 %v2354
    %3129 = vmatprep.subr.bf16.mxu0 %v2353
    %3130 = vmatpush2.bf16.msra.mxu0 %v2352
    %3131 = vmatprep.subr.bf16.mxu0 %v2351
    %3132 = vmatpush2.bf16.msra.mxu0 %v2350
    %3133 = vmatprep.subr.bf16.mxu0 %v2349
    %3134 = vmatpush2.bf16.msra.mxu0 %v2348
    %3135 = vmatprep.subr.bf16.mxu0 %v2347
    %3136 = vmatpush2.bf16.msra.mxu0 %v2346
    %3137 = vmatprep.subr.bf16.mxu0 %v2345
    %3138 = vmatpush2.bf16.msra.mxu0 %v2344
    %3139 = vmatprep.mubr.bf16.mxu0 %v727
    %3140 = vmatmul.mubr.bf16.gmra.mxu0 %v726
    %v3141 = vpop.f32.mrf.mxu0
    %v3142 = vadd.f32 %v3099, %v3141
    %v3143 = vpop.f32.mrf.mxu0
    %v3144 = vadd.f32 %v3101, %v3143
    %v3145 = vpop.f32.mrf.mxu0
    %v3146 = vadd.f32 %v3103, %v3145
    %v3147 = vpop.f32.mrf.mxu0
    %v3148 = vadd.f32 %v3105, %v3147
    %3149 = vdwg.mxu0
    %3150 = vmatprep.subr.bf16.mxu0 %v2375
    %3151 = vmatpush1.bf16.msra.mxu0 %v2374
    %3152 = vmatprep.subr.bf16.mxu0 %v2373
    %3153 = vmatpush1.bf16.msra.mxu0 %v2372
    %3154 = vmatprep.subr.bf16.mxu0 %v2371
    %3155 = vmatpush1.bf16.msra.mxu0 %v2370
    %3156 = vmatprep.subr.bf16.mxu0 %v2369
    %3157 = vmatpush1.bf16.msra.mxu0 %v2368
    %3158 = vmatprep.subr.bf16.mxu0 %v2367
    %3159 = vmatpush1.bf16.msra.mxu0 %v2366
    %3160 = vmatprep.subr.bf16.mxu0 %v2365
    %3161 = vmatpush1.bf16.msra.mxu0 %v2364
    %3162 = vmatprep.subr.bf16.mxu0 %v2363
    %3163 = vmatpush1.bf16.msra.mxu0 %v2362
    %3164 = vmatprep.subr.bf16.mxu0 %v2361
    %3165 = vmatpush1.bf16.msra.mxu0 %v2360
    %3166 = vmatprep.subr.bf16.mxu0 %v2391
    %3167 = vmatpush2.bf16.msra.mxu0 %v2390
    %3168 = vmatprep.subr.bf16.mxu0 %v2389
    %3169 = vmatpush2.bf16.msra.mxu0 %v2388
    %3170 = vmatprep.subr.bf16.mxu0 %v2387
    %3171 = vmatpush2.bf16.msra.mxu0 %v2386
    %3172 = vmatprep.subr.bf16.mxu0 %v2385
    %3173 = vmatpush2.bf16.msra.mxu0 %v2384
    %3174 = vmatprep.subr.bf16.mxu0 %v2383
    %3175 = vmatpush2.bf16.msra.mxu0 %v2382
    %3176 = vmatprep.subr.bf16.mxu0 %v2381
    %3177 = vmatpush2.bf16.msra.mxu0 %v2380
    %3178 = vmatprep.subr.bf16.mxu0 %v2379
    %3179 = vmatpush2.bf16.msra.mxu0 %v2378
    %3180 = vmatprep.subr.bf16.mxu0 %v2377
    %3181 = vmatpush2.bf16.msra.mxu0 %v2376
    %3182 = vmatprep.mubr.bf16.mxu0 %v729
    %3183 = vmatmul.mubr.bf16.gmra.mxu0 %v728
    %v3184 = vpop.f32.mrf.mxu0
    %v3185 = vadd.f32 %v3142, %v3184
    %v3186 = vpop.f32.mrf.mxu0
    %v3187 = vadd.f32 %v3144, %v3186
    %v3188 = vpop.f32.mrf.mxu0
    %v3189 = vadd.f32 %v3146, %v3188
    %v3190 = vpop.f32.mrf.mxu0
    %v3191 = vadd.f32 %v3148, %v3190
    %3192 = vdwg.mxu0
    %3193 = vmatprep.subr.bf16.mxu0 %v2407
    %3194 = vmatpush1.bf16.msra.mxu0 %v2406
    %3195 = vmatprep.subr.bf16.mxu0 %v2405
    %3196 = vmatpush1.bf16.msra.mxu0 %v2404
    %3197 = vmatprep.subr.bf16.mxu0 %v2403
    %3198 = vmatpush1.bf16.msra.mxu0 %v2402
    %3199 = vmatprep.subr.bf16.mxu0 %v2401
    %3200 = vmatpush1.bf16.msra.mxu0 %v2400
    %3201 = vmatprep.subr.bf16.mxu0 %v2399
    %3202 = vmatpush1.bf16.msra.mxu0 %v2398
    %3203 = vmatprep.subr.bf16.mxu0 %v2397
    %3204 = vmatpush1.bf16.msra.mxu0 %v2396
    %3205 = vmatprep.subr.bf16.mxu0 %v2395
    %3206 = vmatpush1.bf16.msra.mxu0 %v2394
    %3207 = vmatprep.subr.bf16.mxu0 %v2393
    %3208 = vmatpush1.bf16.msra.mxu0 %v2392
    %3209 = vmatprep.subr.bf16.mxu0 %v2423
    %3210 = vmatpush2.bf16.msra.mxu0 %v2422
    %3211 = vmatprep.subr.bf16.mxu0 %v2421
    %3212 = vmatpush2.bf16.msra.mxu0 %v2420
    %3213 = vmatprep.subr.bf16.mxu0 %v2419
    %3214 = vmatpush2.bf16.msra.mxu0 %v2418
    %3215 = vmatprep.subr.bf16.mxu0 %v2417
    %3216 = vmatpush2.bf16.msra.mxu0 %v2416
    %3217 = vmatprep.subr.bf16.mxu0 %v2415
    %3218 = vmatpush2.bf16.msra.mxu0 %v2414
    %3219 = vmatprep.subr.bf16.mxu0 %v2413
    %3220 = vmatpush2.bf16.msra.mxu0 %v2412
    %3221 = vmatprep.subr.bf16.mxu0 %v2411
    %3222 = vmatpush2.bf16.msra.mxu0 %v2410
    %3223 = vmatprep.subr.bf16.mxu0 %v2409
    %3224 = vmatpush2.bf16.msra.mxu0 %v2408
    %3225 = vmatprep.mubr.bf16.mxu0 %v731
    %3226 = vmatmul.mubr.bf16.gmra.mxu0 %v730
    %v3227 = vpop.f32.mrf.mxu0
    %v3228 = vadd.f32 %v3185, %v3227
    %v3229 = vpop.f32.mrf.mxu0
    %v3230 = vadd.f32 %v3187, %v3229
    %v3231 = vpop.f32.mrf.mxu0
    %v3232 = vadd.f32 %v3189, %v3231
    %v3233 = vpop.f32.mrf.mxu0
    %v3234 = vadd.f32 %v3191, %v3233
    %3235 = vdwg.mxu0
    %3236 = vmatprep.subr.bf16.mxu0 %v2439
    %3237 = vmatpush1.bf16.msra.mxu0 %v2438
    %3238 = vmatprep.subr.bf16.mxu0 %v2437
    %3239 = vmatpush1.bf16.msra.mxu0 %v2436
    %3240 = vmatprep.subr.bf16.mxu0 %v2435
    %3241 = vmatpush1.bf16.msra.mxu0 %v2434
    %3242 = vmatprep.subr.bf16.mxu0 %v2433
    %3243 = vmatpush1.bf16.msra.mxu0 %v2432
    %3244 = vmatprep.subr.bf16.mxu0 %v2431
    %3245 = vmatpush1.bf16.msra.mxu0 %v2430
    %3246 = vmatprep.subr.bf16.mxu0 %v2429
    %3247 = vmatpush1.bf16.msra.mxu0 %v2428
    %3248 = vmatprep.subr.bf16.mxu0 %v2427
    %3249 = vmatpush1.bf16.msra.mxu0 %v2426
    %3250 = vmatprep.subr.bf16.mxu0 %v2425
    %3251 = vmatpush1.bf16.msra.mxu0 %v2424
    %3252 = vmatprep.subr.bf16.mxu0 %v2455
    %3253 = vmatpush2.bf16.msra.mxu0 %v2454
    %3254 = vmatprep.subr.bf16.mxu0 %v2453
    %3255 = vmatpush2.bf16.msra.mxu0 %v2452
    %3256 = vmatprep.subr.bf16.mxu0 %v2451
    %3257 = vmatpush2.bf16.msra.mxu0 %v2450
    %3258 = vmatprep.subr.bf16.mxu0 %v2449
    %3259 = vmatpush2.bf16.msra.mxu0 %v2448
    %3260 = vmatprep.subr.bf16.mxu0 %v2447
    %3261 = vmatpush2.bf16.msra.mxu0 %v2446
    %3262 = vmatprep.subr.bf16.mxu0 %v2445
    %3263 = vmatpush2.bf16.msra.mxu0 %v2444
    %3264 = vmatprep.subr.bf16.mxu0 %v2443
    %3265 = vmatpush2.bf16.msra.mxu0 %v2442
    %3266 = vmatprep.subr.bf16.mxu0 %v2441
    %3267 = vmatpush2.bf16.msra.mxu0 %v2440
    %3268 = vmatprep.mubr.bf16.mxu0 %v733
    %3269 = vmatmul.mubr.bf16.gmra.mxu0 %v732
    %v3270 = vpop.f32.mrf.mxu0
    %v3271 = vadd.f32 %v3228, %v3270
    %v3272 = vpop.f32.mrf.mxu0
    %v3273 = vadd.f32 %v3230, %v3272
    %v3274 = vpop.f32.mrf.mxu0
    %v3275 = vadd.f32 %v3232, %v3274
    %v3276 = vpop.f32.mrf.mxu0
    %v3277 = vadd.f32 %v3234, %v3276
    %3278 = vdwg.mxu0
    %3279 = vmatprep.subr.bf16.mxu0 %v2471
    %3280 = vmatpush1.bf16.msra.mxu0 %v2470
    %3281 = vmatprep.subr.bf16.mxu0 %v2469
    %3282 = vmatpush1.bf16.msra.mxu0 %v2468
    %3283 = vmatprep.subr.bf16.mxu0 %v2467
    %3284 = vmatpush1.bf16.msra.mxu0 %v2466
    %3285 = vmatprep.subr.bf16.mxu0 %v2465
    %3286 = vmatpush1.bf16.msra.mxu0 %v2464
    %3287 = vmatprep.subr.bf16.mxu0 %v2463
    %3288 = vmatpush1.bf16.msra.mxu0 %v2462
    %3289 = vmatprep.subr.bf16.mxu0 %v2461
    %3290 = vmatpush1.bf16.msra.mxu0 %v2460
    %3291 = vmatprep.subr.bf16.mxu0 %v2459
    %3292 = vmatpush1.bf16.msra.mxu0 %v2458
    %3293 = vmatprep.subr.bf16.mxu0 %v2457
    %3294 = vmatpush1.bf16.msra.mxu0 %v2456
    %3295 = vmatprep.subr.bf16.mxu0 %v2487
    %3296 = vmatpush2.bf16.msra.mxu0 %v2486
    %3297 = vmatprep.subr.bf16.mxu0 %v2485
    %3298 = vmatpush2.bf16.msra.mxu0 %v2484
    %3299 = vmatprep.subr.bf16.mxu0 %v2483
    %3300 = vmatpush2.bf16.msra.mxu0 %v2482
    %3301 = vmatprep.subr.bf16.mxu0 %v2481
    %3302 = vmatpush2.bf16.msra.mxu0 %v2480
    %3303 = vmatprep.subr.bf16.mxu0 %v2479
    %3304 = vmatpush2.bf16.msra.mxu0 %v2478
    %3305 = vmatprep.subr.bf16.mxu0 %v2477
    %3306 = vmatpush2.bf16.msra.mxu0 %v2476
    %3307 = vmatprep.subr.bf16.mxu0 %v2475
    %3308 = vmatpush2.bf16.msra.mxu0 %v2474
    %3309 = vmatprep.subr.bf16.mxu0 %v2473
    %3310 = vmatpush2.bf16.msra.mxu0 %v2472
    %3311 = vmatprep.mubr.bf16.mxu0 %v735
    %3312 = vmatmul.mubr.bf16.gmra.mxu0 %v734
    %v3313 = vpop.f32.mrf.mxu0
    %v3314 = vadd.f32 %v3271, %v3313
    %v3315 = vpop.f32.mrf.mxu0
    %v3316 = vadd.f32 %v3273, %v3315
    %v3317 = vpop.f32.mrf.mxu0
    %v3318 = vadd.f32 %v3275, %v3317
    %v3319 = vpop.f32.mrf.mxu0
    %v3320 = vadd.f32 %v3277, %v3319
    %3321 = vdwg.mxu0
    %3322 = vmatprep.subr.bf16.mxu0 %v2503
    %3323 = vmatpush1.bf16.msra.mxu0 %v2502
    %3324 = vmatprep.subr.bf16.mxu0 %v2501
    %3325 = vmatpush1.bf16.msra.mxu0 %v2500
    %3326 = vmatprep.subr.bf16.mxu0 %v2499
    %3327 = vmatpush1.bf16.msra.mxu0 %v2498
    %3328 = vmatprep.subr.bf16.mxu0 %v2497
    %3329 = vmatpush1.bf16.msra.mxu0 %v2496
    %3330 = vmatprep.subr.bf16.mxu0 %v2495
    %3331 = vmatpush1.bf16.msra.mxu0 %v2494
    %3332 = vmatprep.subr.bf16.mxu0 %v2493
    %3333 = vmatpush1.bf16.msra.mxu0 %v2492
    %3334 = vmatprep.subr.bf16.mxu0 %v2491
    %3335 = vmatpush1.bf16.msra.mxu0 %v2490
    %3336 = vmatprep.subr.bf16.mxu0 %v2489
    %3337 = vmatpush1.bf16.msra.mxu0 %v2488
    %3338 = vmatprep.subr.bf16.mxu0 %v2519
    %3339 = vmatpush2.bf16.msra.mxu0 %v2518
    %3340 = vmatprep.subr.bf16.mxu0 %v2517
    %3341 = vmatpush2.bf16.msra.mxu0 %v2516
    %3342 = vmatprep.subr.bf16.mxu0 %v2515
    %3343 = vmatpush2.bf16.msra.mxu0 %v2514
    %3344 = vmatprep.subr.bf16.mxu0 %v2513
    %3345 = vmatpush2.bf16.msra.mxu0 %v2512
    %3346 = vmatprep.subr.bf16.mxu0 %v2511
    %3347 = vmatpush2.bf16.msra.mxu0 %v2510
    %3348 = vmatprep.subr.bf16.mxu0 %v2509
    %3349 = vmatpush2.bf16.msra.mxu0 %v2508
    %3350 = vmatprep.subr.bf16.mxu0 %v2507
    %3351 = vmatpush2.bf16.msra.mxu0 %v2506
    %3352 = vmatprep.subr.bf16.mxu0 %v2505
    %3353 = vmatpush2.bf16.msra.mxu0 %v2504
    %3354 = vmatprep.mubr.bf16.mxu0 %v737
    %3355 = vmatmul.mubr.bf16.gmra.mxu0 %v736
    %v3356 = vpop.f32.mrf.mxu0
    %v3357 = vadd.f32 %v3314, %v3356
    %v3358 = vpop.f32.mrf.mxu0
    %v3359 = vadd.f32 %v3316, %v3358
    %v3360 = vpop.f32.mrf.mxu0
    %v3361 = vadd.f32 %v3318, %v3360
    %v3362 = vpop.f32.mrf.mxu0
    %v3363 = vadd.f32 %v3320, %v3362
    %3364 = vdwg.mxu0
    %3365 = vmatprep.subr.bf16.mxu0 %v2535
    %3366 = vmatpush1.bf16.msra.mxu0 %v2534
    %3367 = vmatprep.subr.bf16.mxu0 %v2533
    %3368 = vmatpush1.bf16.msra.mxu0 %v2532
    %3369 = vmatprep.subr.bf16.mxu0 %v2531
    %3370 = vmatpush1.bf16.msra.mxu0 %v2530
    %3371 = vmatprep.subr.bf16.mxu0 %v2529
    %3372 = vmatpush1.bf16.msra.mxu0 %v2528
    %3373 = vmatprep.subr.bf16.mxu0 %v2527
    %3374 = vmatpush1.bf16.msra.mxu0 %v2526
    %3375 = vmatprep.subr.bf16.mxu0 %v2525
    %3376 = vmatpush1.bf16.msra.mxu0 %v2524
    %3377 = vmatprep.subr.bf16.mxu0 %v2523
    %3378 = vmatpush1.bf16.msra.mxu0 %v2522
    %3379 = vmatprep.subr.bf16.mxu0 %v2521
    %3380 = vmatpush1.bf16.msra.mxu0 %v2520
    %3381 = vmatprep.subr.bf16.mxu0 %v2551
    %3382 = vmatpush2.bf16.msra.mxu0 %v2550
    %3383 = vmatprep.subr.bf16.mxu0 %v2549
    %3384 = vmatpush2.bf16.msra.mxu0 %v2548
    %3385 = vmatprep.subr.bf16.mxu0 %v2547
    %3386 = vmatpush2.bf16.msra.mxu0 %v2546
    %3387 = vmatprep.subr.bf16.mxu0 %v2545
    %3388 = vmatpush2.bf16.msra.mxu0 %v2544
    %3389 = vmatprep.subr.bf16.mxu0 %v2543
    %3390 = vmatpush2.bf16.msra.mxu0 %v2542
    %3391 = vmatprep.subr.bf16.mxu0 %v2541
    %3392 = vmatpush2.bf16.msra.mxu0 %v2540
    %3393 = vmatprep.subr.bf16.mxu0 %v2539
    %3394 = vmatpush2.bf16.msra.mxu0 %v2538
    %3395 = vmatprep.subr.bf16.mxu0 %v2537
    %3396 = vmatpush2.bf16.msra.mxu0 %v2536
    %3397 = vmatprep.mubr.bf16.mxu0 %v739
    %3398 = vmatmul.mubr.bf16.gmra.mxu0 %v738
    %v3399 = vpop.f32.mrf.mxu0
    %v3400 = vadd.f32 %v3357, %v3399
    %v3401 = vpop.f32.mrf.mxu0
    %v3402 = vadd.f32 %v3359, %v3401
    %v3403 = vpop.f32.mrf.mxu0
    %v3404 = vadd.f32 %v3361, %v3403
    %v3405 = vpop.f32.mrf.mxu0
    %v3406 = vadd.f32 %v3363, %v3405
    %3407 = vdwg.mxu0
    %3408 = vmatprep.subr.bf16.mxu0 %v2567
    %3409 = vmatpush1.bf16.msra.mxu0 %v2566
    %3410 = vmatprep.subr.bf16.mxu0 %v2565
    %3411 = vmatpush1.bf16.msra.mxu0 %v2564
    %3412 = vmatprep.subr.bf16.mxu0 %v2563
    %3413 = vmatpush1.bf16.msra.mxu0 %v2562
    %3414 = vmatprep.subr.bf16.mxu0 %v2561
    %3415 = vmatpush1.bf16.msra.mxu0 %v2560
    %3416 = vmatprep.subr.bf16.mxu0 %v2559
    %3417 = vmatpush1.bf16.msra.mxu0 %v2558
    %3418 = vmatprep.subr.bf16.mxu0 %v2557
    %3419 = vmatpush1.bf16.msra.mxu0 %v2556
    %3420 = vmatprep.subr.bf16.mxu0 %v2555
    %3421 = vmatpush1.bf16.msra.mxu0 %v2554
    %3422 = vmatprep.subr.bf16.mxu0 %v2553
    %3423 = vmatpush1.bf16.msra.mxu0 %v2552
    %3424 = vmatprep.subr.bf16.mxu0 %v2583
    %3425 = vmatpush2.bf16.msra.mxu0 %v2582
    %3426 = vmatprep.subr.bf16.mxu0 %v2581
    %3427 = vmatpush2.bf16.msra.mxu0 %v2580
    %3428 = vmatprep.subr.bf16.mxu0 %v2579
    %3429 = vmatpush2.bf16.msra.mxu0 %v2578
    %3430 = vmatprep.subr.bf16.mxu0 %v2577
    %3431 = vmatpush2.bf16.msra.mxu0 %v2576
    %3432 = vmatprep.subr.bf16.mxu0 %v2575
    %3433 = vmatpush2.bf16.msra.mxu0 %v2574
    %3434 = vmatprep.subr.bf16.mxu0 %v2573
    %3435 = vmatpush2.bf16.msra.mxu0 %v2572
    %3436 = vmatprep.subr.bf16.mxu0 %v2571
    %3437 = vmatpush2.bf16.msra.mxu0 %v2570
    %3438 = vmatprep.subr.bf16.mxu0 %v2569
    %3439 = vmatpush2.bf16.msra.mxu0 %v2568
    %3440 = vmatprep.mubr.bf16.mxu0 %v741
    %3441 = vmatmul.mubr.bf16.gmra.mxu0 %v740
    %v3442 = vpop.f32.mrf.mxu0
    %v3443 = vadd.f32 %v3400, %v3442
    %v3444 = vpop.f32.mrf.mxu0
    %v3445 = vadd.f32 %v3402, %v3444
    %v3446 = vpop.f32.mrf.mxu0
    %v3447 = vadd.f32 %v3404, %v3446
    %v3448 = vpop.f32.mrf.mxu0
    %v3449 = vadd.f32 %v3406, %v3448
    %3450 = vdwg.mxu0
    %3451 = vmatprep.subr.bf16.mxu0 %v2599
    %3452 = vmatpush1.bf16.msra.mxu0 %v2598
    %3453 = vmatprep.subr.bf16.mxu0 %v2597
    %3454 = vmatpush1.bf16.msra.mxu0 %v2596
    %3455 = vmatprep.subr.bf16.mxu0 %v2595
    %3456 = vmatpush1.bf16.msra.mxu0 %v2594
    %3457 = vmatprep.subr.bf16.mxu0 %v2593
    %3458 = vmatpush1.bf16.msra.mxu0 %v2592
    %3459 = vmatprep.subr.bf16.mxu0 %v2591
    %3460 = vmatpush1.bf16.msra.mxu0 %v2590
    %3461 = vmatprep.subr.bf16.mxu0 %v2589
    %3462 = vmatpush1.bf16.msra.mxu0 %v2588
    %3463 = vmatprep.subr.bf16.mxu0 %v2587
    %3464 = vmatpush1.bf16.msra.mxu0 %v2586
    %3465 = vmatprep.subr.bf16.mxu0 %v2585
    %3466 = vmatpush1.bf16.msra.mxu0 %v2584
    %3467 = vmatprep.subr.bf16.mxu0 %v2615
    %3468 = vmatpush2.bf16.msra.mxu0 %v2614
    %3469 = vmatprep.subr.bf16.mxu0 %v2613
    %3470 = vmatpush2.bf16.msra.mxu0 %v2612
    %3471 = vmatprep.subr.bf16.mxu0 %v2611
    %3472 = vmatpush2.bf16.msra.mxu0 %v2610
    %3473 = vmatprep.subr.bf16.mxu0 %v2609
    %3474 = vmatpush2.bf16.msra.mxu0 %v2608
    %3475 = vmatprep.subr.bf16.mxu0 %v2607
    %3476 = vmatpush2.bf16.msra.mxu0 %v2606
    %3477 = vmatprep.subr.bf16.mxu0 %v2605
    %3478 = vmatpush2.bf16.msra.mxu0 %v2604
    %3479 = vmatprep.subr.bf16.mxu0 %v2603
    %3480 = vmatpush2.bf16.msra.mxu0 %v2602
    %3481 = vmatprep.subr.bf16.mxu0 %v2601
    %3482 = vmatpush2.bf16.msra.mxu0 %v2600
    %3483 = vmatprep.mubr.bf16.mxu0 %v743
    %3484 = vmatmul.mubr.bf16.gmra.mxu0 %v742
    %v3485 = vpop.f32.mrf.mxu0
    %v3486 = vadd.f32 %v3443, %v3485
    %v3487 = vpop.f32.mrf.mxu0
    %v3488 = vadd.f32 %v3445, %v3487
    %v3489 = vpop.f32.mrf.mxu0
    %v3490 = vadd.f32 %v3447, %v3489
    %v3491 = vpop.f32.mrf.mxu0
    %v3492 = vadd.f32 %v3449, %v3491
    %3493 = vdwg.mxu0
    %3494 = vmatprep.subr.bf16.mxu0 %v2631
    %3495 = vmatpush1.bf16.msra.mxu0 %v2630
    %3496 = vmatprep.subr.bf16.mxu0 %v2629
    %3497 = vmatpush1.bf16.msra.mxu0 %v2628
    %3498 = vmatprep.subr.bf16.mxu0 %v2627
    %3499 = vmatpush1.bf16.msra.mxu0 %v2626
    %3500 = vmatprep.subr.bf16.mxu0 %v2625
    %3501 = vmatpush1.bf16.msra.mxu0 %v2624
    %3502 = vmatprep.subr.bf16.mxu0 %v2623
    %3503 = vmatpush1.bf16.msra.mxu0 %v2622
    %3504 = vmatprep.subr.bf16.mxu0 %v2621
    %3505 = vmatpush1.bf16.msra.mxu0 %v2620
    %3506 = vmatprep.subr.bf16.mxu0 %v2619
    %3507 = vmatpush1.bf16.msra.mxu0 %v2618
    %3508 = vmatprep.subr.bf16.mxu0 %v2617
    %3509 = vmatpush1.bf16.msra.mxu0 %v2616
    %3510 = vmatprep.subr.bf16.mxu0 %v2647
    %3511 = vmatpush2.bf16.msra.mxu0 %v2646
    %3512 = vmatprep.subr.bf16.mxu0 %v2645
    %3513 = vmatpush2.bf16.msra.mxu0 %v2644
    %3514 = vmatprep.subr.bf16.mxu0 %v2643
    %3515 = vmatpush2.bf16.msra.mxu0 %v2642
    %3516 = vmatprep.subr.bf16.mxu0 %v2641
    %3517 = vmatpush2.bf16.msra.mxu0 %v2640
    %3518 = vmatprep.subr.bf16.mxu0 %v2639
    %3519 = vmatpush2.bf16.msra.mxu0 %v2638
    %3520 = vmatprep.subr.bf16.mxu0 %v2637
    %3521 = vmatpush2.bf16.msra.mxu0 %v2636
    %3522 = vmatprep.subr.bf16.mxu0 %v2635
    %3523 = vmatpush2.bf16.msra.mxu0 %v2634
    %3524 = vmatprep.subr.bf16.mxu0 %v2633
    %3525 = vmatpush2.bf16.msra.mxu0 %v2632
    %3526 = vmatprep.mubr.bf16.mxu0 %v745
    %3527 = vmatmul.mubr.bf16.gmra.mxu0 %v744
    %v3528 = vpop.f32.mrf.mxu0
    %v3529 = vadd.f32 %v3486, %v3528
    %v3530 = vpop.f32.mrf.mxu0
    %v3531 = vadd.f32 %v3488, %v3530
    %v3532 = vpop.f32.mrf.mxu0
    %v3533 = vadd.f32 %v3490, %v3532
    %v3534 = vpop.f32.mrf.mxu0
    %v3535 = vadd.f32 %v3492, %v3534
    %3536 = vdwg.mxu0
    %3537 = vmatprep.subr.bf16.mxu0 %v2663
    %3538 = vmatpush1.bf16.msra.mxu0 %v2662
    %3539 = vmatprep.subr.bf16.mxu0 %v2661
    %3540 = vmatpush1.bf16.msra.mxu0 %v2660
    %3541 = vmatprep.subr.bf16.mxu0 %v2659
    %3542 = vmatpush1.bf16.msra.mxu0 %v2658
    %3543 = vmatprep.subr.bf16.mxu0 %v2657
    %3544 = vmatpush1.bf16.msra.mxu0 %v2656
    %3545 = vmatprep.subr.bf16.mxu0 %v2655
    %3546 = vmatpush1.bf16.msra.mxu0 %v2654
    %3547 = vmatprep.subr.bf16.mxu0 %v2653
    %3548 = vmatpush1.bf16.msra.mxu0 %v2652
    %3549 = vmatprep.subr.bf16.mxu0 %v2651
    %3550 = vmatpush1.bf16.msra.mxu0 %v2650
    %3551 = vmatprep.subr.bf16.mxu0 %v2649
    %3552 = vmatpush1.bf16.msra.mxu0 %v2648
    %3553 = vmatprep.subr.bf16.mxu0 %v2679
    %3554 = vmatpush2.bf16.msra.mxu0 %v2678
    %3555 = vmatprep.subr.bf16.mxu0 %v2677
    %3556 = vmatpush2.bf16.msra.mxu0 %v2676
    %3557 = vmatprep.subr.bf16.mxu0 %v2675
    %3558 = vmatpush2.bf16.msra.mxu0 %v2674
    %3559 = vmatprep.subr.bf16.mxu0 %v2673
    %3560 = vmatpush2.bf16.msra.mxu0 %v2672
    %3561 = vmatprep.subr.bf16.mxu0 %v2671
    %3562 = vmatpush2.bf16.msra.mxu0 %v2670
    %3563 = vmatprep.subr.bf16.mxu0 %v2669
    %3564 = vmatpush2.bf16.msra.mxu0 %v2668
    %3565 = vmatprep.subr.bf16.mxu0 %v2667
    %3566 = vmatpush2.bf16.msra.mxu0 %v2666
    %3567 = vmatprep.subr.bf16.mxu0 %v2665
    %3568 = vmatpush2.bf16.msra.mxu0 %v2664
    %3569 = vmatprep.mubr.bf16.mxu0 %v747
    %3570 = vmatmul.mubr.bf16.gmra.mxu0 %v746
    %v3571 = vpop.f32.mrf.mxu0
    %v3572 = vadd.f32 %v3529, %v3571
    %v3573 = vpop.f32.mrf.mxu0
    %v3574 = vadd.f32 %v3531, %v3573
    %v3575 = vpop.f32.mrf.mxu0
    %v3576 = vadd.f32 %v3533, %v3575
    %v3577 = vpop.f32.mrf.mxu0
    %v3578 = vadd.f32 %v3535, %v3577
    %3579 = vdwg.mxu0
    %v3580 = vmax.f32 %v3572, 0.0
    %v3581 = vmax.f32 %v3574, 0.0
    %v3582 = vmax.f32 %v3576, 0.0
    %v3583 = vmax.f32 %v3578, 0.0
    %v3584 = vpack.c.bf16 %v3582, %v3580
    %v3585 = vpack.c.bf16 %v3583, %v3581
    %v3586 = vld [vmem:[#allocation8] sm:$0xf]
    %v3587 = vld [vmem:[#allocation8 + $0x4] sm:$0xf]
    %v3588 = vld [vmem:[#allocation8 + $0x8] sm:$0xf]
    %v3589 = vld [vmem:[#allocation8 + $0xc] sm:$0xf]
    %v3590 = vld [vmem:[#allocation8 + $0x10] sm:$0xf]
    %v3591 = vld [vmem:[#allocation8 + $0x14] sm:$0xf]
    %v3592 = vld [vmem:[#allocation8 + $0x18] sm:$0xf]
    %v3593 = vld [vmem:[#allocation8 + $0x1c] sm:$0xf]
    %v3594 = vld [vmem:[#allocation8 + $0x20] sm:$0xf]
    %v3595 = vld [vmem:[#allocation8 + $0x24] sm:$0xf]
    %v3596 = vld [vmem:[#allocation8 + $0x28] sm:$0xf]
    %v3597 = vld [vmem:[#allocation8 + $0x2c] sm:$0xf]
    %v3598 = vld [vmem:[#allocation8 + $0x30] sm:$0xf]
    %v3599 = vld [vmem:[#allocation8 + $0x34] sm:$0xf]
    %v3600 = vld [vmem:[#allocation8 + $0x38] sm:$0xf]
    %v3601 = vld [vmem:[#allocation8 + $0x3c] sm:$0xf]
    %v3602 = vld [vmem:[#allocation8 + $0x40] sm:$0xf]
    %v3603 = vld [vmem:[#allocation8 + $0x44] sm:$0xf]
    %v3604 = vld [vmem:[#allocation8 + $0x48] sm:$0xf]
    %v3605 = vld [vmem:[#allocation8 + $0x4c] sm:$0xf]
    %v3606 = vld [vmem:[#allocation8 + $0x50] sm:$0xf]
    %v3607 = vld [vmem:[#allocation8 + $0x54] sm:$0xf]
    %v3608 = vld [vmem:[#allocation8 + $0x58] sm:$0xf]
    %v3609 = vld [vmem:[#allocation8 + $0x5c] sm:$0xf]
    %v3610 = vld [vmem:[#allocation8 + $0x60] sm:$0xf]
    %v3611 = vld [vmem:[#allocation8 + $0x64] sm:$0xf]
    %v3612 = vld [vmem:[#allocation8 + $0x68] sm:$0xf]
    %v3613 = vld [vmem:[#allocation8 + $0x6c] sm:$0xf]
    %v3614 = vld [vmem:[#allocation8 + $0x70] sm:$0xf]
    %v3615 = vld [vmem:[#allocation8 + $0x74] sm:$0xf]
    %v3616 = vld [vmem:[#allocation8 + $0x78] sm:$0xf]
    %v3617 = vld [vmem:[#allocation8 + $0x7c] sm:$0xf]
    %v3618 = vld [vmem:[#allocation10] sm:$0x1]
    %v3620 = vlaneseq
    %v3621 = vshrl.u32 %v3620, 7
    %v3622 = vsub.s32 0, %v3621
    %v3623 = vrot.slane %v3618, %v3622
    %v3657 = vunpack.c.l.b16 %v3586
    %v3658 = vunpack.c.l.b16 %v3587
    %v3659 = vunpack.c.l.b16 %v3588
    %v3660 = vunpack.c.l.b16 %v3589
    %v3661 = vunpack.c.l.b16 %v3590
    %v3662 = vunpack.c.l.b16 %v3591
    %v3663 = vunpack.c.l.b16 %v3592
    %v3664 = vunpack.c.l.b16 %v3593
    %v3665 = vunpack.c.l.b16 %v3594
    %v3666 = vunpack.c.l.b16 %v3595
    %v3667 = vunpack.c.l.b16 %v3596
    %v3668 = vunpack.c.l.b16 %v3597
    %v3669 = vunpack.c.l.b16 %v3598
    %v3670 = vunpack.c.l.b16 %v3599
    %v3671 = vunpack.c.l.b16 %v3600
    %v3672 = vunpack.c.l.b16 %v3601
    %v3673 = vunpack.c.l.b16 %v3602
    %v3674 = vunpack.c.l.b16 %v3603
    %v3675 = vunpack.c.l.b16 %v3604
    %v3676 = vunpack.c.l.b16 %v3605
    %v3677 = vunpack.c.l.b16 %v3606
    %v3678 = vunpack.c.l.b16 %v3607
    %v3679 = vunpack.c.l.b16 %v3608
    %v3680 = vunpack.c.l.b16 %v3609
    %v3681 = vunpack.c.l.b16 %v3610
    %v3682 = vunpack.c.l.b16 %v3611
    %v3683 = vunpack.c.l.b16 %v3612
    %v3684 = vunpack.c.l.b16 %v3613
    %v3685 = vunpack.c.l.b16 %v3614
    %v3686 = vunpack.c.l.b16 %v3615
    %v3687 = vunpack.c.l.b16 %v3616
    %v3688 = vunpack.c.l.b16 %v3617
    %v3689 = vpack.c.b16 %v3658, %v3657
    %v3690 = vpack.c.b16 %v3660, %v3659
    %v3691 = vpack.c.b16 %v3662, %v3661
    %v3692 = vpack.c.b16 %v3664, %v3663
    %v3693 = vpack.c.b16 %v3666, %v3665
    %v3694 = vpack.c.b16 %v3668, %v3667
    %v3695 = vpack.c.b16 %v3670, %v3669
    %v3696 = vpack.c.b16 %v3672, %v3671
    %v3697 = vpack.c.b16 %v3674, %v3673
    %v3698 = vpack.c.b16 %v3676, %v3675
    %v3699 = vpack.c.b16 %v3678, %v3677
    %v3700 = vpack.c.b16 %v3680, %v3679
    %v3701 = vpack.c.b16 %v3682, %v3681
    %v3702 = vpack.c.b16 %v3684, %v3683
    %v3703 = vpack.c.b16 %v3686, %v3685
    %v3704 = vpack.c.b16 %v3688, %v3687
    %3721 = vmatprep.subr.bf16.mxu0 0
    %3722 = vmatpush1.bf16.msra.mxu0 %v3696
    %3723 = vmatprep.subr.bf16.mxu0 0
    %3724 = vmatpush1.bf16.msra.mxu0 %v3695
    %3725 = vmatprep.subr.bf16.mxu0 0
    %3726 = vmatpush1.bf16.msra.mxu0 %v3694
    %3727 = vmatprep.subr.bf16.mxu0 0
    %3728 = vmatpush1.bf16.msra.mxu0 %v3693
    %3729 = vmatprep.subr.bf16.mxu0 0
    %3730 = vmatpush1.bf16.msra.mxu0 %v3692
    %3731 = vmatprep.subr.bf16.mxu0 0
    %3732 = vmatpush1.bf16.msra.mxu0 %v3691
    %3733 = vmatprep.subr.bf16.mxu0 0
    %3734 = vmatpush1.bf16.msra.mxu0 %v3690
    %3735 = vmatprep.subr.bf16.mxu0 0
    %3736 = vmatpush1.bf16.msra.mxu0 %v3689
    %3737 = vmatprep.subr.bf16.mxu0 0
    %3738 = vmatpush2.bf16.msra.mxu0 %v3704
    %3739 = vmatprep.subr.bf16.mxu0 0
    %3740 = vmatpush2.bf16.msra.mxu0 %v3703
    %3741 = vmatprep.subr.bf16.mxu0 0
    %3742 = vmatpush2.bf16.msra.mxu0 %v3702
    %3743 = vmatprep.subr.bf16.mxu0 0
    %3744 = vmatpush2.bf16.msra.mxu0 %v3701
    %3745 = vmatprep.subr.bf16.mxu0 0
    %3746 = vmatpush2.bf16.msra.mxu0 %v3700
    %3747 = vmatprep.subr.bf16.mxu0 0
    %3748 = vmatpush2.bf16.msra.mxu0 %v3699
    %3749 = vmatprep.subr.bf16.mxu0 0
    %3750 = vmatpush2.bf16.msra.mxu0 %v3698
    %3751 = vmatprep.subr.bf16.mxu0 0
    %3752 = vmatpush2.bf16.msra.mxu0 %v3697
    %3753 = vmatprep.mubr.bf16.mxu0 %v3585
    %3754 = vmatmul.mubr.bf16.gmra.mxu0 %v3584
    %v3755 = vpop.f32.mrf.mxu0
    %v3756 = vadd.f32 %v3623, %v3755
    %v3757 = vpop.f32.mrf.mxu0
    %v3758 = vpop.f32.mrf.mxu0
    %v3759 = vadd.f32 %v3623, %v3758
    %v3760 = vpop.f32.mrf.mxu0
    %3761 = vdwg.mxu0
    %v3762 = vmax.f32 %v3756, 0.0
    %v3763 = vmax.f32 %v3759, 0.0
    %v3764 = vpack.c.bf16 %v3763, %v3762
    %v3765 = vld [vmem:[#allocation11] sm:$0xf]
    %v3766 = vld [vmem:[#allocation11 + $0x4] sm:$0xf]
    %v3767 = vld [vmem:[#allocation11 + $0x8] sm:$0xf]
    %v3768 = vld [vmem:[#allocation11 + $0xc] sm:$0xf]
    %v3769 = vld [vmem:[#allocation11 + $0x10] sm:$0xf]
    %v3770 = vld [vmem:[#allocation11 + $0x14] sm:$0xf]
    %v3771 = vld [vmem:[#allocation11 + $0x18] sm:$0xf]
    %v3772 = vld [vmem:[#allocation11 + $0x1c] sm:$0xf]
    %v3773 = vld [vmem:[#allocation11 + $0x20] sm:$0xf]
    %v3774 = vld [vmem:[#allocation11 + $0x24] sm:$0xf]
    %v3775 = vld [vmem:[#allocation11 + $0x28] sm:$0xf]
    %v3776 = vld [vmem:[#allocation11 + $0x2c] sm:$0xf]
    %v3777 = vld [vmem:[#allocation11 + $0x30] sm:$0xf]
    %v3778 = vld [vmem:[#allocation11 + $0x34] sm:$0xf]
    %v3779 = vld [vmem:[#allocation11 + $0x38] sm:$0xf]
    %v3780 = vld [vmem:[#allocation11 + $0x3c] sm:$0xf]
    %v3781 = vld [vmem:[#allocation13] sm:$0x1]
    %v3783 = vlaneseq
    %v3784 = vshrl.u32 %v3783, 7
    %v3785 = vsub.s32 0, %v3784
    %v3786 = vrot.slane %v3781, %v3785
    %v3804 = vunpack.c.l.b16 %v3765
    %v3805 = vunpack.c.l.b16 %v3766
    %v3806 = vunpack.c.l.b16 %v3767
    %v3807 = vunpack.c.l.b16 %v3768
    %v3808 = vunpack.c.l.b16 %v3769
    %v3809 = vunpack.c.l.b16 %v3770
    %v3810 = vunpack.c.l.b16 %v3771
    %v3811 = vunpack.c.l.b16 %v3772
    %v3812 = vunpack.c.l.b16 %v3773
    %v3813 = vunpack.c.l.b16 %v3774
    %v3814 = vunpack.c.l.b16 %v3775
    %v3815 = vunpack.c.l.b16 %v3776
    %v3816 = vunpack.c.l.b16 %v3777
    %v3817 = vunpack.c.l.b16 %v3778
    %v3818 = vunpack.c.l.b16 %v3779
    %v3819 = vunpack.c.l.b16 %v3780
    %v3820 = vpack.c.b16 %v3805, %v3804
    %v3821 = vpack.c.b16 %v3807, %v3806
    %v3822 = vpack.c.b16 %v3809, %v3808
    %v3823 = vpack.c.b16 %v3811, %v3810
    %v3824 = vpack.c.b16 %v3813, %v3812
    %v3825 = vpack.c.b16 %v3815, %v3814
    %v3826 = vpack.c.b16 %v3817, %v3816
    %v3827 = vpack.c.b16 %v3819, %v3818
    %3836 = vmatprep.subr.bf16.mxu0 0
    %3837 = vmatpush1.bf16.msra.mxu0 %v3827
    %3838 = vmatprep.subr.bf16.mxu0 0
    %3839 = vmatpush1.bf16.msra.mxu0 %v3826
    %3840 = vmatprep.subr.bf16.mxu0 0
    %3841 = vmatpush1.bf16.msra.mxu0 %v3825
    %3842 = vmatprep.subr.bf16.mxu0 0
    %3843 = vmatpush1.bf16.msra.mxu0 %v3824
    %3844 = vmatprep.subr.bf16.mxu0 0
    %3845 = vmatpush1.bf16.msra.mxu0 %v3823
    %3846 = vmatprep.subr.bf16.mxu0 0
    %3847 = vmatpush1.bf16.msra.mxu0 %v3822
    %3848 = vmatprep.subr.bf16.mxu0 0
    %3849 = vmatpush1.bf16.msra.mxu0 %v3821
    %3850 = vmatprep.subr.bf16.mxu0 0
    %3851 = vmatpush1.bf16.msra.mxu0 %v3820
    %3852 = vmatprep.subr.bf16.mxu0 0
    %3853 = vmatpush2.bf16.msra.mxu0 0
    %3854 = vmatprep.subr.bf16.mxu0 0
    %3855 = vmatpush2.bf16.msra.mxu0 0
    %3856 = vmatprep.subr.bf16.mxu0 0
    %3857 = vmatpush2.bf16.msra.mxu0 0
    %3858 = vmatprep.subr.bf16.mxu0 0
    %3859 = vmatpush2.bf16.msra.mxu0 0
    %3860 = vmatprep.subr.bf16.mxu0 0
    %3861 = vmatpush2.bf16.msra.mxu0 0
    %3862 = vmatprep.subr.bf16.mxu0 0
    %3863 = vmatpush2.bf16.msra.mxu0 0
    %3864 = vmatprep.subr.bf16.mxu0 0
    %3865 = vmatpush2.bf16.msra.mxu0 0
    %3866 = vmatprep.subr.bf16.mxu0 0
    %3867 = vmatpush2.bf16.msra.mxu0 0
    %3868 = vmatprep.mubr.bf16.mxu0 0
    %3869 = vmatmul.mubr.bf16.gmra.mxu0 %v3764
    %v3870 = vpop.f32.mrf.mxu0
    %v3871 = vadd.f32 %v3786, %v3870
    %v3872 = vpop.f32.mrf.mxu0
    %v3873 = vpop.f32.mrf.mxu0
    %v3874 = vadd.f32 %v3786, %v3873
    %v3875 = vpop.f32.mrf.mxu0
    %3876 = vdwg.mxu0
    %v3877 = vmax.f32 %v3871, 0.0
    %v3878 = vmax.f32 %v3874, 0.0
    %v3879 = vpack.c.bf16 %v3878, %v3877
    %v3880 = vld [vmem:[#allocation14] sm:$0xf]
    %v3881 = vld [vmem:[#allocation14 + $0x4] sm:$0xf]
    %v3882 = vld [vmem:[#allocation14 + $0x8] sm:$0xf]
    %v3883 = vld [vmem:[#allocation14 + $0xc] sm:$0xf]
    %v3884 = vld [vmem:[#allocation14 + $0x10] sm:$0xf]
    %v3885 = vld [vmem:[#allocation14 + $0x14] sm:$0xf]
    %v3886 = vld [vmem:[#allocation14 + $0x18] sm:$0xf]
    %v3887 = vld [vmem:[#allocation14 + $0x1c] sm:$0xf]
    %v3888 = vld [vmem:[#allocation14 + $0x20] sm:$0xf]
    %v3889 = vld [vmem:[#allocation14 + $0x24] sm:$0xf]
    %v3890 = vld [vmem:[#allocation14 + $0x28] sm:$0xf]
    %v3891 = vld [vmem:[#allocation14 + $0x2c] sm:$0xf]
    %v3892 = vld [vmem:[#allocation14 + $0x30] sm:$0xf]
    %v3893 = vld [vmem:[#allocation14 + $0x34] sm:$0xf]
    %v3894 = vld [vmem:[#allocation14 + $0x38] sm:$0xf]
    %v3895 = vld [vmem:[#allocation14 + $0x3c] sm:$0xf]
    %v3896 = vld [vmem:[#allocation16] sm:$0x1]
    %v3898 = vlaneseq
    %v3899 = vshrl.u32 %v3898, 7
    %v3900 = vsub.s32 0, %v3899
    %v3901 = vrot.slane %v3896, %v3900
    %v3919 = vunpack.c.l.b16 %v3880
    %v3920 = vunpack.c.l.b16 %v3881
    %v3921 = vunpack.c.l.b16 %v3882
    %v3922 = vunpack.c.l.b16 %v3883
    %v3923 = vunpack.c.l.b16 %v3884
    %v3924 = vunpack.c.l.b16 %v3885
    %v3925 = vunpack.c.l.b16 %v3886
    %v3926 = vunpack.c.l.b16 %v3887
    %v3927 = vunpack.c.l.b16 %v3888
    %v3928 = vunpack.c.l.b16 %v3889
    %v3929 = vunpack.c.l.b16 %v3890
    %v3930 = vunpack.c.l.b16 %v3891
    %v3931 = vunpack.c.l.b16 %v3892
    %v3932 = vunpack.c.l.b16 %v3893
    %v3933 = vunpack.c.l.b16 %v3894
    %v3934 = vunpack.c.l.b16 %v3895
    %v3935 = vpack.c.b16 %v3920, %v3919
    %v3936 = vpack.c.b16 %v3922, %v3921
    %v3937 = vpack.c.b16 %v3924, %v3923
    %v3938 = vpack.c.b16 %v3926, %v3925
    %v3939 = vpack.c.b16 %v3928, %v3927
    %v3940 = vpack.c.b16 %v3930, %v3929
    %v3941 = vpack.c.b16 %v3932, %v3931
    %v3942 = vpack.c.b16 %v3934, %v3933
    %3951 = vmatprep.subr.bf16.mxu0 0
    %3952 = vmatpush1.bf16.msra.mxu0 %v3942
    %3953 = vmatprep.subr.bf16.mxu0 0
    %3954 = vmatpush1.bf16.msra.mxu0 %v3941
    %3955 = vmatprep.subr.bf16.mxu0 0
    %3956 = vmatpush1.bf16.msra.mxu0 %v3940
    %3957 = vmatprep.subr.bf16.mxu0 0
    %3958 = vmatpush1.bf16.msra.mxu0 %v3939
    %3959 = vmatprep.subr.bf16.mxu0 0
    %3960 = vmatpush1.bf16.msra.mxu0 %v3938
    %3961 = vmatprep.subr.bf16.mxu0 0
    %3962 = vmatpush1.bf16.msra.mxu0 %v3937
    %3963 = vmatprep.subr.bf16.mxu0 0
    %3964 = vmatpush1.bf16.msra.mxu0 %v3936
    %3965 = vmatprep.subr.bf16.mxu0 0
    %3966 = vmatpush1.bf16.msra.mxu0 %v3935
    %3967 = vmatprep.subr.bf16.mxu0 0
    %3968 = vmatpush2.bf16.msra.mxu0 0
    %3969 = vmatprep.subr.bf16.mxu0 0
    %3970 = vmatpush2.bf16.msra.mxu0 0
    %3971 = vmatprep.subr.bf16.mxu0 0
    %3972 = vmatpush2.bf16.msra.mxu0 0
    %3973 = vmatprep.subr.bf16.mxu0 0
    %3974 = vmatpush2.bf16.msra.mxu0 0
    %3975 = vmatprep.subr.bf16.mxu0 0
    %3976 = vmatpush2.bf16.msra.mxu0 0
    %3977 = vmatprep.subr.bf16.mxu0 0
    %3978 = vmatpush2.bf16.msra.mxu0 0
    %3979 = vmatprep.subr.bf16.mxu0 0
    %3980 = vmatpush2.bf16.msra.mxu0 0
    %3981 = vmatprep.subr.bf16.mxu0 0
    %3982 = vmatpush2.bf16.msra.mxu0 0
    %3983 = vmatprep.mubr.bf16.mxu0 0
    %3984 = vmatmul.mubr.bf16.gmra.mxu0 %v3879
    %v3985 = vpop.f32.mrf.mxu0
    %v3986 = vadd.f32 %v3901, %v3985
    %v3987 = vpop.f32.mrf.mxu0
    %v3988 = vpop.f32.mrf.mxu0
    %v3989 = vadd.f32 %v3901, %v3988
    %v3990 = vpop.f32.mrf.mxu0
    %3991 = vdwg.mxu0
    %3992 = vst [vmem:[#allocation17] sm:$0xff] %v3986
    %3993 = vst [vmem:[#allocation17 + $0x8] sm:$0xff] %v3989
    // Predicated region
    $region74: #{tpu_custom_call.1} parent=1 // pred_check
      _
    $region75: #{tpu_custom_call.1} parent=1 // pred_check_branch
      %3995 = sbr.rel (0) target = $region77
    $region76: #{tpu_custom_call.1} parent=1 // pred_region
      %s3997 = ssub.s32 256, 32
      %3998 = vsyncadd [#allocation4], %s3997
      %s3999 = sshll.u32 [#allocation17], 4
      %s4000 = int_to_ptr.vmem [resolvable:$true] %s3999
      %4005 = dma.vmem_to_hbm [thread:$0]  %s4000, 32, %s9, [#allocation4], 32, 32, 2
    $region77: #{tpu_custom_call.1} parent=1 // pred_fallthru
      _
    // Predicated region
    $region78: #{tpu_custom_call.1} parent=1 // pred_check
      _
    $region79: #{tpu_custom_call.1} parent=1 // pred_check_branch
      %4007 = sbr.rel (0) target = $region81
    $region80: #{tpu_custom_call.1} parent=1 // pred_region
      %4008 = dma.done [#allocation4], 256
    $region81: #{tpu_custom_call.1} parent=1 // pred_fallthru
      _
    %4009 = vsyncpa [#allocation3], 1
    %4010 = vsyncpa [#allocation6], 1
    %4011 = vsyncpa [#allocation9], 1
    %4012 = vsyncpa [#allocation12], 1
    %4013 = vsyncpa [#allocation15], 1
    %4014 = vsyncpa [#allocation4], 1

</llo_original>
